<compile_context>
chip_gen: v5e
topology: v5e:2x2
jax: 0.10.0
libtpu: 0.0.40
codegen_flags: <defaults>
</compile_context>

<pallas_src>
import functools

import jax
import jax.numpy as jnp
from jax.experimental import pallas as pl
from jax.experimental.pallas import tpu as pltpu


def _bn_kernel(x_ref, gamma_ref, beta_ref, o_ref, *, eps):
    # x_ref:     (N, C_blk, HW)  -- channels on sublanes, spatial on lanes
    # gamma_ref: (C_blk, 1)
    # beta_ref:  (C_blk, 1)
    x = x_ref[...]
    if x.dtype != jnp.float32:
        x = x.astype(jnp.float32)

    n, c_blk, hw = x.shape
    inv_r = 1.0 / float(n * hw)

    # Single-pass per-channel statistics: reduce over lanes (HW) then batch.
    s = jnp.sum(x, axis=-1, keepdims=True)        # (N, C_blk, 1)
    ss = jnp.sum(x * x, axis=-1, keepdims=True)   # (N, C_blk, 1)
    s = jnp.sum(s, axis=0)                        # (C_blk, 1)
    ss = jnp.sum(ss, axis=0)                      # (C_blk, 1)

    mean = s * inv_r                              # (C_blk, 1)
    var = ss * inv_r - mean * mean                # biased variance

    inv_std = jax.lax.rsqrt(var + eps)

    gamma = gamma_ref[...]
    beta = beta_ref[...]
    if gamma.dtype != jnp.float32:
        gamma = gamma.astype(jnp.float32)
    if beta.dtype != jnp.float32:
        beta = beta.astype(jnp.float32)

    # Fold normalization + affine into per-channel scale/shift:
    #   y = x * scale + shift
    scale = inv_std * gamma                       # (C_blk, 1)
    shift = beta - mean * scale                   # (C_blk, 1)

    y = x * scale + shift                         # (C_blk,1) broadcast over (N,C_blk,HW)
    o_ref[...] = y.astype(o_ref.dtype)


def _default_channel_blocks():
    # v7x has 2 TensorCores per chip: split channels so both get work.
    # v5e/v6e have 1 TC: keep a single block (no grid-step overhead).
    try:
        kind = jax.devices()[0].device_kind.lower()
    except Exception:
        return 1
    if "v7" in kind or "7x" in kind:
        return 2
    return 1


def batchnorm2d_pallas(x, gamma, beta, eps=1e-5, num_channel_blocks=None):
    """BatchNorm2d forward (training-mode batch stats) via a Pallas kernel.

    x:     (N, C, H, W)  float32
    gamma: (C,)          float32
    beta:  (C,)          float32
    """
    N, C, H, W = x.shape
    HW = H * W

    # Metadata-only reshapes of the contiguous NCHW buffer (no transposes).
    x_3d = x.reshape(N, C, HW)
    gamma_2d = gamma.reshape(C, 1)
    beta_2d = beta.reshape(C, 1)

    if num_channel_blocks is None:
        num_channel_blocks = _default_channel_blocks()

    # Channel blocks must divide C evenly and stay sublane-aligned (x8).
    nblk = max(1, int(num_channel_blocks))
    while nblk > 1 and (C % nblk != 0 or (C // nblk) % 8 != 0):
        nblk -= 1
    c_blk = C // nblk

    # TODO(synk): for large N the single (N, c_blk, HW) block should be tiled
    # over N with a VMEM sum/sumsq accumulator to stay under scoped VMEM.

    kernel = functools.partial(_bn_kernel, eps=eps)

    out_3d = pl.pallas_call(
        kernel,
        out_shape=jax.ShapeDtypeStruct((N, C, HW), x.dtype),
        grid=(nblk,),
        in_specs=[
            pl.BlockSpec((N, c_blk, HW), lambda i: (0, i, 0)),
            pl.BlockSpec((c_blk, 1), lambda i: (i, 0)),
            pl.BlockSpec((c_blk, 1), lambda i: (i, 0)),
        ],
        out_specs=pl.BlockSpec((N, c_blk, HW), lambda i: (0, i, 0)),
        compiler_params=pltpu.CompilerParams(
            dimension_semantics=("parallel",),
        ),
    )(x_3d, gamma_2d, beta_2d)

    # Free reshape back to NCHW.
    return out_3d.reshape(N, C, H, W)


def _reference_bn(x, gamma, beta, eps=1e-5):
    # Pure-JAX reference (training-mode batch stats, biased variance).
    mean = jnp.mean(x, axis=(0, 2, 3), keepdims=True)
    var = jnp.mean((x - mean) ** 2, axis=(0, 2, 3), keepdims=True)
    g = gamma.reshape(1, -1, 1, 1)
    b = beta.reshape(1, -1, 1, 1)
    return (x - mean) * jax.lax.rsqrt(var + eps) * g + b


if __name__ == "__main__":
    key = jax.random.PRNGKey(0)
    kx, kg, kb = jax.random.split(key, 3)

    N, C, H, W = 1, 704, 7, 7  # shape implied by the module's forward
    x = jax.random.normal(kx, (N, C, H, W), dtype=jnp.float32)
    # PyTorch default init is weight=1, bias=0; perturb deterministically so
    # the affine path is exercised.
    gamma = 1.0 + 0.1 * jax.random.normal(kg, (C,), dtype=jnp.float32)
    beta = 0.1 * jax.random.normal(kb, (C,), dtype=jnp.float32)

    out = batchnorm2d_pallas(x, gamma, beta, eps=1e-5)
    out = jax.block_until_ready(out)

    ref = _reference_bn(x, gamma, beta, eps=1e-5)
    assert out.shape == (N, C, H, W)
    assert jnp.allclose(out, ref, atol=1e-4, rtol=1e-4), "mismatch vs reference"

    print("KERNEL_OK")
</pallas_src>

<mosaic_0001>
module attributes {stable_mosaic.version = 11 : i64} {
  func.func @_bn_kernel(%arg0: i32, %arg1: memref<1x704x49xf32, #tpu.memory_space<vmem>>, %arg2: memref<704x1xf32, #tpu.memory_space<vmem>>, %arg3: memref<704x1xf32, #tpu.memory_space<vmem>>, %arg4: memref<1x704x49xf32, #tpu.memory_space<vmem>>) attributes {dimension_semantics = [#tpu.dimension_semantics<parallel>], iteration_bounds = array<i64: 1>, scalar_prefetch = 0 : i64, scratch_operands = 0 : i64, tpu.core_type = #tpu.core_type<tc>, window_params = [{transform_indices = @transform_0, window_bounds = array<i64: 1, 704, 49>}, {transform_indices = @transform_1, window_bounds = array<i64: 704, 1>}, {transform_indices = @transform_2, window_bounds = array<i64: 704, 1>}, {transform_indices = @transform_3, window_bounds = array<i64: 1, 704, 49>}]} {
    %c0 = arith.constant 0 : index
    %c0_0 = arith.constant 0 : index
    %c0_1 = arith.constant 0 : index
    %0 = vector.load %arg1[%c0, %c0_0, %c0_1] : memref<1x704x49xf32, #tpu.memory_space<vmem>>, vector<1x704x49xf32>
    %cst = arith.constant dense<0.000000e+00> : vector<1x704xf32>
    %1 = vector.multi_reduction <add>, %0, %cst [2] : vector<1x704x49xf32> to vector<1x704xf32>
    %2 = vector.shape_cast %1 : vector<1x704xf32> to vector<1x704x1xf32>
    %3 = arith.mulf %0, %0 : vector<1x704x49xf32>
    %cst_2 = arith.constant dense<0.000000e+00> : vector<1x704xf32>
    %4 = vector.multi_reduction <add>, %3, %cst_2 [2] : vector<1x704x49xf32> to vector<1x704xf32>
    %5 = vector.shape_cast %4 : vector<1x704xf32> to vector<1x704x1xf32>
    %cst_3 = arith.constant dense<0.000000e+00> : vector<704x1xf32>
    %6 = vector.multi_reduction <add>, %2, %cst_3 [0] : vector<1x704x1xf32> to vector<704x1xf32>
    %cst_4 = arith.constant dense<0.000000e+00> : vector<704x1xf32>
    %7 = vector.multi_reduction <add>, %5, %cst_4 [0] : vector<1x704x1xf32> to vector<704x1xf32>
    %cst_5 = arith.constant 0.0204081628 : f32
    %8 = vector.broadcast %cst_5 : f32 to vector<704x1xf32>
    %9 = arith.mulf %6, %8 : vector<704x1xf32>
    %cst_6 = arith.constant 0.0204081628 : f32
    %10 = vector.broadcast %cst_6 : f32 to vector<704x1xf32>
    %11 = arith.mulf %7, %10 : vector<704x1xf32>
    %12 = arith.mulf %9, %9 : vector<704x1xf32>
    %13 = arith.subf %11, %12 : vector<704x1xf32>
    %cst_7 = arith.constant 9.99999974E-6 : f32
    %14 = vector.broadcast %cst_7 : f32 to vector<704x1xf32>
    %15 = arith.addf %13, %14 : vector<704x1xf32>
    %16 = math.rsqrt %15 : vector<704x1xf32>
    %c0_8 = arith.constant 0 : index
    %c0_9 = arith.constant 0 : index
    %17 = vector.load %arg2[%c0_8, %c0_9] : memref<704x1xf32, #tpu.memory_space<vmem>>, vector<704x1xf32>
    %c0_10 = arith.constant 0 : index
    %c0_11 = arith.constant 0 : index
    %18 = vector.load %arg3[%c0_10, %c0_11] : memref<704x1xf32, #tpu.memory_space<vmem>>, vector<704x1xf32>
    %19 = arith.mulf %16, %17 : vector<704x1xf32>
    %20 = arith.mulf %9, %19 : vector<704x1xf32>
    %21 = arith.subf %18, %20 : vector<704x1xf32>
    %22 = vector.shape_cast %19 : vector<704x1xf32> to vector<1x704x1xf32>
    %23 = vector.broadcast %22 : vector<1x704x1xf32> to vector<1x704x49xf32>
    %24 = arith.mulf %0, %23 : vector<1x704x49xf32>
    %25 = vector.shape_cast %21 : vector<704x1xf32> to vector<1x704x1xf32>
    %26 = vector.broadcast %25 : vector<1x704x1xf32> to vector<1x704x49xf32>
    %27 = arith.addf %24, %26 : vector<1x704x49xf32>
    %c0_12 = arith.constant 0 : index
    %c0_13 = arith.constant 0 : index
    %c0_14 = arith.constant 0 : index
    %28 = vector.load %arg4[%c0_12, %c0_13, %c0_14] : memref<1x704x49xf32, #tpu.memory_space<vmem>>, vector<1x704x49xf32>
    tpu.vector_store %arg4[%c0_12, %c0_13, %c0_14], %27 {strides = array<i32>} : memref<1x704x49xf32, #tpu.memory_space<vmem>>, vector<1x704x49xf32>,
    return
  }
  func.func @transform_0(%arg0: i32) -> (i32, i32, i32) {
    %c0_i32 = arith.constant 0 : i32
    %c0_i32_0 = arith.constant 0 : i32
    %c0_i32_1 = arith.constant 0 : i32
    return %c0_i32, %arg0, %c0_i32_0 : i32, i32, i32
  }
  func.func @transform_1(%arg0: i32) -> (i32, i32) {
    %c0_i32 = arith.constant 0 : i32
    %c0_i32_0 = arith.constant 0 : i32
    return %arg0, %c0_i32 : i32, i32
  }
  func.func @transform_2(%arg0: i32) -> (i32, i32) {
    %c0_i32 = arith.constant 0 : i32
    %c0_i32_0 = arith.constant 0 : i32
    return %arg0, %c0_i32 : i32, i32
  }
  func.func @transform_3(%arg0: i32) -> (i32, i32, i32) {
    %c0_i32 = arith.constant 0 : i32
    %c0_i32_0 = arith.constant 0 : i32
    %c0_i32_1 = arith.constant 0 : i32
    return %c0_i32, %arg0, %c0_i32_0 : i32, i32, i32
  }
}

</mosaic_0001>

<llo_original>
// kernel: tpu_custom_call.1
$region0: #{tpu_custom_call.1}
  #allocation0 [shape = 'u32[]', space=smem, size = 0x4, offset = 0x4, fixed_abs, tag = 'smem constant byte address 0x4 - core index']
  #allocation1 [shape = 'u32[72,128]{1,0:T(1,128)}', space=vmem, size = 0x9000, scoped, tag = 'internal scratch']
  %s0 = inlined_call_operand.vmem [shape: f32[1,704,49], index: 0, kind: input, shape index: {}]
  %s1 = inlined_call_operand.vmem [shape: f32[704,1], index: 1, kind: input, shape index: {}]
  %s2 = inlined_call_operand.vmem [shape: f32[704,1], index: 2, kind: input, shape index: {}]
  %s3 = inlined_call_operand.vmem [shape: f32[1,704,49], index: 3, kind: output, shape index: {}]
  %s4 = sld [smem:[#allocation0]]
  $region22: #{tpu_custom_call.1} parent=0
    _
  %s6 = ssub.s32 1, %s4
  %s7 = scalar_select 0, %s6, %s4
  // Predicated region
  $region2: #{tpu_custom_call.1} parent=0 // pred_check
    _
  $region3: #{tpu_custom_call.1} parent=0 // pred_check_branch
    %9 = sbr.rel (0) target = $region5
  $region4: #{tpu_custom_call.1} parent=0 // pred_region
    _
  $region5: #{tpu_custom_call.1} parent=0 // pred_fallthru
    _
  // Predicated region
  $region6: #{tpu_custom_call.1} parent=0 // pred_check
    _
  $region7: #{tpu_custom_call.1} parent=0 // pred_check_branch
    %11 = sbr.rel (0) target = $region9
  $region8: #{tpu_custom_call.1} parent=0 // pred_region
    _
  $region9: #{tpu_custom_call.1} parent=0 // pred_fallthru
    _
  // Predicated region
  $region10: #{tpu_custom_call.1} parent=0 // pred_check
    _
  $region11: #{tpu_custom_call.1} parent=0 // pred_check_branch
    %13 = sbr.rel (0) target = $region13
  $region12: #{tpu_custom_call.1} parent=0 // pred_region
    _
  $region13: #{tpu_custom_call.1} parent=0 // pred_fallthru
    _
  %v14 = vld [vmem:[%s0] sm:$0xff]
  %v15 = vld [vmem:[%s0 + $0x8] sm:$0xff]
  %v16 = vld [vmem:[%s0 + $0x10] sm:$0xff]
  %v17 = vld [vmem:[%s0 + $0x18] sm:$0xff]
  %v18 = vld [vmem:[%s0 + $0x20] sm:$0xff]
  %v19 = vld [vmem:[%s0 + $0x28] sm:$0xff]
  %v20 = vld [vmem:[%s0 + $0x30] sm:$0xff]
  %v21 = vld [vmem:[%s0 + $0x38] sm:$0xff]
  %v22 = vld [vmem:[%s0 + $0x40] sm:$0xff]
  %v23 = vld [vmem:[%s0 + $0x48] sm:$0xff]
  %v24 = vld [vmem:[%s0 + $0x50] sm:$0xff]
  %v25 = vld [vmem:[%s0 + $0x58] sm:$0xff]
  %v26 = vld [vmem:[%s0 + $0x60] sm:$0xff]
  %v27 = vld [vmem:[%s0 + $0x68] sm:$0xff]
  %v28 = vld [vmem:[%s0 + $0x70] sm:$0xff]
  %v29 = vld [vmem:[%s0 + $0x78] sm:$0xff]
  %v30 = vld [vmem:[%s0 + $0x80] sm:$0xff]
  %v31 = vld [vmem:[%s0 + $0x88] sm:$0xff]
  %v32 = vld [vmem:[%s0 + $0x90] sm:$0xff]
  %v33 = vld [vmem:[%s0 + $0x98] sm:$0xff]
  %v34 = vld [vmem:[%s0 + $0xa0] sm:$0xff]
  %v35 = vld [vmem:[%s0 + $0xa8] sm:$0xff]
  %v36 = vld [vmem:[%s0 + $0xb0] sm:$0xff]
  %v37 = vld [vmem:[%s0 + $0xb8] sm:$0xff]
  %v38 = vld [vmem:[%s0 + $0xc0] sm:$0xff]
  %v39 = vld [vmem:[%s0 + $0xc8] sm:$0xff]
  %v40 = vld [vmem:[%s0 + $0xd0] sm:$0xff]
  %v41 = vld [vmem:[%s0 + $0xd8] sm:$0xff]
  %v42 = vld [vmem:[%s0 + $0xe0] sm:$0xff]
  %v43 = vld [vmem:[%s0 + $0xe8] sm:$0xff]
  %v44 = vld [vmem:[%s0 + $0xf0] sm:$0xff]
  %v45 = vld [vmem:[%s0 + $0xf8] sm:$0xff]
  %v46 = vld [vmem:[%s0 + $0x100] sm:$0xff]
  %v47 = vld [vmem:[%s0 + $0x108] sm:$0xff]
  %v48 = vld [vmem:[%s0 + $0x110] sm:$0xff]
  %v49 = vld [vmem:[%s0 + $0x118] sm:$0xff]
  %v50 = vld [vmem:[%s0 + $0x120] sm:$0xff]
  %v51 = vld [vmem:[%s0 + $0x128] sm:$0xff]
  %v52 = vld [vmem:[%s0 + $0x130] sm:$0xff]
  %v53 = vld [vmem:[%s0 + $0x138] sm:$0xff]
  %v54 = vld [vmem:[%s0 + $0x140] sm:$0xff]
  %v55 = vld [vmem:[%s0 + $0x148] sm:$0xff]
  %v56 = vld [vmem:[%s0 + $0x150] sm:$0xff]
  %v57 = vld [vmem:[%s0 + $0x158] sm:$0xff]
  %v58 = vld [vmem:[%s0 + $0x160] sm:$0xff]
  %v59 = vld [vmem:[%s0 + $0x168] sm:$0xff]
  %v60 = vld [vmem:[%s0 + $0x170] sm:$0xff]
  %v61 = vld [vmem:[%s0 + $0x178] sm:$0xff]
  %v62 = vld [vmem:[%s0 + $0x180] sm:$0xff]
  %v63 = vld [vmem:[%s0 + $0x188] sm:$0xff]
  %v64 = vld [vmem:[%s0 + $0x190] sm:$0xff]
  %v65 = vld [vmem:[%s0 + $0x198] sm:$0xff]
  %v66 = vld [vmem:[%s0 + $0x1a0] sm:$0xff]
  %v67 = vld [vmem:[%s0 + $0x1a8] sm:$0xff]
  %v68 = vld [vmem:[%s0 + $0x1b0] sm:$0xff]
  %v69 = vld [vmem:[%s0 + $0x1b8] sm:$0xff]
  %v70 = vld [vmem:[%s0 + $0x1c0] sm:$0xff]
  %v71 = vld [vmem:[%s0 + $0x1c8] sm:$0xff]
  %v72 = vld [vmem:[%s0 + $0x1d0] sm:$0xff]
  %v73 = vld [vmem:[%s0 + $0x1d8] sm:$0xff]
  %v74 = vld [vmem:[%s0 + $0x1e0] sm:$0xff]
  %v75 = vld [vmem:[%s0 + $0x1e8] sm:$0xff]
  %v76 = vld [vmem:[%s0 + $0x1f0] sm:$0xff]
  %v77 = vld [vmem:[%s0 + $0x1f8] sm:$0xff]
  %v78 = vld [vmem:[%s0 + $0x200] sm:$0xff]
  %v79 = vld [vmem:[%s0 + $0x208] sm:$0xff]
  %v80 = vld [vmem:[%s0 + $0x210] sm:$0xff]
  %v81 = vld [vmem:[%s0 + $0x218] sm:$0xff]
  %v82 = vld [vmem:[%s0 + $0x220] sm:$0xff]
  %v83 = vld [vmem:[%s0 + $0x228] sm:$0xff]
  %v84 = vld [vmem:[%s0 + $0x230] sm:$0xff]
  %v85 = vld [vmem:[%s0 + $0x238] sm:$0xff]
  %v86 = vld [vmem:[%s0 + $0x240] sm:$0xff]
  %v87 = vld [vmem:[%s0 + $0x248] sm:$0xff]
  %v88 = vld [vmem:[%s0 + $0x250] sm:$0xff]
  %v89 = vld [vmem:[%s0 + $0x258] sm:$0xff]
  %v90 = vld [vmem:[%s0 + $0x260] sm:$0xff]
  %v91 = vld [vmem:[%s0 + $0x268] sm:$0xff]
  %v92 = vld [vmem:[%s0 + $0x270] sm:$0xff]
  %v93 = vld [vmem:[%s0 + $0x278] sm:$0xff]
  %v94 = vld [vmem:[%s0 + $0x280] sm:$0xff]
  %v95 = vld [vmem:[%s0 + $0x288] sm:$0xff]
  %v96 = vld [vmem:[%s0 + $0x290] sm:$0xff]
  %v97 = vld [vmem:[%s0 + $0x298] sm:$0xff]
  %v98 = vld [vmem:[%s0 + $0x2a0] sm:$0xff]
  %v99 = vld [vmem:[%s0 + $0x2a8] sm:$0xff]
  %v100 = vld [vmem:[%s0 + $0x2b0] sm:$0xff]
  %v101 = vld [vmem:[%s0 + $0x2b8] sm:$0xff]
  %vm102 = vcmask 400384
  %v103 = vsel %vm102, %v14, 0.0
  %104 = vadd.xlane.f32.xlu0 %v103
  %v105 = vpop.xlane.xlu0 %104
  %v106 = vsel %vm102, %v15, 0.0
  %107 = vadd.xlane.f32.xlu0 %v106
  %v108 = vpop.xlane.xlu0 %107
  %v109 = vsel %vm102, %v16, 0.0
  %110 = vadd.xlane.f32.xlu0 %v109
  %v111 = vpop.xlane.xlu0 %110
  %v112 = vsel %vm102, %v17, 0.0
  %113 = vadd.xlane.f32.xlu0 %v112
  %v114 = vpop.xlane.xlu0 %113
  %v115 = vsel %vm102, %v18, 0.0
  %116 = vadd.xlane.f32.xlu0 %v115
  %v117 = vpop.xlane.xlu0 %116
  %v118 = vsel %vm102, %v19, 0.0
  %119 = vadd.xlane.f32.xlu0 %v118
  %v120 = vpop.xlane.xlu0 %119
  %v121 = vsel %vm102, %v20, 0.0
  %122 = vadd.xlane.f32.xlu0 %v121
  %v123 = vpop.xlane.xlu0 %122
  %v124 = vsel %vm102, %v21, 0.0
  %125 = vadd.xlane.f32.xlu0 %v124
  %v126 = vpop.xlane.xlu0 %125
  %v127 = vsel %vm102, %v22, 0.0
  %128 = vadd.xlane.f32.xlu0 %v127
  %v129 = vpop.xlane.xlu0 %128
  %v130 = vsel %vm102, %v23, 0.0
  %131 = vadd.xlane.f32.xlu0 %v130
  %v132 = vpop.xlane.xlu0 %131
  %v133 = vsel %vm102, %v24, 0.0
  %134 = vadd.xlane.f32.xlu0 %v133
  %v135 = vpop.xlane.xlu0 %134
  %v136 = vsel %vm102, %v25, 0.0
  %137 = vadd.xlane.f32.xlu0 %v136
  %v138 = vpop.xlane.xlu0 %137
  %v139 = vsel %vm102, %v26, 0.0
  %140 = vadd.xlane.f32.xlu0 %v139
  %v141 = vpop.xlane.xlu0 %140
  %v142 = vsel %vm102, %v27, 0.0
  %143 = vadd.xlane.f32.xlu0 %v142
  %v144 = vpop.xlane.xlu0 %143
  %v145 = vsel %vm102, %v28, 0.0
  %146 = vadd.xlane.f32.xlu0 %v145
  %v147 = vpop.xlane.xlu0 %146
  %v148 = vsel %vm102, %v29, 0.0
  %149 = vadd.xlane.f32.xlu0 %v148
  %v150 = vpop.xlane.xlu0 %149
  %v151 = vsel %vm102, %v30, 0.0
  %152 = vadd.xlane.f32.xlu0 %v151
  %v153 = vpop.xlane.xlu0 %152
  %v154 = vsel %vm102, %v31, 0.0
  %155 = vadd.xlane.f32.xlu0 %v154
  %v156 = vpop.xlane.xlu0 %155
  %v157 = vsel %vm102, %v32, 0.0
  %158 = vadd.xlane.f32.xlu0 %v157
  %v159 = vpop.xlane.xlu0 %158
  %v160 = vsel %vm102, %v33, 0.0
  %161 = vadd.xlane.f32.xlu0 %v160
  %v162 = vpop.xlane.xlu0 %161
  %v163 = vsel %vm102, %v34, 0.0
  %164 = vadd.xlane.f32.xlu0 %v163
  %v165 = vpop.xlane.xlu0 %164
  %v166 = vsel %vm102, %v35, 0.0
  %167 = vadd.xlane.f32.xlu0 %v166
  %v168 = vpop.xlane.xlu0 %167
  %v169 = vsel %vm102, %v36, 0.0
  %170 = vadd.xlane.f32.xlu0 %v169
  %v171 = vpop.xlane.xlu0 %170
  %v172 = vsel %vm102, %v37, 0.0
  %173 = vadd.xlane.f32.xlu0 %v172
  %v174 = vpop.xlane.xlu0 %173
  %v175 = vsel %vm102, %v38, 0.0
  %176 = vadd.xlane.f32.xlu0 %v175
  %v177 = vpop.xlane.xlu0 %176
  %v178 = vsel %vm102, %v39, 0.0
  %179 = vadd.xlane.f32.xlu0 %v178
  %v180 = vpop.xlane.xlu0 %179
  %v181 = vsel %vm102, %v40, 0.0
  %182 = vadd.xlane.f32.xlu0 %v181
  %v183 = vpop.xlane.xlu0 %182
  %v184 = vsel %vm102, %v41, 0.0
  %185 = vadd.xlane.f32.xlu0 %v184
  %v186 = vpop.xlane.xlu0 %185
  %v187 = vsel %vm102, %v42, 0.0
  %188 = vadd.xlane.f32.xlu0 %v187
  %v189 = vpop.xlane.xlu0 %188
  %v190 = vsel %vm102, %v43, 0.0
  %191 = vadd.xlane.f32.xlu0 %v190
  %v192 = vpop.xlane.xlu0 %191
  %v193 = vsel %vm102, %v44, 0.0
  %194 = vadd.xlane.f32.xlu0 %v193
  %v195 = vpop.xlane.xlu0 %194
  %v196 = vsel %vm102, %v45, 0.0
  %197 = vadd.xlane.f32.xlu0 %v196
  %v198 = vpop.xlane.xlu0 %197
  %v199 = vsel %vm102, %v46, 0.0
  %200 = vadd.xlane.f32.xlu0 %v199
  %v201 = vpop.xlane.xlu0 %200
  %v202 = vsel %vm102, %v47, 0.0
  %203 = vadd.xlane.f32.xlu0 %v202
  %v204 = vpop.xlane.xlu0 %203
  %v205 = vsel %vm102, %v48, 0.0
  %206 = vadd.xlane.f32.xlu0 %v205
  %v207 = vpop.xlane.xlu0 %206
  %v208 = vsel %vm102, %v49, 0.0
  %209 = vadd.xlane.f32.xlu0 %v208
  %v210 = vpop.xlane.xlu0 %209
  %v211 = vsel %vm102, %v50, 0.0
  %212 = vadd.xlane.f32.xlu0 %v211
  %v213 = vpop.xlane.xlu0 %212
  %v214 = vsel %vm102, %v51, 0.0
  %215 = vadd.xlane.f32.xlu0 %v214
  %v216 = vpop.xlane.xlu0 %215
  %v217 = vsel %vm102, %v52, 0.0
  %218 = vadd.xlane.f32.xlu0 %v217
  %v219 = vpop.xlane.xlu0 %218
  %v220 = vsel %vm102, %v53, 0.0
  %221 = vadd.xlane.f32.xlu0 %v220
  %v222 = vpop.xlane.xlu0 %221
  %v223 = vsel %vm102, %v54, 0.0
  %224 = vadd.xlane.f32.xlu0 %v223
  %v225 = vpop.xlane.xlu0 %224
  %v226 = vsel %vm102, %v55, 0.0
  %227 = vadd.xlane.f32.xlu0 %v226
  %v228 = vpop.xlane.xlu0 %227
  %v229 = vsel %vm102, %v56, 0.0
  %230 = vadd.xlane.f32.xlu0 %v229
  %v231 = vpop.xlane.xlu0 %230
  %v232 = vsel %vm102, %v57, 0.0
  %233 = vadd.xlane.f32.xlu0 %v232
  %v234 = vpop.xlane.xlu0 %233
  %v235 = vsel %vm102, %v58, 0.0
  %236 = vadd.xlane.f32.xlu0 %v235
  %v237 = vpop.xlane.xlu0 %236
  %v238 = vsel %vm102, %v59, 0.0
  %239 = vadd.xlane.f32.xlu0 %v238
  %v240 = vpop.xlane.xlu0 %239
  %v241 = vsel %vm102, %v60, 0.0
  %242 = vadd.xlane.f32.xlu0 %v241
  %v243 = vpop.xlane.xlu0 %242
  %v244 = vsel %vm102, %v61, 0.0
  %245 = vadd.xlane.f32.xlu0 %v244
  %v246 = vpop.xlane.xlu0 %245
  %v247 = vsel %vm102, %v62, 0.0
  %248 = vadd.xlane.f32.xlu0 %v247
  %v249 = vpop.xlane.xlu0 %248
  %v250 = vsel %vm102, %v63, 0.0
  %251 = vadd.xlane.f32.xlu0 %v250
  %v252 = vpop.xlane.xlu0 %251
  %v253 = vsel %vm102, %v64, 0.0
  %254 = vadd.xlane.f32.xlu0 %v253
  %v255 = vpop.xlane.xlu0 %254
  %v256 = vsel %vm102, %v65, 0.0
  %257 = vadd.xlane.f32.xlu0 %v256
  %v258 = vpop.xlane.xlu0 %257
  %v259 = vsel %vm102, %v66, 0.0
  %260 = vadd.xlane.f32.xlu0 %v259
  %v261 = vpop.xlane.xlu0 %260
  %v262 = vsel %vm102, %v67, 0.0
  %263 = vadd.xlane.f32.xlu0 %v262
  %v264 = vpop.xlane.xlu0 %263
  %v265 = vsel %vm102, %v68, 0.0
  %266 = vadd.xlane.f32.xlu0 %v265
  %v267 = vpop.xlane.xlu0 %266
  %v268 = vsel %vm102, %v69, 0.0
  %269 = vadd.xlane.f32.xlu0 %v268
  %v270 = vpop.xlane.xlu0 %269
  %v271 = vsel %vm102, %v70, 0.0
  %272 = vadd.xlane.f32.xlu0 %v271
  %v273 = vpop.xlane.xlu0 %272
  %v274 = vsel %vm102, %v71, 0.0
  %275 = vadd.xlane.f32.xlu0 %v274
  %v276 = vpop.xlane.xlu0 %275
  %v277 = vsel %vm102, %v72, 0.0
  %278 = vadd.xlane.f32.xlu0 %v277
  %v279 = vpop.xlane.xlu0 %278
  %v280 = vsel %vm102, %v73, 0.0
  %281 = vadd.xlane.f32.xlu0 %v280
  %v282 = vpop.xlane.xlu0 %281
  %v283 = vsel %vm102, %v74, 0.0
  %284 = vadd.xlane.f32.xlu0 %v283
  %v285 = vpop.xlane.xlu0 %284
  %v286 = vsel %vm102, %v75, 0.0
  %287 = vadd.xlane.f32.xlu0 %v286
  %v288 = vpop.xlane.xlu0 %287
  %v289 = vsel %vm102, %v76, 0.0
  %290 = vadd.xlane.f32.xlu0 %v289
  %v291 = vpop.xlane.xlu0 %290
  %v292 = vsel %vm102, %v77, 0.0
  %293 = vadd.xlane.f32.xlu0 %v292
  %v294 = vpop.xlane.xlu0 %293
  %v295 = vsel %vm102, %v78, 0.0
  %296 = vadd.xlane.f32.xlu0 %v295
  %v297 = vpop.xlane.xlu0 %296
  %v298 = vsel %vm102, %v79, 0.0
  %299 = vadd.xlane.f32.xlu0 %v298
  %v300 = vpop.xlane.xlu0 %299
  %v301 = vsel %vm102, %v80, 0.0
  %302 = vadd.xlane.f32.xlu0 %v301
  %v303 = vpop.xlane.xlu0 %302
  %v304 = vsel %vm102, %v81, 0.0
  %305 = vadd.xlane.f32.xlu0 %v304
  %v306 = vpop.xlane.xlu0 %305
  %v307 = vsel %vm102, %v82, 0.0
  %308 = vadd.xlane.f32.xlu0 %v307
  %v309 = vpop.xlane.xlu0 %308
  %v310 = vsel %vm102, %v83, 0.0
  %311 = vadd.xlane.f32.xlu0 %v310
  %v312 = vpop.xlane.xlu0 %311
  %v313 = vsel %vm102, %v84, 0.0
  %314 = vadd.xlane.f32.xlu0 %v313
  %v315 = vpop.xlane.xlu0 %314
  %v316 = vsel %vm102, %v85, 0.0
  %317 = vadd.xlane.f32.xlu0 %v316
  %v318 = vpop.xlane.xlu0 %317
  %v319 = vsel %vm102, %v86, 0.0
  %320 = vadd.xlane.f32.xlu0 %v319
  %v321 = vpop.xlane.xlu0 %320
  %v322 = vsel %vm102, %v87, 0.0
  %323 = vadd.xlane.f32.xlu0 %v322
  %v324 = vpop.xlane.xlu0 %323
  %v325 = vsel %vm102, %v88, 0.0
  %326 = vadd.xlane.f32.xlu0 %v325
  %v327 = vpop.xlane.xlu0 %326
  %v328 = vsel %vm102, %v89, 0.0
  %329 = vadd.xlane.f32.xlu0 %v328
  %v330 = vpop.xlane.xlu0 %329
  %v331 = vsel %vm102, %v90, 0.0
  %332 = vadd.xlane.f32.xlu0 %v331
  %v333 = vpop.xlane.xlu0 %332
  %v334 = vsel %vm102, %v91, 0.0
  %335 = vadd.xlane.f32.xlu0 %v334
  %v336 = vpop.xlane.xlu0 %335
  %v337 = vsel %vm102, %v92, 0.0
  %338 = vadd.xlane.f32.xlu0 %v337
  %v339 = vpop.xlane.xlu0 %338
  %v340 = vsel %vm102, %v93, 0.0
  %341 = vadd.xlane.f32.xlu0 %v340
  %v342 = vpop.xlane.xlu0 %341
  %v343 = vsel %vm102, %v94, 0.0
  %344 = vadd.xlane.f32.xlu0 %v343
  %v345 = vpop.xlane.xlu0 %344
  %v346 = vsel %vm102, %v95, 0.0
  %347 = vadd.xlane.f32.xlu0 %v346
  %v348 = vpop.xlane.xlu0 %347
  %v349 = vsel %vm102, %v96, 0.0
  %350 = vadd.xlane.f32.xlu0 %v349
  %v351 = vpop.xlane.xlu0 %350
  %v352 = vsel %vm102, %v97, 0.0
  %353 = vadd.xlane.f32.xlu0 %v352
  %v354 = vpop.xlane.xlu0 %353
  %v355 = vsel %vm102, %v98, 0.0
  %356 = vadd.xlane.f32.xlu0 %v355
  %v357 = vpop.xlane.xlu0 %356
  %v358 = vsel %vm102, %v99, 0.0
  %359 = vadd.xlane.f32.xlu0 %v358
  %v360 = vpop.xlane.xlu0 %359
  %v361 = vsel %vm102, %v100, 0.0
  %362 = vadd.xlane.f32.xlu0 %v361
  %v363 = vpop.xlane.xlu0 %362
  %v364 = vsel %vm102, %v101, 0.0
  %365 = vadd.xlane.f32.xlu0 %v364
  %v366 = vpop.xlane.xlu0 %365
  %v367 = vmul.f32 %v14, %v14
  %v368 = vmul.f32 %v15, %v15
  %v369 = vmul.f32 %v16, %v16
  %v370 = vmul.f32 %v17, %v17
  %v371 = vmul.f32 %v18, %v18
  %v372 = vmul.f32 %v19, %v19
  %v373 = vmul.f32 %v20, %v20
  %v374 = vmul.f32 %v21, %v21
  %v375 = vmul.f32 %v22, %v22
  %v376 = vmul.f32 %v23, %v23
  %v377 = vmul.f32 %v24, %v24
  %v378 = vmul.f32 %v25, %v25
  %v379 = vmul.f32 %v26, %v26
  %v380 = vmul.f32 %v27, %v27
  %v381 = vmul.f32 %v28, %v28
  %v382 = vmul.f32 %v29, %v29
  %v383 = vmul.f32 %v30, %v30
  %v384 = vmul.f32 %v31, %v31
  %v385 = vmul.f32 %v32, %v32
  %v386 = vmul.f32 %v33, %v33
  %v387 = vmul.f32 %v34, %v34
  %v388 = vmul.f32 %v35, %v35
  %v389 = vmul.f32 %v36, %v36
  %v390 = vmul.f32 %v37, %v37
  %v391 = vmul.f32 %v38, %v38
  %v392 = vmul.f32 %v39, %v39
  %v393 = vmul.f32 %v40, %v40
  %v394 = vmul.f32 %v41, %v41
  %v395 = vmul.f32 %v42, %v42
  %v396 = vmul.f32 %v43, %v43
  %v397 = vmul.f32 %v44, %v44
  %v398 = vmul.f32 %v45, %v45
  %v399 = vmul.f32 %v46, %v46
  %v400 = vmul.f32 %v47, %v47
  %v401 = vmul.f32 %v48, %v48
  %v402 = vmul.f32 %v49, %v49
  %v403 = vmul.f32 %v50, %v50
  %v404 = vmul.f32 %v51, %v51
  %v405 = vmul.f32 %v52, %v52
  %v406 = vmul.f32 %v53, %v53
  %v407 = vmul.f32 %v54, %v54
  %v408 = vmul.f32 %v55, %v55
  %v409 = vmul.f32 %v56, %v56
  %v410 = vmul.f32 %v57, %v57
  %v411 = vmul.f32 %v58, %v58
  %v412 = vmul.f32 %v59, %v59
  %v413 = vmul.f32 %v60, %v60
  %v414 = vmul.f32 %v61, %v61
  %v415 = vmul.f32 %v62, %v62
  %v416 = vmul.f32 %v63, %v63
  %v417 = vmul.f32 %v64, %v64
  %v418 = vmul.f32 %v65, %v65
  %v419 = vmul.f32 %v66, %v66
  %v420 = vmul.f32 %v67, %v67
  %v421 = vmul.f32 %v68, %v68
  %v422 = vmul.f32 %v69, %v69
  %v423 = vmul.f32 %v70, %v70
  %v424 = vmul.f32 %v71, %v71
  %v425 = vmul.f32 %v72, %v72
  %v426 = vmul.f32 %v73, %v73
  %v427 = vmul.f32 %v74, %v74
  %v428 = vmul.f32 %v75, %v75
  %v429 = vmul.f32 %v76, %v76
  %v430 = vmul.f32 %v77, %v77
  %v431 = vmul.f32 %v78, %v78
  %v432 = vmul.f32 %v79, %v79
  %v433 = vmul.f32 %v80, %v80
  %v434 = vmul.f32 %v81, %v81
  %v435 = vmul.f32 %v82, %v82
  %v436 = vmul.f32 %v83, %v83
  %v437 = vmul.f32 %v84, %v84
  %v438 = vmul.f32 %v85, %v85
  %v439 = vmul.f32 %v86, %v86
  %v440 = vmul.f32 %v87, %v87
  %v441 = vmul.f32 %v88, %v88
  %v442 = vmul.f32 %v89, %v89
  %v443 = vmul.f32 %v90, %v90
  %v444 = vmul.f32 %v91, %v91
  %v445 = vmul.f32 %v92, %v92
  %v446 = vmul.f32 %v93, %v93
  %v447 = vmul.f32 %v94, %v94
  %v448 = vmul.f32 %v95, %v95
  %v449 = vmul.f32 %v96, %v96
  %v450 = vmul.f32 %v97, %v97
  %v451 = vmul.f32 %v98, %v98
  %v452 = vmul.f32 %v99, %v99
  %v453 = vmul.f32 %v100, %v100
  %v454 = vmul.f32 %v101, %v101
  %v455 = vsel %vm102, %v367, 0.0
  %456 = vadd.xlane.f32.xlu0 %v455
  %v457 = vpop.xlane.xlu0 %456
  %v458 = vsel %vm102, %v368, 0.0
  %459 = vadd.xlane.f32.xlu0 %v458
  %v460 = vpop.xlane.xlu0 %459
  %v461 = vsel %vm102, %v369, 0.0
  %462 = vadd.xlane.f32.xlu0 %v461
  %v463 = vpop.xlane.xlu0 %462
  %v464 = vsel %vm102, %v370, 0.0
  %465 = vadd.xlane.f32.xlu0 %v464
  %v466 = vpop.xlane.xlu0 %465
  %v467 = vsel %vm102, %v371, 0.0
  %468 = vadd.xlane.f32.xlu0 %v467
  %v469 = vpop.xlane.xlu0 %468
  %v470 = vsel %vm102, %v372, 0.0
  %471 = vadd.xlane.f32.xlu0 %v470
  %v472 = vpop.xlane.xlu0 %471
  %v473 = vsel %vm102, %v373, 0.0
  %474 = vadd.xlane.f32.xlu0 %v473
  %v475 = vpop.xlane.xlu0 %474
  %v476 = vsel %vm102, %v374, 0.0
  %477 = vadd.xlane.f32.xlu0 %v476
  %v478 = vpop.xlane.xlu0 %477
  %v479 = vsel %vm102, %v375, 0.0
  %480 = vadd.xlane.f32.xlu0 %v479
  %v481 = vpop.xlane.xlu0 %480
  %v482 = vsel %vm102, %v376, 0.0
  %483 = vadd.xlane.f32.xlu0 %v482
  %v484 = vpop.xlane.xlu0 %483
  %v485 = vsel %vm102, %v377, 0.0
  %486 = vadd.xlane.f32.xlu0 %v485
  %v487 = vpop.xlane.xlu0 %486
  %v488 = vsel %vm102, %v378, 0.0
  %489 = vadd.xlane.f32.xlu0 %v488
  %v490 = vpop.xlane.xlu0 %489
  %v491 = vsel %vm102, %v379, 0.0
  %492 = vadd.xlane.f32.xlu0 %v491
  %v493 = vpop.xlane.xlu0 %492
  %v494 = vsel %vm102, %v380, 0.0
  %495 = vadd.xlane.f32.xlu0 %v494
  %v496 = vpop.xlane.xlu0 %495
  %v497 = vsel %vm102, %v381, 0.0
  %498 = vadd.xlane.f32.xlu0 %v497
  %v499 = vpop.xlane.xlu0 %498
  %v500 = vsel %vm102, %v382, 0.0
  %501 = vadd.xlane.f32.xlu0 %v500
  %v502 = vpop.xlane.xlu0 %501
  %v503 = vsel %vm102, %v383, 0.0
  %504 = vadd.xlane.f32.xlu0 %v503
  %v505 = vpop.xlane.xlu0 %504
  %v506 = vsel %vm102, %v384, 0.0
  %507 = vadd.xlane.f32.xlu0 %v506
  %v508 = vpop.xlane.xlu0 %507
  %v509 = vsel %vm102, %v385, 0.0
  %510 = vadd.xlane.f32.xlu0 %v509
  %v511 = vpop.xlane.xlu0 %510
  %v512 = vsel %vm102, %v386, 0.0
  %513 = vadd.xlane.f32.xlu0 %v512
  %v514 = vpop.xlane.xlu0 %513
  %v515 = vsel %vm102, %v387, 0.0
  %516 = vadd.xlane.f32.xlu0 %v515
  %v517 = vpop.xlane.xlu0 %516
  %v518 = vsel %vm102, %v388, 0.0
  %519 = vadd.xlane.f32.xlu0 %v518
  %v520 = vpop.xlane.xlu0 %519
  %v521 = vsel %vm102, %v389, 0.0
  %522 = vadd.xlane.f32.xlu0 %v521
  %v523 = vpop.xlane.xlu0 %522
  %v524 = vsel %vm102, %v390, 0.0
  %525 = vadd.xlane.f32.xlu0 %v524
  %v526 = vpop.xlane.xlu0 %525
  %v527 = vsel %vm102, %v391, 0.0
  %528 = vadd.xlane.f32.xlu0 %v527
  %v529 = vpop.xlane.xlu0 %528
  %v530 = vsel %vm102, %v392, 0.0
  %531 = vadd.xlane.f32.xlu0 %v530
  %v532 = vpop.xlane.xlu0 %531
  %v533 = vsel %vm102, %v393, 0.0
  %534 = vadd.xlane.f32.xlu0 %v533
  %v535 = vpop.xlane.xlu0 %534
  %v536 = vsel %vm102, %v394, 0.0
  %537 = vadd.xlane.f32.xlu0 %v536
  %v538 = vpop.xlane.xlu0 %537
  %v539 = vsel %vm102, %v395, 0.0
  %540 = vadd.xlane.f32.xlu0 %v539
  %v541 = vpop.xlane.xlu0 %540
  %v542 = vsel %vm102, %v396, 0.0
  %543 = vadd.xlane.f32.xlu0 %v542
  %v544 = vpop.xlane.xlu0 %543
  %v545 = vsel %vm102, %v397, 0.0
  %546 = vadd.xlane.f32.xlu0 %v545
  %v547 = vpop.xlane.xlu0 %546
  %v548 = vsel %vm102, %v398, 0.0
  %549 = vadd.xlane.f32.xlu0 %v548
  %v550 = vpop.xlane.xlu0 %549
  %v551 = vsel %vm102, %v399, 0.0
  %552 = vadd.xlane.f32.xlu0 %v551
  %v553 = vpop.xlane.xlu0 %552
  %v554 = vsel %vm102, %v400, 0.0
  %555 = vadd.xlane.f32.xlu0 %v554
  %v556 = vpop.xlane.xlu0 %555
  %v557 = vsel %vm102, %v401, 0.0
  %558 = vadd.xlane.f32.xlu0 %v557
  %v559 = vpop.xlane.xlu0 %558
  %v560 = vsel %vm102, %v402, 0.0
  %561 = vadd.xlane.f32.xlu0 %v560
  %v562 = vpop.xlane.xlu0 %561
  %v563 = vsel %vm102, %v403, 0.0
  %564 = vadd.xlane.f32.xlu0 %v563
  %v565 = vpop.xlane.xlu0 %564
  %v566 = vsel %vm102, %v404, 0.0
  %567 = vadd.xlane.f32.xlu0 %v566
  %v568 = vpop.xlane.xlu0 %567
  %v569 = vsel %vm102, %v405, 0.0
  %570 = vadd.xlane.f32.xlu0 %v569
  %v571 = vpop.xlane.xlu0 %570
  %v572 = vsel %vm102, %v406, 0.0
  %573 = vadd.xlane.f32.xlu0 %v572
  %v574 = vpop.xlane.xlu0 %573
  %v575 = vsel %vm102, %v407, 0.0
  %576 = vadd.xlane.f32.xlu0 %v575
  %v577 = vpop.xlane.xlu0 %576
  %v578 = vsel %vm102, %v408, 0.0
  %579 = vadd.xlane.f32.xlu0 %v578
  %v580 = vpop.xlane.xlu0 %579
  %v581 = vsel %vm102, %v409, 0.0
  %582 = vadd.xlane.f32.xlu0 %v581
  %v583 = vpop.xlane.xlu0 %582
  %v584 = vsel %vm102, %v410, 0.0
  %585 = vadd.xlane.f32.xlu0 %v584
  %v586 = vpop.xlane.xlu0 %585
  %v587 = vsel %vm102, %v411, 0.0
  %588 = vadd.xlane.f32.xlu0 %v587
  %v589 = vpop.xlane.xlu0 %588
  %v590 = vsel %vm102, %v412, 0.0
  %591 = vadd.xlane.f32.xlu0 %v590
  %v592 = vpop.xlane.xlu0 %591
  %v593 = vsel %vm102, %v413, 0.0
  %594 = vadd.xlane.f32.xlu0 %v593
  %v595 = vpop.xlane.xlu0 %594
  %v596 = vsel %vm102, %v414, 0.0
  %597 = vadd.xlane.f32.xlu0 %v596
  %v598 = vpop.xlane.xlu0 %597
  %v599 = vsel %vm102, %v415, 0.0
  %600 = vadd.xlane.f32.xlu0 %v599
  %v601 = vpop.xlane.xlu0 %600
  %v602 = vsel %vm102, %v416, 0.0
  %603 = vadd.xlane.f32.xlu0 %v602
  %v604 = vpop.xlane.xlu0 %603
  %v605 = vsel %vm102, %v417, 0.0
  %606 = vadd.xlane.f32.xlu0 %v605
  %v607 = vpop.xlane.xlu0 %606
  %v608 = vsel %vm102, %v418, 0.0
  %609 = vadd.xlane.f32.xlu0 %v608
  %v610 = vpop.xlane.xlu0 %609
  %v611 = vsel %vm102, %v419, 0.0
  %612 = vadd.xlane.f32.xlu0 %v611
  %v613 = vpop.xlane.xlu0 %612
  %v614 = vsel %vm102, %v420, 0.0
  %615 = vadd.xlane.f32.xlu0 %v614
  %v616 = vpop.xlane.xlu0 %615
  %v617 = vsel %vm102, %v421, 0.0
  %618 = vadd.xlane.f32.xlu0 %v617
  %v619 = vpop.xlane.xlu0 %618
  %v620 = vsel %vm102, %v422, 0.0
  %621 = vadd.xlane.f32.xlu0 %v620
  %v622 = vpop.xlane.xlu0 %621
  %v623 = vsel %vm102, %v423, 0.0
  %624 = vadd.xlane.f32.xlu0 %v623
  %v625 = vpop.xlane.xlu0 %624
  %v626 = vsel %vm102, %v424, 0.0
  %627 = vadd.xlane.f32.xlu0 %v626
  %v628 = vpop.xlane.xlu0 %627
  %v629 = vsel %vm102, %v425, 0.0
  %630 = vadd.xlane.f32.xlu0 %v629
  %v631 = vpop.xlane.xlu0 %630
  %v632 = vsel %vm102, %v426, 0.0
  %633 = vadd.xlane.f32.xlu0 %v632
  %v634 = vpop.xlane.xlu0 %633
  %v635 = vsel %vm102, %v427, 0.0
  %636 = vadd.xlane.f32.xlu0 %v635
  %v637 = vpop.xlane.xlu0 %636
  %v638 = vsel %vm102, %v428, 0.0
  %639 = vadd.xlane.f32.xlu0 %v638
  %v640 = vpop.xlane.xlu0 %639
  %v641 = vsel %vm102, %v429, 0.0
  %642 = vadd.xlane.f32.xlu0 %v641
  %v643 = vpop.xlane.xlu0 %642
  %v644 = vsel %vm102, %v430, 0.0
  %645 = vadd.xlane.f32.xlu0 %v644
  %v646 = vpop.xlane.xlu0 %645
  %v647 = vsel %vm102, %v431, 0.0
  %648 = vadd.xlane.f32.xlu0 %v647
  %v649 = vpop.xlane.xlu0 %648
  %v650 = vsel %vm102, %v432, 0.0
  %651 = vadd.xlane.f32.xlu0 %v650
  %v652 = vpop.xlane.xlu0 %651
  %v653 = vsel %vm102, %v433, 0.0
  %654 = vadd.xlane.f32.xlu0 %v653
  %v655 = vpop.xlane.xlu0 %654
  %v656 = vsel %vm102, %v434, 0.0
  %657 = vadd.xlane.f32.xlu0 %v656
  %v658 = vpop.xlane.xlu0 %657
  %v659 = vsel %vm102, %v435, 0.0
  %660 = vadd.xlane.f32.xlu0 %v659
  %v661 = vpop.xlane.xlu0 %660
  %v662 = vsel %vm102, %v436, 0.0
  %663 = vadd.xlane.f32.xlu0 %v662
  %v664 = vpop.xlane.xlu0 %663
  %v665 = vsel %vm102, %v437, 0.0
  %666 = vadd.xlane.f32.xlu0 %v665
  %v667 = vpop.xlane.xlu0 %666
  %v668 = vsel %vm102, %v438, 0.0
  %669 = vadd.xlane.f32.xlu0 %v668
  %v670 = vpop.xlane.xlu0 %669
  %v671 = vsel %vm102, %v439, 0.0
  %672 = vadd.xlane.f32.xlu0 %v671
  %v673 = vpop.xlane.xlu0 %672
  %v674 = vsel %vm102, %v440, 0.0
  %675 = vadd.xlane.f32.xlu0 %v674
  %v676 = vpop.xlane.xlu0 %675
  %v677 = vsel %vm102, %v441, 0.0
  %678 = vadd.xlane.f32.xlu0 %v677
  %v679 = vpop.xlane.xlu0 %678
  %v680 = vsel %vm102, %v442, 0.0
  %681 = vadd.xlane.f32.xlu0 %v680
  %v682 = vpop.xlane.xlu0 %681
  %v683 = vsel %vm102, %v443, 0.0
  %684 = vadd.xlane.f32.xlu0 %v683
  %v685 = vpop.xlane.xlu0 %684
  %v686 = vsel %vm102, %v444, 0.0
  %687 = vadd.xlane.f32.xlu0 %v686
  %v688 = vpop.xlane.xlu0 %687
  %v689 = vsel %vm102, %v445, 0.0
  %690 = vadd.xlane.f32.xlu0 %v689
  %v691 = vpop.xlane.xlu0 %690
  %v692 = vsel %vm102, %v446, 0.0
  %693 = vadd.xlane.f32.xlu0 %v692
  %v694 = vpop.xlane.xlu0 %693
  %v695 = vsel %vm102, %v447, 0.0
  %696 = vadd.xlane.f32.xlu0 %v695
  %v697 = vpop.xlane.xlu0 %696
  %v698 = vsel %vm102, %v448, 0.0
  %699 = vadd.xlane.f32.xlu0 %v698
  %v700 = vpop.xlane.xlu0 %699
  %v701 = vsel %vm102, %v449, 0.0
  %702 = vadd.xlane.f32.xlu0 %v701
  %v703 = vpop.xlane.xlu0 %702
  %v704 = vsel %vm102, %v450, 0.0
  %705 = vadd.xlane.f32.xlu0 %v704
  %v706 = vpop.xlane.xlu0 %705
  %v707 = vsel %vm102, %v451, 0.0
  %708 = vadd.xlane.f32.xlu0 %v707
  %v709 = vpop.xlane.xlu0 %708
  %v710 = vsel %vm102, %v452, 0.0
  %711 = vadd.xlane.f32.xlu0 %v710
  %v712 = vpop.xlane.xlu0 %711
  %v713 = vsel %vm102, %v453, 0.0
  %714 = vadd.xlane.f32.xlu0 %v713
  %v715 = vpop.xlane.xlu0 %714
  %v716 = vsel %vm102, %v454, 0.0
  %717 = vadd.xlane.f32.xlu0 %v716
  %v718 = vpop.xlane.xlu0 %717
  %v719 = vadd.f32 %v105, 0.0
  %v720 = vadd.f32 %v108, 0.0
  %v721 = vadd.f32 %v111, 0.0
  %v722 = vadd.f32 %v114, 0.0
  %v723 = vadd.f32 %v117, 0.0
  %v724 = vadd.f32 %v120, 0.0
  %v725 = vadd.f32 %v123, 0.0
  %v726 = vadd.f32 %v126, 0.0
  %v727 = vadd.f32 %v129, 0.0
  %v728 = vadd.f32 %v132, 0.0
  %v729 = vadd.f32 %v135, 0.0
  %v730 = vadd.f32 %v138, 0.0
  %v731 = vadd.f32 %v141, 0.0
  %v732 = vadd.f32 %v144, 0.0
  %v733 = vadd.f32 %v147, 0.0
  %v734 = vadd.f32 %v150, 0.0
  %v735 = vadd.f32 %v153, 0.0
  %v736 = vadd.f32 %v156, 0.0
  %v737 = vadd.f32 %v159, 0.0
  %v738 = vadd.f32 %v162, 0.0
  %v739 = vadd.f32 %v165, 0.0
  %v740 = vadd.f32 %v168, 0.0
  %v741 = vadd.f32 %v171, 0.0
  %v742 = vadd.f32 %v174, 0.0
  %v743 = vadd.f32 %v177, 0.0
  %v744 = vadd.f32 %v180, 0.0
  %v745 = vadd.f32 %v183, 0.0
  %v746 = vadd.f32 %v186, 0.0
  %v747 = vadd.f32 %v189, 0.0
  %v748 = vadd.f32 %v192, 0.0
  %v749 = vadd.f32 %v195, 0.0
  %v750 = vadd.f32 %v198, 0.0
  %v751 = vadd.f32 %v201, 0.0
  %v752 = vadd.f32 %v204, 0.0
  %v753 = vadd.f32 %v207, 0.0
  %v754 = vadd.f32 %v210, 0.0
  %v755 = vadd.f32 %v213, 0.0
  %v756 = vadd.f32 %v216, 0.0
  %v757 = vadd.f32 %v219, 0.0
  %v758 = vadd.f32 %v222, 0.0
  %v759 = vadd.f32 %v225, 0.0
  %v760 = vadd.f32 %v228, 0.0
  %v761 = vadd.f32 %v231, 0.0
  %v762 = vadd.f32 %v234, 0.0
  %v763 = vadd.f32 %v237, 0.0
  %v764 = vadd.f32 %v240, 0.0
  %v765 = vadd.f32 %v243, 0.0
  %v766 = vadd.f32 %v246, 0.0
  %v767 = vadd.f32 %v249, 0.0
  %v768 = vadd.f32 %v252, 0.0
  %v769 = vadd.f32 %v255, 0.0
  %v770 = vadd.f32 %v258, 0.0
  %v771 = vadd.f32 %v261, 0.0
  %v772 = vadd.f32 %v264, 0.0
  %v773 = vadd.f32 %v267, 0.0
  %v774 = vadd.f32 %v270, 0.0
  %v775 = vadd.f32 %v273, 0.0
  %v776 = vadd.f32 %v276, 0.0
  %v777 = vadd.f32 %v279, 0.0
  %v778 = vadd.f32 %v282, 0.0
  %v779 = vadd.f32 %v285, 0.0
  %v780 = vadd.f32 %v288, 0.0
  %v781 = vadd.f32 %v291, 0.0
  %v782 = vadd.f32 %v294, 0.0
  %v783 = vadd.f32 %v297, 0.0
  %v784 = vadd.f32 %v300, 0.0
  %v785 = vadd.f32 %v303, 0.0
  %v786 = vadd.f32 %v306, 0.0
  %v787 = vadd.f32 %v309, 0.0
  %v788 = vadd.f32 %v312, 0.0
  %v789 = vadd.f32 %v315, 0.0
  %v790 = vadd.f32 %v318, 0.0
  %v791 = vadd.f32 %v321, 0.0
  %v792 = vadd.f32 %v324, 0.0
  %v793 = vadd.f32 %v327, 0.0
  %v794 = vadd.f32 %v330, 0.0
  %v795 = vadd.f32 %v333, 0.0
  %v796 = vadd.f32 %v336, 0.0
  %v797 = vadd.f32 %v339, 0.0
  %v798 = vadd.f32 %v342, 0.0
  %v799 = vadd.f32 %v345, 0.0
  %v800 = vadd.f32 %v348, 0.0
  %v801 = vadd.f32 %v351, 0.0
  %v802 = vadd.f32 %v354, 0.0
  %v803 = vadd.f32 %v357, 0.0
  %v804 = vadd.f32 %v360, 0.0
  %v805 = vadd.f32 %v363, 0.0
  %v806 = vadd.f32 %v366, 0.0
  %v807 = vadd.f32 %v457, 0.0
  %v808 = vadd.f32 %v460, 0.0
  %v809 = vadd.f32 %v463, 0.0
  %v810 = vadd.f32 %v466, 0.0
  %v811 = vadd.f32 %v469, 0.0
  %v812 = vadd.f32 %v472, 0.0
  %v813 = vadd.f32 %v475, 0.0
  %v814 = vadd.f32 %v478, 0.0
  %v815 = vadd.f32 %v481, 0.0
  %v816 = vadd.f32 %v484, 0.0
  %v817 = vadd.f32 %v487, 0.0
  %v818 = vadd.f32 %v490, 0.0
  %v819 = vadd.f32 %v493, 0.0
  %v820 = vadd.f32 %v496, 0.0
  %v821 = vadd.f32 %v499, 0.0
  %v822 = vadd.f32 %v502, 0.0
  %v823 = vadd.f32 %v505, 0.0
  %v824 = vadd.f32 %v508, 0.0
  %v825 = vadd.f32 %v511, 0.0
  %v826 = vadd.f32 %v514, 0.0
  %v827 = vadd.f32 %v517, 0.0
  %v828 = vadd.f32 %v520, 0.0
  %v829 = vadd.f32 %v523, 0.0
  %v830 = vadd.f32 %v526, 0.0
  %v831 = vadd.f32 %v529, 0.0
  %v832 = vadd.f32 %v532, 0.0
  %v833 = vadd.f32 %v535, 0.0
  %v834 = vadd.f32 %v538, 0.0
  %v835 = vadd.f32 %v541, 0.0
  %v836 = vadd.f32 %v544, 0.0
  %v837 = vadd.f32 %v547, 0.0
  %v838 = vadd.f32 %v550, 0.0
  %v839 = vadd.f32 %v553, 0.0
  %v840 = vadd.f32 %v556, 0.0
  %v841 = vadd.f32 %v559, 0.0
  %v842 = vadd.f32 %v562, 0.0
  %v843 = vadd.f32 %v565, 0.0
  %v844 = vadd.f32 %v568, 0.0
  %v845 = vadd.f32 %v571, 0.0
  %v846 = vadd.f32 %v574, 0.0
  %v847 = vadd.f32 %v577, 0.0
  %v848 = vadd.f32 %v580, 0.0
  %v849 = vadd.f32 %v583, 0.0
  %v850 = vadd.f32 %v586, 0.0
  %v851 = vadd.f32 %v589, 0.0
  %v852 = vadd.f32 %v592, 0.0
  %v853 = vadd.f32 %v595, 0.0
  %v854 = vadd.f32 %v598, 0.0
  %v855 = vadd.f32 %v601, 0.0
  %v856 = vadd.f32 %v604, 0.0
  %v857 = vadd.f32 %v607, 0.0
  %v858 = vadd.f32 %v610, 0.0
  %v859 = vadd.f32 %v613, 0.0
  %v860 = vadd.f32 %v616, 0.0
  %v861 = vadd.f32 %v619, 0.0
  %v862 = vadd.f32 %v622, 0.0
  %v863 = vadd.f32 %v625, 0.0
  %v864 = vadd.f32 %v628, 0.0
  %v865 = vadd.f32 %v631, 0.0
  %v866 = vadd.f32 %v634, 0.0
  %v867 = vadd.f32 %v637, 0.0
  %v868 = vadd.f32 %v640, 0.0
  %v869 = vadd.f32 %v643, 0.0
  %v870 = vadd.f32 %v646, 0.0
  %v871 = vadd.f32 %v649, 0.0
  %v872 = vadd.f32 %v652, 0.0
  %v873 = vadd.f32 %v655, 0.0
  %v874 = vadd.f32 %v658, 0.0
  %v875 = vadd.f32 %v661, 0.0
  %v876 = vadd.f32 %v664, 0.0
  %v877 = vadd.f32 %v667, 0.0
  %v878 = vadd.f32 %v670, 0.0
  %v879 = vadd.f32 %v673, 0.0
  %v880 = vadd.f32 %v676, 0.0
  %v881 = vadd.f32 %v679, 0.0
  %v882 = vadd.f32 %v682, 0.0
  %v883 = vadd.f32 %v685, 0.0
  %v884 = vadd.f32 %v688, 0.0
  %v885 = vadd.f32 %v691, 0.0
  %v886 = vadd.f32 %v694, 0.0
  %v887 = vadd.f32 %v697, 0.0
  %v888 = vadd.f32 %v700, 0.0
  %v889 = vadd.f32 %v703, 0.0
  %v890 = vadd.f32 %v706, 0.0
  %v891 = vadd.f32 %v709, 0.0
  %v892 = vadd.f32 %v712, 0.0
  %v893 = vadd.f32 %v715, 0.0
  %v894 = vadd.f32 %v718, 0.0
  %v895 = vmul.f32 %v719, 0.020408163
  %v896 = vmul.f32 %v720, 0.020408163
  %v897 = vmul.f32 %v721, 0.020408163
  %v898 = vmul.f32 %v722, 0.020408163
  %v899 = vmul.f32 %v723, 0.020408163
  %v900 = vmul.f32 %v724, 0.020408163
  %v901 = vmul.f32 %v725, 0.020408163
  %v902 = vmul.f32 %v726, 0.020408163
  %v903 = vmul.f32 %v727, 0.020408163
  %v904 = vmul.f32 %v728, 0.020408163
  %v905 = vmul.f32 %v729, 0.020408163
  %v906 = vmul.f32 %v730, 0.020408163
  %v907 = vmul.f32 %v731, 0.020408163
  %v908 = vmul.f32 %v732, 0.020408163
  %v909 = vmul.f32 %v733, 0.020408163
  %v910 = vmul.f32 %v734, 0.020408163
  %v911 = vmul.f32 %v735, 0.020408163
  %v912 = vmul.f32 %v736, 0.020408163
  %v913 = vmul.f32 %v737, 0.020408163
  %v914 = vmul.f32 %v738, 0.020408163
  %v915 = vmul.f32 %v739, 0.020408163
  %v916 = vmul.f32 %v740, 0.020408163
  %v917 = vmul.f32 %v741, 0.020408163
  %v918 = vmul.f32 %v742, 0.020408163
  %v919 = vmul.f32 %v743, 0.020408163
  %v920 = vmul.f32 %v744, 0.020408163
  %v921 = vmul.f32 %v745, 0.020408163
  %v922 = vmul.f32 %v746, 0.020408163
  %v923 = vmul.f32 %v747, 0.020408163
  %v924 = vmul.f32 %v748, 0.020408163
  %v925 = vmul.f32 %v749, 0.020408163
  %v926 = vmul.f32 %v750, 0.020408163
  %v927 = vmul.f32 %v751, 0.020408163
  %v928 = vmul.f32 %v752, 0.020408163
  %v929 = vmul.f32 %v753, 0.020408163
  %v930 = vmul.f32 %v754, 0.020408163
  %v931 = vmul.f32 %v755, 0.020408163
  %v932 = vmul.f32 %v756, 0.020408163
  %v933 = vmul.f32 %v757, 0.020408163
  %v934 = vmul.f32 %v758, 0.020408163
  %v935 = vmul.f32 %v759, 0.020408163
  %v936 = vmul.f32 %v760, 0.020408163
  %v937 = vmul.f32 %v761, 0.020408163
  %v938 = vmul.f32 %v762, 0.020408163
  %v939 = vmul.f32 %v763, 0.020408163
  %v940 = vmul.f32 %v764, 0.020408163
  %v941 = vmul.f32 %v765, 0.020408163
  %v942 = vmul.f32 %v766, 0.020408163
  %v943 = vmul.f32 %v767, 0.020408163
  %v944 = vmul.f32 %v768, 0.020408163
  %v945 = vmul.f32 %v769, 0.020408163
  %v946 = vmul.f32 %v770, 0.020408163
  %v947 = vmul.f32 %v771, 0.020408163
  %v948 = vmul.f32 %v772, 0.020408163
  %v949 = vmul.f32 %v773, 0.020408163
  %v950 = vmul.f32 %v774, 0.020408163
  %v951 = vmul.f32 %v775, 0.020408163
  %v952 = vmul.f32 %v776, 0.020408163
  %v953 = vmul.f32 %v777, 0.020408163
  %v954 = vmul.f32 %v778, 0.020408163
  %v955 = vmul.f32 %v779, 0.020408163
  %v956 = vmul.f32 %v780, 0.020408163
  %v957 = vmul.f32 %v781, 0.020408163
  %v958 = vmul.f32 %v782, 0.020408163
  %v959 = vmul.f32 %v783, 0.020408163
  %v960 = vmul.f32 %v784, 0.020408163
  %v961 = vmul.f32 %v785, 0.020408163
  %v962 = vmul.f32 %v786, 0.020408163
  %v963 = vmul.f32 %v787, 0.020408163
  %v964 = vmul.f32 %v788, 0.020408163
  %v965 = vmul.f32 %v789, 0.020408163
  %v966 = vmul.f32 %v790, 0.020408163
  %v967 = vmul.f32 %v791, 0.020408163
  %v968 = vmul.f32 %v792, 0.020408163
  %v969 = vmul.f32 %v793, 0.020408163
  %v970 = vmul.f32 %v794, 0.020408163
  %v971 = vmul.f32 %v795, 0.020408163
  %v972 = vmul.f32 %v796, 0.020408163
  %v973 = vmul.f32 %v797, 0.020408163
  %v974 = vmul.f32 %v798, 0.020408163
  %v975 = vmul.f32 %v799, 0.020408163
  %v976 = vmul.f32 %v800, 0.020408163
  %v977 = vmul.f32 %v801, 0.020408163
  %v978 = vmul.f32 %v802, 0.020408163
  %v979 = vmul.f32 %v803, 0.020408163
  %v980 = vmul.f32 %v804, 0.020408163
  %v981 = vmul.f32 %v805, 0.020408163
  %v982 = vmul.f32 %v806, 0.020408163
  %v983 = vmul.f32 %v807, 0.020408163
  %v984 = vmul.f32 %v808, 0.020408163
  %v985 = vmul.f32 %v809, 0.020408163
  %v986 = vmul.f32 %v810, 0.020408163
  %v987 = vmul.f32 %v811, 0.020408163
  %v988 = vmul.f32 %v812, 0.020408163
  %v989 = vmul.f32 %v813, 0.020408163
  %v990 = vmul.f32 %v814, 0.020408163
  %v991 = vmul.f32 %v815, 0.020408163
  %v992 = vmul.f32 %v816, 0.020408163
  %v993 = vmul.f32 %v817, 0.020408163
  %v994 = vmul.f32 %v818, 0.020408163
  %v995 = vmul.f32 %v819, 0.020408163
  %v996 = vmul.f32 %v820, 0.020408163
  %v997 = vmul.f32 %v821, 0.020408163
  %v998 = vmul.f32 %v822, 0.020408163
  %v999 = vmul.f32 %v823, 0.020408163
  %v1000 = vmul.f32 %v824, 0.020408163
  %v1001 = vmul.f32 %v825, 0.020408163
  %v1002 = vmul.f32 %v826, 0.020408163
  %v1003 = vmul.f32 %v827, 0.020408163
  %v1004 = vmul.f32 %v828, 0.020408163
  %v1005 = vmul.f32 %v829, 0.020408163
  %v1006 = vmul.f32 %v830, 0.020408163
  %v1007 = vmul.f32 %v831, 0.020408163
  %v1008 = vmul.f32 %v832, 0.020408163
  %v1009 = vmul.f32 %v833, 0.020408163
  %v1010 = vmul.f32 %v834, 0.020408163
  %v1011 = vmul.f32 %v835, 0.020408163
  %v1012 = vmul.f32 %v836, 0.020408163
  %v1013 = vmul.f32 %v837, 0.020408163
  %v1014 = vmul.f32 %v838, 0.020408163
  %v1015 = vmul.f32 %v839, 0.020408163
  %v1016 = vmul.f32 %v840, 0.020408163
  %v1017 = vmul.f32 %v841, 0.020408163
  %v1018 = vmul.f32 %v842, 0.020408163
  %v1019 = vmul.f32 %v843, 0.020408163
  %v1020 = vmul.f32 %v844, 0.020408163
  %v1021 = vmul.f32 %v845, 0.020408163
  %v1022 = vmul.f32 %v846, 0.020408163
  %v1023 = vmul.f32 %v847, 0.020408163
  %v1024 = vmul.f32 %v848, 0.020408163
  %v1025 = vmul.f32 %v849, 0.020408163
  %v1026 = vmul.f32 %v850, 0.020408163
  %v1027 = vmul.f32 %v851, 0.020408163
  %v1028 = vmul.f32 %v852, 0.020408163
  %v1029 = vmul.f32 %v853, 0.020408163
  %v1030 = vmul.f32 %v854, 0.020408163
  %v1031 = vmul.f32 %v855, 0.020408163
  %v1032 = vmul.f32 %v856, 0.020408163
  %v1033 = vmul.f32 %v857, 0.020408163
  %v1034 = vmul.f32 %v858, 0.020408163
  %v1035 = vmul.f32 %v859, 0.020408163
  %v1036 = vmul.f32 %v860, 0.020408163
  %v1037 = vmul.f32 %v861, 0.020408163
  %v1038 = vmul.f32 %v862, 0.020408163
  %v1039 = vmul.f32 %v863, 0.020408163
  %v1040 = vmul.f32 %v864, 0.020408163
  %v1041 = vmul.f32 %v865, 0.020408163
  %v1042 = vmul.f32 %v866, 0.020408163
  %v1043 = vmul.f32 %v867, 0.020408163
  %v1044 = vmul.f32 %v868, 0.020408163
  %v1045 = vmul.f32 %v869, 0.020408163
  %v1046 = vmul.f32 %v870, 0.020408163
  %v1047 = vmul.f32 %v871, 0.020408163
  %v1048 = vmul.f32 %v872, 0.020408163
  %v1049 = vmul.f32 %v873, 0.020408163
  %v1050 = vmul.f32 %v874, 0.020408163
  %v1051 = vmul.f32 %v875, 0.020408163
  %v1052 = vmul.f32 %v876, 0.020408163
  %v1053 = vmul.f32 %v877, 0.020408163
  %v1054 = vmul.f32 %v878, 0.020408163
  %v1055 = vmul.f32 %v879, 0.020408163
  %v1056 = vmul.f32 %v880, 0.020408163
  %v1057 = vmul.f32 %v881, 0.020408163
  %v1058 = vmul.f32 %v882, 0.020408163
  %v1059 = vmul.f32 %v883, 0.020408163
  %v1060 = vmul.f32 %v884, 0.020408163
  %v1061 = vmul.f32 %v885, 0.020408163
  %v1062 = vmul.f32 %v886, 0.020408163
  %v1063 = vmul.f32 %v887, 0.020408163
  %v1064 = vmul.f32 %v888, 0.020408163
  %v1065 = vmul.f32 %v889, 0.020408163
  %v1066 = vmul.f32 %v890, 0.020408163
  %v1067 = vmul.f32 %v891, 0.020408163
  %v1068 = vmul.f32 %v892, 0.020408163
  %v1069 = vmul.f32 %v893, 0.020408163
  %v1070 = vmul.f32 %v894, 0.020408163
  %v1071 = vmul.f32 %v895, %v895
  %v1072 = vmul.f32 %v896, %v896
  %v1073 = vmul.f32 %v897, %v897
  %v1074 = vmul.f32 %v898, %v898
  %v1075 = vmul.f32 %v899, %v899
  %v1076 = vmul.f32 %v900, %v900
  %v1077 = vmul.f32 %v901, %v901
  %v1078 = vmul.f32 %v902, %v902
  %v1079 = vmul.f32 %v903, %v903
  %v1080 = vmul.f32 %v904, %v904
  %v1081 = vmul.f32 %v905, %v905
  %v1082 = vmul.f32 %v906, %v906
  %v1083 = vmul.f32 %v907, %v907
  %v1084 = vmul.f32 %v908, %v908
  %v1085 = vmul.f32 %v909, %v909
  %v1086 = vmul.f32 %v910, %v910
  %v1087 = vmul.f32 %v911, %v911
  %v1088 = vmul.f32 %v912, %v912
  %v1089 = vmul.f32 %v913, %v913
  %v1090 = vmul.f32 %v914, %v914
  %v1091 = vmul.f32 %v915, %v915
  %v1092 = vmul.f32 %v916, %v916
  %v1093 = vmul.f32 %v917, %v917
  %v1094 = vmul.f32 %v918, %v918
  %v1095 = vmul.f32 %v919, %v919
  %v1096 = vmul.f32 %v920, %v920
  %v1097 = vmul.f32 %v921, %v921
  %v1098 = vmul.f32 %v922, %v922
  %v1099 = vmul.f32 %v923, %v923
  %v1100 = vmul.f32 %v924, %v924
  %v1101 = vmul.f32 %v925, %v925
  %v1102 = vmul.f32 %v926, %v926
  %v1103 = vmul.f32 %v927, %v927
  %v1104 = vmul.f32 %v928, %v928
  %v1105 = vmul.f32 %v929, %v929
  %v1106 = vmul.f32 %v930, %v930
  %v1107 = vmul.f32 %v931, %v931
  %v1108 = vmul.f32 %v932, %v932
  %v1109 = vmul.f32 %v933, %v933
  %v1110 = vmul.f32 %v934, %v934
  %v1111 = vmul.f32 %v935, %v935
  %v1112 = vmul.f32 %v936, %v936
  %v1113 = vmul.f32 %v937, %v937
  %v1114 = vmul.f32 %v938, %v938
  %v1115 = vmul.f32 %v939, %v939
  %v1116 = vmul.f32 %v940, %v940
  %v1117 = vmul.f32 %v941, %v941
  %v1118 = vmul.f32 %v942, %v942
  %v1119 = vmul.f32 %v943, %v943
  %v1120 = vmul.f32 %v944, %v944
  %v1121 = vmul.f32 %v945, %v945
  %v1122 = vmul.f32 %v946, %v946
  %v1123 = vmul.f32 %v947, %v947
  %v1124 = vmul.f32 %v948, %v948
  %v1125 = vmul.f32 %v949, %v949
  %v1126 = vmul.f32 %v950, %v950
  %v1127 = vmul.f32 %v951, %v951
  %v1128 = vmul.f32 %v952, %v952
  %v1129 = vmul.f32 %v953, %v953
  %v1130 = vmul.f32 %v954, %v954
  %v1131 = vmul.f32 %v955, %v955
  %v1132 = vmul.f32 %v956, %v956
  %v1133 = vmul.f32 %v957, %v957
  %v1134 = vmul.f32 %v958, %v958
  %v1135 = vmul.f32 %v959, %v959
  %v1136 = vmul.f32 %v960, %v960
  %v1137 = vmul.f32 %v961, %v961
  %v1138 = vmul.f32 %v962, %v962
  %v1139 = vmul.f32 %v963, %v963
  %v1140 = vmul.f32 %v964, %v964
  %v1141 = vmul.f32 %v965, %v965
  %v1142 = vmul.f32 %v966, %v966
  %v1143 = vmul.f32 %v967, %v967
  %v1144 = vmul.f32 %v968, %v968
  %v1145 = vmul.f32 %v969, %v969
  %v1146 = vmul.f32 %v970, %v970
  %v1147 = vmul.f32 %v971, %v971
  %v1148 = vmul.f32 %v972, %v972
  %v1149 = vmul.f32 %v973, %v973
  %v1150 = vmul.f32 %v974, %v974
  %v1151 = vmul.f32 %v975, %v975
  %v1152 = vmul.f32 %v976, %v976
  %v1153 = vmul.f32 %v977, %v977
  %v1154 = vmul.f32 %v978, %v978
  %v1155 = vmul.f32 %v979, %v979
  %v1156 = vmul.f32 %v980, %v980
  %v1157 = vmul.f32 %v981, %v981
  %v1158 = vmul.f32 %v982, %v982
  %v1159 = vsub.f32 %v983, %v1071
  %v1160 = vsub.f32 %v984, %v1072
  %v1161 = vsub.f32 %v985, %v1073
  %v1162 = vsub.f32 %v986, %v1074
  %v1163 = vsub.f32 %v987, %v1075
  %v1164 = vsub.f32 %v988, %v1076
  %v1165 = vsub.f32 %v989, %v1077
  %v1166 = vsub.f32 %v990, %v1078
  %v1167 = vsub.f32 %v991, %v1079
  %v1168 = vsub.f32 %v992, %v1080
  %v1169 = vsub.f32 %v993, %v1081
  %v1170 = vsub.f32 %v994, %v1082
  %v1171 = vsub.f32 %v995, %v1083
  %v1172 = vsub.f32 %v996, %v1084
  %v1173 = vsub.f32 %v997, %v1085
  %v1174 = vsub.f32 %v998, %v1086
  %v1175 = vsub.f32 %v999, %v1087
  %v1176 = vsub.f32 %v1000, %v1088
  %v1177 = vsub.f32 %v1001, %v1089
  %v1178 = vsub.f32 %v1002, %v1090
  %v1179 = vsub.f32 %v1003, %v1091
  %v1180 = vsub.f32 %v1004, %v1092
  %v1181 = vsub.f32 %v1005, %v1093
  %v1182 = vsub.f32 %v1006, %v1094
  %v1183 = vsub.f32 %v1007, %v1095
  %v1184 = vsub.f32 %v1008, %v1096
  %v1185 = vsub.f32 %v1009, %v1097
  %v1186 = vsub.f32 %v1010, %v1098
  %v1187 = vsub.f32 %v1011, %v1099
  %v1188 = vsub.f32 %v1012, %v1100
  %v1189 = vsub.f32 %v1013, %v1101
  %v1190 = vsub.f32 %v1014, %v1102
  %v1191 = vsub.f32 %v1015, %v1103
  %v1192 = vsub.f32 %v1016, %v1104
  %v1193 = vsub.f32 %v1017, %v1105
  %v1194 = vsub.f32 %v1018, %v1106
  %v1195 = vsub.f32 %v1019, %v1107
  %v1196 = vsub.f32 %v1020, %v1108
  %v1197 = vsub.f32 %v1021, %v1109
  %v1198 = vsub.f32 %v1022, %v1110
  %v1199 = vsub.f32 %v1023, %v1111
  %v1200 = vsub.f32 %v1024, %v1112
  %v1201 = vsub.f32 %v1025, %v1113
  %v1202 = vsub.f32 %v1026, %v1114
  %v1203 = vsub.f32 %v1027, %v1115
  %v1204 = vsub.f32 %v1028, %v1116
  %v1205 = vsub.f32 %v1029, %v1117
  %v1206 = vsub.f32 %v1030, %v1118
  %v1207 = vsub.f32 %v1031, %v1119
  %v1208 = vsub.f32 %v1032, %v1120
  %v1209 = vsub.f32 %v1033, %v1121
  %v1210 = vsub.f32 %v1034, %v1122
  %v1211 = vsub.f32 %v1035, %v1123
  %v1212 = vsub.f32 %v1036, %v1124
  %v1213 = vsub.f32 %v1037, %v1125
  %v1214 = vsub.f32 %v1038, %v1126
  %v1215 = vsub.f32 %v1039, %v1127
  %v1216 = vsub.f32 %v1040, %v1128
  %v1217 = vsub.f32 %v1041, %v1129
  %v1218 = vsub.f32 %v1042, %v1130
  %v1219 = vsub.f32 %v1043, %v1131
  %v1220 = vsub.f32 %v1044, %v1132
  %v1221 = vsub.f32 %v1045, %v1133
  %v1222 = vsub.f32 %v1046, %v1134
  %v1223 = vsub.f32 %v1047, %v1135
  %v1224 = vsub.f32 %v1048, %v1136
  %v1225 = vsub.f32 %v1049, %v1137
  %v1226 = vsub.f32 %v1050, %v1138
  %v1227 = vsub.f32 %v1051, %v1139
  %v1228 = vsub.f32 %v1052, %v1140
  %v1229 = vsub.f32 %v1053, %v1141
  %v1230 = vsub.f32 %v1054, %v1142
  %v1231 = vsub.f32 %v1055, %v1143
  %v1232 = vsub.f32 %v1056, %v1144
  %v1233 = vsub.f32 %v1057, %v1145
  %v1234 = vsub.f32 %v1058, %v1146
  %v1235 = vsub.f32 %v1059, %v1147
  %v1236 = vsub.f32 %v1060, %v1148
  %v1237 = vsub.f32 %v1061, %v1149
  %v1238 = vsub.f32 %v1062, %v1150
  %v1239 = vsub.f32 %v1063, %v1151
  %v1240 = vsub.f32 %v1064, %v1152
  %v1241 = vsub.f32 %v1065, %v1153
  %v1242 = vsub.f32 %v1066, %v1154
  %v1243 = vsub.f32 %v1067, %v1155
  %v1244 = vsub.f32 %v1068, %v1156
  %v1245 = vsub.f32 %v1069, %v1157
  %v1246 = vsub.f32 %v1070, %v1158
  %v1247 = vadd.f32 %v1159, 1e-05
  %v1248 = vadd.f32 %v1160, 1e-05
  %v1249 = vadd.f32 %v1161, 1e-05
  %v1250 = vadd.f32 %v1162, 1e-05
  %v1251 = vadd.f32 %v1163, 1e-05
  %v1252 = vadd.f32 %v1164, 1e-05
  %v1253 = vadd.f32 %v1165, 1e-05
  %v1254 = vadd.f32 %v1166, 1e-05
  %v1255 = vadd.f32 %v1167, 1e-05
  %v1256 = vadd.f32 %v1168, 1e-05
  %v1257 = vadd.f32 %v1169, 1e-05
  %v1258 = vadd.f32 %v1170, 1e-05
  %v1259 = vadd.f32 %v1171, 1e-05
  %v1260 = vadd.f32 %v1172, 1e-05
  %v1261 = vadd.f32 %v1173, 1e-05
  %v1262 = vadd.f32 %v1174, 1e-05
  %v1263 = vadd.f32 %v1175, 1e-05
  %v1264 = vadd.f32 %v1176, 1e-05
  %v1265 = vadd.f32 %v1177, 1e-05
  %v1266 = vadd.f32 %v1178, 1e-05
  %v1267 = vadd.f32 %v1179, 1e-05
  %v1268 = vadd.f32 %v1180, 1e-05
  %v1269 = vadd.f32 %v1181, 1e-05
  %v1270 = vadd.f32 %v1182, 1e-05
  %v1271 = vadd.f32 %v1183, 1e-05
  %v1272 = vadd.f32 %v1184, 1e-05
  %v1273 = vadd.f32 %v1185, 1e-05
  %v1274 = vadd.f32 %v1186, 1e-05
  %v1275 = vadd.f32 %v1187, 1e-05
  %v1276 = vadd.f32 %v1188, 1e-05
  %v1277 = vadd.f32 %v1189, 1e-05
  %v1278 = vadd.f32 %v1190, 1e-05
  %v1279 = vadd.f32 %v1191, 1e-05
  %v1280 = vadd.f32 %v1192, 1e-05
  %v1281 = vadd.f32 %v1193, 1e-05
  %v1282 = vadd.f32 %v1194, 1e-05
  %v1283 = vadd.f32 %v1195, 1e-05
  %v1284 = vadd.f32 %v1196, 1e-05
  %v1285 = vadd.f32 %v1197, 1e-05
  %v1286 = vadd.f32 %v1198, 1e-05
  %v1287 = vadd.f32 %v1199, 1e-05
  %v1288 = vadd.f32 %v1200, 1e-05
  %v1289 = vadd.f32 %v1201, 1e-05
  %v1290 = vadd.f32 %v1202, 1e-05
  %v1291 = vadd.f32 %v1203, 1e-05
  %v1292 = vadd.f32 %v1204, 1e-05
  %v1293 = vadd.f32 %v1205, 1e-05
  %v1294 = vadd.f32 %v1206, 1e-05
  %v1295 = vadd.f32 %v1207, 1e-05
  %v1296 = vadd.f32 %v1208, 1e-05
  %v1297 = vadd.f32 %v1209, 1e-05
  %v1298 = vadd.f32 %v1210, 1e-05
  %v1299 = vadd.f32 %v1211, 1e-05
  %v1300 = vadd.f32 %v1212, 1e-05
  %v1301 = vadd.f32 %v1213, 1e-05
  %v1302 = vadd.f32 %v1214, 1e-05
  %v1303 = vadd.f32 %v1215, 1e-05
  %v1304 = vadd.f32 %v1216, 1e-05
  %v1305 = vadd.f32 %v1217, 1e-05
  %v1306 = vadd.f32 %v1218, 1e-05
  %v1307 = vadd.f32 %v1219, 1e-05
  %v1308 = vadd.f32 %v1220, 1e-05
  %v1309 = vadd.f32 %v1221, 1e-05
  %v1310 = vadd.f32 %v1222, 1e-05
  %v1311 = vadd.f32 %v1223, 1e-05
  %v1312 = vadd.f32 %v1224, 1e-05
  %v1313 = vadd.f32 %v1225, 1e-05
  %v1314 = vadd.f32 %v1226, 1e-05
  %v1315 = vadd.f32 %v1227, 1e-05
  %v1316 = vadd.f32 %v1228, 1e-05
  %v1317 = vadd.f32 %v1229, 1e-05
  %v1318 = vadd.f32 %v1230, 1e-05
  %v1319 = vadd.f32 %v1231, 1e-05
  %v1320 = vadd.f32 %v1232, 1e-05
  %v1321 = vadd.f32 %v1233, 1e-05
  %v1322 = vadd.f32 %v1234, 1e-05
  %v1323 = vadd.f32 %v1235, 1e-05
  %v1324 = vadd.f32 %v1236, 1e-05
  %v1325 = vadd.f32 %v1237, 1e-05
  %v1326 = vadd.f32 %v1238, 1e-05
  %v1327 = vadd.f32 %v1239, 1e-05
  %v1328 = vadd.f32 %v1240, 1e-05
  %v1329 = vadd.f32 %v1241, 1e-05
  %v1330 = vadd.f32 %v1242, 1e-05
  %v1331 = vadd.f32 %v1243, 1e-05
  %v1332 = vadd.f32 %v1244, 1e-05
  %v1333 = vadd.f32 %v1245, 1e-05
  %v1334 = vadd.f32 %v1246, 1e-05
  %v1335 = vrsqrt.pop %v1247
  %v1336 = vmul.f32 %v1335, %v1247
  %v1337 = vmul.f32 %v1336, %v1335
  %v1338 = vmul.f32 0.5, %v1337
  %v1339 = vsub.f32 1.5, %v1338
  %v1340 = vmul.f32 %v1335, %v1339
  %vm1341 = vweird.f32 %v1247
  %vm1342 = vweird.f32 %v1335
  %vm1343 = vmor %vm1341, %vm1342
  %v1344 = vsel %vm1343, %v1335, %v1340
  %v1345 = vrsqrt.pop %v1248
  %v1346 = vmul.f32 %v1345, %v1248
  %v1347 = vmul.f32 %v1346, %v1345
  %v1348 = vmul.f32 0.5, %v1347
  %v1349 = vsub.f32 1.5, %v1348
  %v1350 = vmul.f32 %v1345, %v1349
  %vm1351 = vweird.f32 %v1248
  %vm1352 = vweird.f32 %v1345
  %vm1353 = vmor %vm1351, %vm1352
  %v1354 = vsel %vm1353, %v1345, %v1350
  %v1355 = vrsqrt.pop %v1249
  %v1356 = vmul.f32 %v1355, %v1249
  %v1357 = vmul.f32 %v1356, %v1355
  %v1358 = vmul.f32 0.5, %v1357
  %v1359 = vsub.f32 1.5, %v1358
  %v1360 = vmul.f32 %v1355, %v1359
  %vm1361 = vweird.f32 %v1249
  %vm1362 = vweird.f32 %v1355
  %vm1363 = vmor %vm1361, %vm1362
  %v1364 = vsel %vm1363, %v1355, %v1360
  %v1365 = vrsqrt.pop %v1250
  %v1366 = vmul.f32 %v1365, %v1250
  %v1367 = vmul.f32 %v1366, %v1365
  %v1368 = vmul.f32 0.5, %v1367
  %v1369 = vsub.f32 1.5, %v1368
  %v1370 = vmul.f32 %v1365, %v1369
  %vm1371 = vweird.f32 %v1250
  %vm1372 = vweird.f32 %v1365
  %vm1373 = vmor %vm1371, %vm1372
  %v1374 = vsel %vm1373, %v1365, %v1370
  %v1375 = vrsqrt.pop %v1251
  %v1376 = vmul.f32 %v1375, %v1251
  %v1377 = vmul.f32 %v1376, %v1375
  %v1378 = vmul.f32 0.5, %v1377
  %v1379 = vsub.f32 1.5, %v1378
  %v1380 = vmul.f32 %v1375, %v1379
  %vm1381 = vweird.f32 %v1251
  %vm1382 = vweird.f32 %v1375
  %vm1383 = vmor %vm1381, %vm1382
  %v1384 = vsel %vm1383, %v1375, %v1380
  %v1385 = vrsqrt.pop %v1252
  %v1386 = vmul.f32 %v1385, %v1252
  %v1387 = vmul.f32 %v1386, %v1385
  %v1388 = vmul.f32 0.5, %v1387
  %v1389 = vsub.f32 1.5, %v1388
  %v1390 = vmul.f32 %v1385, %v1389
  %vm1391 = vweird.f32 %v1252
  %vm1392 = vweird.f32 %v1385
  %vm1393 = vmor %vm1391, %vm1392
  %v1394 = vsel %vm1393, %v1385, %v1390
  %v1395 = vrsqrt.pop %v1253
  %v1396 = vmul.f32 %v1395, %v1253
  %v1397 = vmul.f32 %v1396, %v1395
  %v1398 = vmul.f32 0.5, %v1397
  %v1399 = vsub.f32 1.5, %v1398
  %v1400 = vmul.f32 %v1395, %v1399
  %vm1401 = vweird.f32 %v1253
  %vm1402 = vweird.f32 %v1395
  %vm1403 = vmor %vm1401, %vm1402
  %v1404 = vsel %vm1403, %v1395, %v1400
  %v1405 = vrsqrt.pop %v1254
  %v1406 = vmul.f32 %v1405, %v1254
  %v1407 = vmul.f32 %v1406, %v1405
  %v1408 = vmul.f32 0.5, %v1407
  %v1409 = vsub.f32 1.5, %v1408
  %v1410 = vmul.f32 %v1405, %v1409
  %vm1411 = vweird.f32 %v1254
  %vm1412 = vweird.f32 %v1405
  %vm1413 = vmor %vm1411, %vm1412
  %v1414 = vsel %vm1413, %v1405, %v1410
  %v1415 = vrsqrt.pop %v1255
  %v1416 = vmul.f32 %v1415, %v1255
  %v1417 = vmul.f32 %v1416, %v1415
  %v1418 = vmul.f32 0.5, %v1417
  %v1419 = vsub.f32 1.5, %v1418
  %v1420 = vmul.f32 %v1415, %v1419
  %vm1421 = vweird.f32 %v1255
  %vm1422 = vweird.f32 %v1415
  %vm1423 = vmor %vm1421, %vm1422
  %v1424 = vsel %vm1423, %v1415, %v1420
  %v1425 = vrsqrt.pop %v1256
  %v1426 = vmul.f32 %v1425, %v1256
  %v1427 = vmul.f32 %v1426, %v1425
  %v1428 = vmul.f32 0.5, %v1427
  %v1429 = vsub.f32 1.5, %v1428
  %v1430 = vmul.f32 %v1425, %v1429
  %vm1431 = vweird.f32 %v1256
  %vm1432 = vweird.f32 %v1425
  %vm1433 = vmor %vm1431, %vm1432
  %v1434 = vsel %vm1433, %v1425, %v1430
  %v1435 = vrsqrt.pop %v1257
  %v1436 = vmul.f32 %v1435, %v1257
  %v1437 = vmul.f32 %v1436, %v1435
  %v1438 = vmul.f32 0.5, %v1437
  %v1439 = vsub.f32 1.5, %v1438
  %v1440 = vmul.f32 %v1435, %v1439
  %vm1441 = vweird.f32 %v1257
  %vm1442 = vweird.f32 %v1435
  %vm1443 = vmor %vm1441, %vm1442
  %v1444 = vsel %vm1443, %v1435, %v1440
  %v1445 = vrsqrt.pop %v1258
  %v1446 = vmul.f32 %v1445, %v1258
  %v1447 = vmul.f32 %v1446, %v1445
  %v1448 = vmul.f32 0.5, %v1447
  %v1449 = vsub.f32 1.5, %v1448
  %v1450 = vmul.f32 %v1445, %v1449
  %vm1451 = vweird.f32 %v1258
  %vm1452 = vweird.f32 %v1445
  %vm1453 = vmor %vm1451, %vm1452
  %v1454 = vsel %vm1453, %v1445, %v1450
  %v1455 = vrsqrt.pop %v1259
  %v1456 = vmul.f32 %v1455, %v1259
  %v1457 = vmul.f32 %v1456, %v1455
  %v1458 = vmul.f32 0.5, %v1457
  %v1459 = vsub.f32 1.5, %v1458
  %v1460 = vmul.f32 %v1455, %v1459
  %vm1461 = vweird.f32 %v1259
  %vm1462 = vweird.f32 %v1455
  %vm1463 = vmor %vm1461, %vm1462
  %v1464 = vsel %vm1463, %v1455, %v1460
  %v1465 = vrsqrt.pop %v1260
  %v1466 = vmul.f32 %v1465, %v1260
  %v1467 = vmul.f32 %v1466, %v1465
  %v1468 = vmul.f32 0.5, %v1467
  %v1469 = vsub.f32 1.5, %v1468
  %v1470 = vmul.f32 %v1465, %v1469
  %vm1471 = vweird.f32 %v1260
  %vm1472 = vweird.f32 %v1465
  %vm1473 = vmor %vm1471, %vm1472
  %v1474 = vsel %vm1473, %v1465, %v1470
  %v1475 = vrsqrt.pop %v1261
  %v1476 = vmul.f32 %v1475, %v1261
  %v1477 = vmul.f32 %v1476, %v1475
  %v1478 = vmul.f32 0.5, %v1477
  %v1479 = vsub.f32 1.5, %v1478
  %v1480 = vmul.f32 %v1475, %v1479
  %vm1481 = vweird.f32 %v1261
  %vm1482 = vweird.f32 %v1475
  %vm1483 = vmor %vm1481, %vm1482
  %v1484 = vsel %vm1483, %v1475, %v1480
  %v1485 = vrsqrt.pop %v1262
  %v1486 = vmul.f32 %v1485, %v1262
  %v1487 = vmul.f32 %v1486, %v1485
  %v1488 = vmul.f32 0.5, %v1487
  %v1489 = vsub.f32 1.5, %v1488
  %v1490 = vmul.f32 %v1485, %v1489
  %vm1491 = vweird.f32 %v1262
  %vm1492 = vweird.f32 %v1485
  %vm1493 = vmor %vm1491, %vm1492
  %v1494 = vsel %vm1493, %v1485, %v1490
  %v1495 = vrsqrt.pop %v1263
  %v1496 = vmul.f32 %v1495, %v1263
  %v1497 = vmul.f32 %v1496, %v1495
  %v1498 = vmul.f32 0.5, %v1497
  %v1499 = vsub.f32 1.5, %v1498
  %v1500 = vmul.f32 %v1495, %v1499
  %vm1501 = vweird.f32 %v1263
  %vm1502 = vweird.f32 %v1495
  %vm1503 = vmor %vm1501, %vm1502
  %v1504 = vsel %vm1503, %v1495, %v1500
  %v1505 = vrsqrt.pop %v1264
  %v1506 = vmul.f32 %v1505, %v1264
  %v1507 = vmul.f32 %v1506, %v1505
  %v1508 = vmul.f32 0.5, %v1507
  %v1509 = vsub.f32 1.5, %v1508
  %v1510 = vmul.f32 %v1505, %v1509
  %vm1511 = vweird.f32 %v1264
  %vm1512 = vweird.f32 %v1505
  %vm1513 = vmor %vm1511, %vm1512
  %v1514 = vsel %vm1513, %v1505, %v1510
  %v1515 = vrsqrt.pop %v1265
  %v1516 = vmul.f32 %v1515, %v1265
  %v1517 = vmul.f32 %v1516, %v1515
  %v1518 = vmul.f32 0.5, %v1517
  %v1519 = vsub.f32 1.5, %v1518
  %v1520 = vmul.f32 %v1515, %v1519
  %vm1521 = vweird.f32 %v1265
  %vm1522 = vweird.f32 %v1515
  %vm1523 = vmor %vm1521, %vm1522
  %v1524 = vsel %vm1523, %v1515, %v1520
  %v1525 = vrsqrt.pop %v1266
  %v1526 = vmul.f32 %v1525, %v1266
  %v1527 = vmul.f32 %v1526, %v1525
  %v1528 = vmul.f32 0.5, %v1527
  %v1529 = vsub.f32 1.5, %v1528
  %v1530 = vmul.f32 %v1525, %v1529
  %vm1531 = vweird.f32 %v1266
  %vm1532 = vweird.f32 %v1525
  %vm1533 = vmor %vm1531, %vm1532
  %v1534 = vsel %vm1533, %v1525, %v1530
  %v1535 = vrsqrt.pop %v1267
  %v1536 = vmul.f32 %v1535, %v1267
  %v1537 = vmul.f32 %v1536, %v1535
  %v1538 = vmul.f32 0.5, %v1537
  %v1539 = vsub.f32 1.5, %v1538
  %v1540 = vmul.f32 %v1535, %v1539
  %vm1541 = vweird.f32 %v1267
  %vm1542 = vweird.f32 %v1535
  %vm1543 = vmor %vm1541, %vm1542
  %v1544 = vsel %vm1543, %v1535, %v1540
  %v1545 = vrsqrt.pop %v1268
  %v1546 = vmul.f32 %v1545, %v1268
  %v1547 = vmul.f32 %v1546, %v1545
  %v1548 = vmul.f32 0.5, %v1547
  %v1549 = vsub.f32 1.5, %v1548
  %v1550 = vmul.f32 %v1545, %v1549
  %vm1551 = vweird.f32 %v1268
  %vm1552 = vweird.f32 %v1545
  %vm1553 = vmor %vm1551, %vm1552
  %v1554 = vsel %vm1553, %v1545, %v1550
  %v1555 = vrsqrt.pop %v1269
  %v1556 = vmul.f32 %v1555, %v1269
  %v1557 = vmul.f32 %v1556, %v1555
  %v1558 = vmul.f32 0.5, %v1557
  %v1559 = vsub.f32 1.5, %v1558
  %v1560 = vmul.f32 %v1555, %v1559
  %vm1561 = vweird.f32 %v1269
  %vm1562 = vweird.f32 %v1555
  %vm1563 = vmor %vm1561, %vm1562
  %v1564 = vsel %vm1563, %v1555, %v1560
  %v1565 = vrsqrt.pop %v1270
  %v1566 = vmul.f32 %v1565, %v1270
  %v1567 = vmul.f32 %v1566, %v1565
  %v1568 = vmul.f32 0.5, %v1567
  %v1569 = vsub.f32 1.5, %v1568
  %v1570 = vmul.f32 %v1565, %v1569
  %vm1571 = vweird.f32 %v1270
  %vm1572 = vweird.f32 %v1565
  %vm1573 = vmor %vm1571, %vm1572
  %v1574 = vsel %vm1573, %v1565, %v1570
  %v1575 = vrsqrt.pop %v1271
  %v1576 = vmul.f32 %v1575, %v1271
  %v1577 = vmul.f32 %v1576, %v1575
  %v1578 = vmul.f32 0.5, %v1577
  %v1579 = vsub.f32 1.5, %v1578
  %v1580 = vmul.f32 %v1575, %v1579
  %vm1581 = vweird.f32 %v1271
  %vm1582 = vweird.f32 %v1575
  %vm1583 = vmor %vm1581, %vm1582
  %v1584 = vsel %vm1583, %v1575, %v1580
  %v1585 = vrsqrt.pop %v1272
  %v1586 = vmul.f32 %v1585, %v1272
  %v1587 = vmul.f32 %v1586, %v1585
  %v1588 = vmul.f32 0.5, %v1587
  %v1589 = vsub.f32 1.5, %v1588
  %v1590 = vmul.f32 %v1585, %v1589
  %vm1591 = vweird.f32 %v1272
  %vm1592 = vweird.f32 %v1585
  %vm1593 = vmor %vm1591, %vm1592
  %v1594 = vsel %vm1593, %v1585, %v1590
  %v1595 = vrsqrt.pop %v1273
  %v1596 = vmul.f32 %v1595, %v1273
  %v1597 = vmul.f32 %v1596, %v1595
  %v1598 = vmul.f32 0.5, %v1597
  %v1599 = vsub.f32 1.5, %v1598
  %v1600 = vmul.f32 %v1595, %v1599
  %vm1601 = vweird.f32 %v1273
  %vm1602 = vweird.f32 %v1595
  %vm1603 = vmor %vm1601, %vm1602
  %v1604 = vsel %vm1603, %v1595, %v1600
  %v1605 = vrsqrt.pop %v1274
  %v1606 = vmul.f32 %v1605, %v1274
  %v1607 = vmul.f32 %v1606, %v1605
  %v1608 = vmul.f32 0.5, %v1607
  %v1609 = vsub.f32 1.5, %v1608
  %v1610 = vmul.f32 %v1605, %v1609
  %vm1611 = vweird.f32 %v1274
  %vm1612 = vweird.f32 %v1605
  %vm1613 = vmor %vm1611, %vm1612
  %v1614 = vsel %vm1613, %v1605, %v1610
  %v1615 = vrsqrt.pop %v1275
  %v1616 = vmul.f32 %v1615, %v1275
  %v1617 = vmul.f32 %v1616, %v1615
  %v1618 = vmul.f32 0.5, %v1617
  %v1619 = vsub.f32 1.5, %v1618
  %v1620 = vmul.f32 %v1615, %v1619
  %vm1621 = vweird.f32 %v1275
  %vm1622 = vweird.f32 %v1615
  %vm1623 = vmor %vm1621, %vm1622
  %v1624 = vsel %vm1623, %v1615, %v1620
  %v1625 = vrsqrt.pop %v1276
  %v1626 = vmul.f32 %v1625, %v1276
  %v1627 = vmul.f32 %v1626, %v1625
  %v1628 = vmul.f32 0.5, %v1627
  %v1629 = vsub.f32 1.5, %v1628
  %v1630 = vmul.f32 %v1625, %v1629
  %vm1631 = vweird.f32 %v1276
  %vm1632 = vweird.f32 %v1625
  %vm1633 = vmor %vm1631, %vm1632
  %v1634 = vsel %vm1633, %v1625, %v1630
  %v1635 = vrsqrt.pop %v1277
  %v1636 = vmul.f32 %v1635, %v1277
  %v1637 = vmul.f32 %v1636, %v1635
  %v1638 = vmul.f32 0.5, %v1637
  %v1639 = vsub.f32 1.5, %v1638
  %v1640 = vmul.f32 %v1635, %v1639
  %vm1641 = vweird.f32 %v1277
  %vm1642 = vweird.f32 %v1635
  %vm1643 = vmor %vm1641, %vm1642
  %v1644 = vsel %vm1643, %v1635, %v1640
  %v1645 = vrsqrt.pop %v1278
  %v1646 = vmul.f32 %v1645, %v1278
  %v1647 = vmul.f32 %v1646, %v1645
  %v1648 = vmul.f32 0.5, %v1647
  %v1649 = vsub.f32 1.5, %v1648
  %v1650 = vmul.f32 %v1645, %v1649
  %vm1651 = vweird.f32 %v1278
  %vm1652 = vweird.f32 %v1645
  %vm1653 = vmor %vm1651, %vm1652
  %v1654 = vsel %vm1653, %v1645, %v1650
  %v1655 = vrsqrt.pop %v1279
  %v1656 = vmul.f32 %v1655, %v1279
  %v1657 = vmul.f32 %v1656, %v1655
  %v1658 = vmul.f32 0.5, %v1657
  %v1659 = vsub.f32 1.5, %v1658
  %v1660 = vmul.f32 %v1655, %v1659
  %vm1661 = vweird.f32 %v1279
  %vm1662 = vweird.f32 %v1655
  %vm1663 = vmor %vm1661, %vm1662
  %v1664 = vsel %vm1663, %v1655, %v1660
  %v1665 = vrsqrt.pop %v1280
  %v1666 = vmul.f32 %v1665, %v1280
  %v1667 = vmul.f32 %v1666, %v1665
  %v1668 = vmul.f32 0.5, %v1667
  %v1669 = vsub.f32 1.5, %v1668
  %v1670 = vmul.f32 %v1665, %v1669
  %vm1671 = vweird.f32 %v1280
  %vm1672 = vweird.f32 %v1665
  %vm1673 = vmor %vm1671, %vm1672
  %v1674 = vsel %vm1673, %v1665, %v1670
  %v1675 = vrsqrt.pop %v1281
  %v1676 = vmul.f32 %v1675, %v1281
  %v1677 = vmul.f32 %v1676, %v1675
  %v1678 = vmul.f32 0.5, %v1677
  %v1679 = vsub.f32 1.5, %v1678
  %v1680 = vmul.f32 %v1675, %v1679
  %vm1681 = vweird.f32 %v1281
  %vm1682 = vweird.f32 %v1675
  %vm1683 = vmor %vm1681, %vm1682
  %v1684 = vsel %vm1683, %v1675, %v1680
  %v1685 = vrsqrt.pop %v1282
  %v1686 = vmul.f32 %v1685, %v1282
  %v1687 = vmul.f32 %v1686, %v1685
  %v1688 = vmul.f32 0.5, %v1687
  %v1689 = vsub.f32 1.5, %v1688
  %v1690 = vmul.f32 %v1685, %v1689
  %vm1691 = vweird.f32 %v1282
  %vm1692 = vweird.f32 %v1685
  %vm1693 = vmor %vm1691, %vm1692
  %v1694 = vsel %vm1693, %v1685, %v1690
  %v1695 = vrsqrt.pop %v1283
  %v1696 = vmul.f32 %v1695, %v1283
  %v1697 = vmul.f32 %v1696, %v1695
  %v1698 = vmul.f32 0.5, %v1697
  %v1699 = vsub.f32 1.5, %v1698
  %v1700 = vmul.f32 %v1695, %v1699
  %vm1701 = vweird.f32 %v1283
  %vm1702 = vweird.f32 %v1695
  %vm1703 = vmor %vm1701, %vm1702
  %v1704 = vsel %vm1703, %v1695, %v1700
  %v1705 = vrsqrt.pop %v1284
  %v1706 = vmul.f32 %v1705, %v1284
  %v1707 = vmul.f32 %v1706, %v1705
  %v1708 = vmul.f32 0.5, %v1707
  %v1709 = vsub.f32 1.5, %v1708
  %v1710 = vmul.f32 %v1705, %v1709
  %vm1711 = vweird.f32 %v1284
  %vm1712 = vweird.f32 %v1705
  %vm1713 = vmor %vm1711, %vm1712
  %v1714 = vsel %vm1713, %v1705, %v1710
  %v1715 = vrsqrt.pop %v1285
  %v1716 = vmul.f32 %v1715, %v1285
  %v1717 = vmul.f32 %v1716, %v1715
  %v1718 = vmul.f32 0.5, %v1717
  %v1719 = vsub.f32 1.5, %v1718
  %v1720 = vmul.f32 %v1715, %v1719
  %vm1721 = vweird.f32 %v1285
  %vm1722 = vweird.f32 %v1715
  %vm1723 = vmor %vm1721, %vm1722
  %v1724 = vsel %vm1723, %v1715, %v1720
  %v1725 = vrsqrt.pop %v1286
  %v1726 = vmul.f32 %v1725, %v1286
  %v1727 = vmul.f32 %v1726, %v1725
  %v1728 = vmul.f32 0.5, %v1727
  %v1729 = vsub.f32 1.5, %v1728
  %v1730 = vmul.f32 %v1725, %v1729
  %vm1731 = vweird.f32 %v1286
  %vm1732 = vweird.f32 %v1725
  %vm1733 = vmor %vm1731, %vm1732
  %v1734 = vsel %vm1733, %v1725, %v1730
  %v1735 = vrsqrt.pop %v1287
  %v1736 = vmul.f32 %v1735, %v1287
  %v1737 = vmul.f32 %v1736, %v1735
  %v1738 = vmul.f32 0.5, %v1737
  %v1739 = vsub.f32 1.5, %v1738
  %v1740 = vmul.f32 %v1735, %v1739
  %vm1741 = vweird.f32 %v1287
  %vm1742 = vweird.f32 %v1735
  %vm1743 = vmor %vm1741, %vm1742
  %v1744 = vsel %vm1743, %v1735, %v1740
  %v1745 = vrsqrt.pop %v1288
  %v1746 = vmul.f32 %v1745, %v1288
  %v1747 = vmul.f32 %v1746, %v1745
  %v1748 = vmul.f32 0.5, %v1747
  %v1749 = vsub.f32 1.5, %v1748
  %v1750 = vmul.f32 %v1745, %v1749
  %vm1751 = vweird.f32 %v1288
  %vm1752 = vweird.f32 %v1745
  %vm1753 = vmor %vm1751, %vm1752
  %v1754 = vsel %vm1753, %v1745, %v1750
  %v1755 = vrsqrt.pop %v1289
  %v1756 = vmul.f32 %v1755, %v1289
  %v1757 = vmul.f32 %v1756, %v1755
  %v1758 = vmul.f32 0.5, %v1757
  %v1759 = vsub.f32 1.5, %v1758
  %v1760 = vmul.f32 %v1755, %v1759
  %vm1761 = vweird.f32 %v1289
  %vm1762 = vweird.f32 %v1755
  %vm1763 = vmor %vm1761, %vm1762
  %v1764 = vsel %vm1763, %v1755, %v1760
  %v1765 = vrsqrt.pop %v1290
  %v1766 = vmul.f32 %v1765, %v1290
  %v1767 = vmul.f32 %v1766, %v1765
  %v1768 = vmul.f32 0.5, %v1767
  %v1769 = vsub.f32 1.5, %v1768
  %v1770 = vmul.f32 %v1765, %v1769
  %vm1771 = vweird.f32 %v1290
  %vm1772 = vweird.f32 %v1765
  %vm1773 = vmor %vm1771, %vm1772
  %v1774 = vsel %vm1773, %v1765, %v1770
  %v1775 = vrsqrt.pop %v1291
  %v1776 = vmul.f32 %v1775, %v1291
  %v1777 = vmul.f32 %v1776, %v1775
  %v1778 = vmul.f32 0.5, %v1777
  %v1779 = vsub.f32 1.5, %v1778
  %v1780 = vmul.f32 %v1775, %v1779
  %vm1781 = vweird.f32 %v1291
  %vm1782 = vweird.f32 %v1775
  %vm1783 = vmor %vm1781, %vm1782
  %v1784 = vsel %vm1783, %v1775, %v1780
  %v1785 = vrsqrt.pop %v1292
  %v1786 = vmul.f32 %v1785, %v1292
  %v1787 = vmul.f32 %v1786, %v1785
  %v1788 = vmul.f32 0.5, %v1787
  %v1789 = vsub.f32 1.5, %v1788
  %v1790 = vmul.f32 %v1785, %v1789
  %vm1791 = vweird.f32 %v1292
  %vm1792 = vweird.f32 %v1785
  %vm1793 = vmor %vm1791, %vm1792
  %v1794 = vsel %vm1793, %v1785, %v1790
  %v1795 = vrsqrt.pop %v1293
  %v1796 = vmul.f32 %v1795, %v1293
  %v1797 = vmul.f32 %v1796, %v1795
  %v1798 = vmul.f32 0.5, %v1797
  %v1799 = vsub.f32 1.5, %v1798
  %v1800 = vmul.f32 %v1795, %v1799
  %vm1801 = vweird.f32 %v1293
  %vm1802 = vweird.f32 %v1795
  %vm1803 = vmor %vm1801, %vm1802
  %v1804 = vsel %vm1803, %v1795, %v1800
  %v1805 = vrsqrt.pop %v1294
  %v1806 = vmul.f32 %v1805, %v1294
  %v1807 = vmul.f32 %v1806, %v1805
  %v1808 = vmul.f32 0.5, %v1807
  %v1809 = vsub.f32 1.5, %v1808
  %v1810 = vmul.f32 %v1805, %v1809
  %vm1811 = vweird.f32 %v1294
  %vm1812 = vweird.f32 %v1805
  %vm1813 = vmor %vm1811, %vm1812
  %v1814 = vsel %vm1813, %v1805, %v1810
  %v1815 = vrsqrt.pop %v1295
  %v1816 = vmul.f32 %v1815, %v1295
  %v1817 = vmul.f32 %v1816, %v1815
  %v1818 = vmul.f32 0.5, %v1817
  %v1819 = vsub.f32 1.5, %v1818
  %v1820 = vmul.f32 %v1815, %v1819
  %vm1821 = vweird.f32 %v1295
  %vm1822 = vweird.f32 %v1815
  %vm1823 = vmor %vm1821, %vm1822
  %v1824 = vsel %vm1823, %v1815, %v1820
  %v1825 = vrsqrt.pop %v1296
  %v1826 = vmul.f32 %v1825, %v1296
  %v1827 = vmul.f32 %v1826, %v1825
  %v1828 = vmul.f32 0.5, %v1827
  %v1829 = vsub.f32 1.5, %v1828
  %v1830 = vmul.f32 %v1825, %v1829
  %vm1831 = vweird.f32 %v1296
  %vm1832 = vweird.f32 %v1825
  %vm1833 = vmor %vm1831, %vm1832
  %v1834 = vsel %vm1833, %v1825, %v1830
  %v1835 = vrsqrt.pop %v1297
  %v1836 = vmul.f32 %v1835, %v1297
  %v1837 = vmul.f32 %v1836, %v1835
  %v1838 = vmul.f32 0.5, %v1837
  %v1839 = vsub.f32 1.5, %v1838
  %v1840 = vmul.f32 %v1835, %v1839
  %vm1841 = vweird.f32 %v1297
  %vm1842 = vweird.f32 %v1835
  %vm1843 = vmor %vm1841, %vm1842
  %v1844 = vsel %vm1843, %v1835, %v1840
  %v1845 = vrsqrt.pop %v1298
  %v1846 = vmul.f32 %v1845, %v1298
  %v1847 = vmul.f32 %v1846, %v1845
  %v1848 = vmul.f32 0.5, %v1847
  %v1849 = vsub.f32 1.5, %v1848
  %v1850 = vmul.f32 %v1845, %v1849
  %vm1851 = vweird.f32 %v1298
  %vm1852 = vweird.f32 %v1845
  %vm1853 = vmor %vm1851, %vm1852
  %v1854 = vsel %vm1853, %v1845, %v1850
  %v1855 = vrsqrt.pop %v1299
  %v1856 = vmul.f32 %v1855, %v1299
  %v1857 = vmul.f32 %v1856, %v1855
  %v1858 = vmul.f32 0.5, %v1857
  %v1859 = vsub.f32 1.5, %v1858
  %v1860 = vmul.f32 %v1855, %v1859
  %vm1861 = vweird.f32 %v1299
  %vm1862 = vweird.f32 %v1855
  %vm1863 = vmor %vm1861, %vm1862
  %v1864 = vsel %vm1863, %v1855, %v1860
  %v1865 = vrsqrt.pop %v1300
  %v1866 = vmul.f32 %v1865, %v1300
  %v1867 = vmul.f32 %v1866, %v1865
  %v1868 = vmul.f32 0.5, %v1867
  %v1869 = vsub.f32 1.5, %v1868
  %v1870 = vmul.f32 %v1865, %v1869
  %vm1871 = vweird.f32 %v1300
  %vm1872 = vweird.f32 %v1865
  %vm1873 = vmor %vm1871, %vm1872
  %v1874 = vsel %vm1873, %v1865, %v1870
  %v1875 = vrsqrt.pop %v1301
  %v1876 = vmul.f32 %v1875, %v1301
  %v1877 = vmul.f32 %v1876, %v1875
  %v1878 = vmul.f32 0.5, %v1877
  %v1879 = vsub.f32 1.5, %v1878
  %v1880 = vmul.f32 %v1875, %v1879
  %vm1881 = vweird.f32 %v1301
  %vm1882 = vweird.f32 %v1875
  %vm1883 = vmor %vm1881, %vm1882
  %v1884 = vsel %vm1883, %v1875, %v1880
  %v1885 = vrsqrt.pop %v1302
  %v1886 = vmul.f32 %v1885, %v1302
  %v1887 = vmul.f32 %v1886, %v1885
  %v1888 = vmul.f32 0.5, %v1887
  %v1889 = vsub.f32 1.5, %v1888
  %v1890 = vmul.f32 %v1885, %v1889
  %vm1891 = vweird.f32 %v1302
  %vm1892 = vweird.f32 %v1885
  %vm1893 = vmor %vm1891, %vm1892
  %v1894 = vsel %vm1893, %v1885, %v1890
  %v1895 = vrsqrt.pop %v1303
  %v1896 = vmul.f32 %v1895, %v1303
  %v1897 = vmul.f32 %v1896, %v1895
  %v1898 = vmul.f32 0.5, %v1897
  %v1899 = vsub.f32 1.5, %v1898
  %v1900 = vmul.f32 %v1895, %v1899
  %vm1901 = vweird.f32 %v1303
  %vm1902 = vweird.f32 %v1895
  %vm1903 = vmor %vm1901, %vm1902
  %v1904 = vsel %vm1903, %v1895, %v1900
  %v1905 = vrsqrt.pop %v1304
  %v1906 = vmul.f32 %v1905, %v1304
  %v1907 = vmul.f32 %v1906, %v1905
  %v1908 = vmul.f32 0.5, %v1907
  %v1909 = vsub.f32 1.5, %v1908
  %v1910 = vmul.f32 %v1905, %v1909
  %vm1911 = vweird.f32 %v1304
  %vm1912 = vweird.f32 %v1905
  %vm1913 = vmor %vm1911, %vm1912
  %v1914 = vsel %vm1913, %v1905, %v1910
  %v1915 = vrsqrt.pop %v1305
  %v1916 = vmul.f32 %v1915, %v1305
  %v1917 = vmul.f32 %v1916, %v1915
  %v1918 = vmul.f32 0.5, %v1917
  %v1919 = vsub.f32 1.5, %v1918
  %v1920 = vmul.f32 %v1915, %v1919
  %vm1921 = vweird.f32 %v1305
  %vm1922 = vweird.f32 %v1915
  %vm1923 = vmor %vm1921, %vm1922
  %v1924 = vsel %vm1923, %v1915, %v1920
  %v1925 = vrsqrt.pop %v1306
  %v1926 = vmul.f32 %v1925, %v1306
  %v1927 = vmul.f32 %v1926, %v1925
  %v1928 = vmul.f32 0.5, %v1927
  %v1929 = vsub.f32 1.5, %v1928
  %v1930 = vmul.f32 %v1925, %v1929
  %vm1931 = vweird.f32 %v1306
  %vm1932 = vweird.f32 %v1925
  %vm1933 = vmor %vm1931, %vm1932
  %v1934 = vsel %vm1933, %v1925, %v1930
  %v1935 = vrsqrt.pop %v1307
  %v1936 = vmul.f32 %v1935, %v1307
  %v1937 = vmul.f32 %v1936, %v1935
  %v1938 = vmul.f32 0.5, %v1937
  %v1939 = vsub.f32 1.5, %v1938
  %v1940 = vmul.f32 %v1935, %v1939
  %vm1941 = vweird.f32 %v1307
  %vm1942 = vweird.f32 %v1935
  %vm1943 = vmor %vm1941, %vm1942
  %v1944 = vsel %vm1943, %v1935, %v1940
  %v1945 = vrsqrt.pop %v1308
  %v1946 = vmul.f32 %v1945, %v1308
  %v1947 = vmul.f32 %v1946, %v1945
  %v1948 = vmul.f32 0.5, %v1947
  %v1949 = vsub.f32 1.5, %v1948
  %v1950 = vmul.f32 %v1945, %v1949
  %vm1951 = vweird.f32 %v1308
  %vm1952 = vweird.f32 %v1945
  %vm1953 = vmor %vm1951, %vm1952
  %v1954 = vsel %vm1953, %v1945, %v1950
  %v1955 = vrsqrt.pop %v1309
  %v1956 = vmul.f32 %v1955, %v1309
  %v1957 = vmul.f32 %v1956, %v1955
  %v1958 = vmul.f32 0.5, %v1957
  %v1959 = vsub.f32 1.5, %v1958
  %v1960 = vmul.f32 %v1955, %v1959
  %vm1961 = vweird.f32 %v1309
  %vm1962 = vweird.f32 %v1955
  %vm1963 = vmor %vm1961, %vm1962
  %v1964 = vsel %vm1963, %v1955, %v1960
  %v1965 = vrsqrt.pop %v1310
  %v1966 = vmul.f32 %v1965, %v1310
  %v1967 = vmul.f32 %v1966, %v1965
  %v1968 = vmul.f32 0.5, %v1967
  %v1969 = vsub.f32 1.5, %v1968
  %v1970 = vmul.f32 %v1965, %v1969
  %vm1971 = vweird.f32 %v1310
  %vm1972 = vweird.f32 %v1965
  %vm1973 = vmor %vm1971, %vm1972
  %v1974 = vsel %vm1973, %v1965, %v1970
  %v1975 = vrsqrt.pop %v1311
  %v1976 = vmul.f32 %v1975, %v1311
  %v1977 = vmul.f32 %v1976, %v1975
  %v1978 = vmul.f32 0.5, %v1977
  %v1979 = vsub.f32 1.5, %v1978
  %v1980 = vmul.f32 %v1975, %v1979
  %vm1981 = vweird.f32 %v1311
  %vm1982 = vweird.f32 %v1975
  %vm1983 = vmor %vm1981, %vm1982
  %v1984 = vsel %vm1983, %v1975, %v1980
  %v1985 = vrsqrt.pop %v1312
  %v1986 = vmul.f32 %v1985, %v1312
  %v1987 = vmul.f32 %v1986, %v1985
  %v1988 = vmul.f32 0.5, %v1987
  %v1989 = vsub.f32 1.5, %v1988
  %v1990 = vmul.f32 %v1985, %v1989
  %vm1991 = vweird.f32 %v1312
  %vm1992 = vweird.f32 %v1985
  %vm1993 = vmor %vm1991, %vm1992
  %v1994 = vsel %vm1993, %v1985, %v1990
  %v1995 = vrsqrt.pop %v1313
  %v1996 = vmul.f32 %v1995, %v1313
  %v1997 = vmul.f32 %v1996, %v1995
  %v1998 = vmul.f32 0.5, %v1997
  %v1999 = vsub.f32 1.5, %v1998
  %v2000 = vmul.f32 %v1995, %v1999
  %vm2001 = vweird.f32 %v1313
  %vm2002 = vweird.f32 %v1995
  %vm2003 = vmor %vm2001, %vm2002
  %v2004 = vsel %vm2003, %v1995, %v2000
  %v2005 = vrsqrt.pop %v1314
  %v2006 = vmul.f32 %v2005, %v1314
  %v2007 = vmul.f32 %v2006, %v2005
  %v2008 = vmul.f32 0.5, %v2007
  %v2009 = vsub.f32 1.5, %v2008
  %v2010 = vmul.f32 %v2005, %v2009
  %vm2011 = vweird.f32 %v1314
  %vm2012 = vweird.f32 %v2005
  %vm2013 = vmor %vm2011, %vm2012
  %v2014 = vsel %vm2013, %v2005, %v2010
  %v2015 = vrsqrt.pop %v1315
  %v2016 = vmul.f32 %v2015, %v1315
  %v2017 = vmul.f32 %v2016, %v2015
  %v2018 = vmul.f32 0.5, %v2017
  %v2019 = vsub.f32 1.5, %v2018
  %v2020 = vmul.f32 %v2015, %v2019
  %vm2021 = vweird.f32 %v1315
  %vm2022 = vweird.f32 %v2015
  %vm2023 = vmor %vm2021, %vm2022
  %v2024 = vsel %vm2023, %v2015, %v2020
  %v2025 = vrsqrt.pop %v1316
  %v2026 = vmul.f32 %v2025, %v1316
  %v2027 = vmul.f32 %v2026, %v2025
  %v2028 = vmul.f32 0.5, %v2027
  %v2029 = vsub.f32 1.5, %v2028
  %v2030 = vmul.f32 %v2025, %v2029
  %vm2031 = vweird.f32 %v1316
  %vm2032 = vweird.f32 %v2025
  %vm2033 = vmor %vm2031, %vm2032
  %v2034 = vsel %vm2033, %v2025, %v2030
  %v2035 = vrsqrt.pop %v1317
  %v2036 = vmul.f32 %v2035, %v1317
  %v2037 = vmul.f32 %v2036, %v2035
  %v2038 = vmul.f32 0.5, %v2037
  %v2039 = vsub.f32 1.5, %v2038
  %v2040 = vmul.f32 %v2035, %v2039
  %vm2041 = vweird.f32 %v1317
  %vm2042 = vweird.f32 %v2035
  %vm2043 = vmor %vm2041, %vm2042
  %v2044 = vsel %vm2043, %v2035, %v2040
  %v2045 = vrsqrt.pop %v1318
  %v2046 = vmul.f32 %v2045, %v1318
  %v2047 = vmul.f32 %v2046, %v2045
  %v2048 = vmul.f32 0.5, %v2047
  %v2049 = vsub.f32 1.5, %v2048
  %v2050 = vmul.f32 %v2045, %v2049
  %vm2051 = vweird.f32 %v1318
  %vm2052 = vweird.f32 %v2045
  %vm2053 = vmor %vm2051, %vm2052
  %v2054 = vsel %vm2053, %v2045, %v2050
  %v2055 = vrsqrt.pop %v1319
  %v2056 = vmul.f32 %v2055, %v1319
  %v2057 = vmul.f32 %v2056, %v2055
  %v2058 = vmul.f32 0.5, %v2057
  %v2059 = vsub.f32 1.5, %v2058
  %v2060 = vmul.f32 %v2055, %v2059
  %vm2061 = vweird.f32 %v1319
  %vm2062 = vweird.f32 %v2055
  %vm2063 = vmor %vm2061, %vm2062
  %v2064 = vsel %vm2063, %v2055, %v2060
  %v2065 = vrsqrt.pop %v1320
  %v2066 = vmul.f32 %v2065, %v1320
  %v2067 = vmul.f32 %v2066, %v2065
  %v2068 = vmul.f32 0.5, %v2067
  %v2069 = vsub.f32 1.5, %v2068
  %v2070 = vmul.f32 %v2065, %v2069
  %vm2071 = vweird.f32 %v1320
  %vm2072 = vweird.f32 %v2065
  %vm2073 = vmor %vm2071, %vm2072
  %v2074 = vsel %vm2073, %v2065, %v2070
  %v2075 = vrsqrt.pop %v1321
  %v2076 = vmul.f32 %v2075, %v1321
  %v2077 = vmul.f32 %v2076, %v2075
  %v2078 = vmul.f32 0.5, %v2077
  %v2079 = vsub.f32 1.5, %v2078
  %v2080 = vmul.f32 %v2075, %v2079
  %vm2081 = vweird.f32 %v1321
  %vm2082 = vweird.f32 %v2075
  %vm2083 = vmor %vm2081, %vm2082
  %v2084 = vsel %vm2083, %v2075, %v2080
  %v2085 = vrsqrt.pop %v1322
  %v2086 = vmul.f32 %v2085, %v1322
  %v2087 = vmul.f32 %v2086, %v2085
  %v2088 = vmul.f32 0.5, %v2087
  %v2089 = vsub.f32 1.5, %v2088
  %v2090 = vmul.f32 %v2085, %v2089
  %vm2091 = vweird.f32 %v1322
  %vm2092 = vweird.f32 %v2085
  %vm2093 = vmor %vm2091, %vm2092
  %v2094 = vsel %vm2093, %v2085, %v2090
  %v2095 = vrsqrt.pop %v1323
  %v2096 = vmul.f32 %v2095, %v1323
  %v2097 = vmul.f32 %v2096, %v2095
  %v2098 = vmul.f32 0.5, %v2097
  %v2099 = vsub.f32 1.5, %v2098
  %v2100 = vmul.f32 %v2095, %v2099
  %vm2101 = vweird.f32 %v1323
  %vm2102 = vweird.f32 %v2095
  %vm2103 = vmor %vm2101, %vm2102
  %v2104 = vsel %vm2103, %v2095, %v2100
  %v2105 = vrsqrt.pop %v1324
  %v2106 = vmul.f32 %v2105, %v1324
  %v2107 = vmul.f32 %v2106, %v2105
  %v2108 = vmul.f32 0.5, %v2107
  %v2109 = vsub.f32 1.5, %v2108
  %v2110 = vmul.f32 %v2105, %v2109
  %vm2111 = vweird.f32 %v1324
  %vm2112 = vweird.f32 %v2105
  %vm2113 = vmor %vm2111, %vm2112
  %v2114 = vsel %vm2113, %v2105, %v2110
  %v2115 = vrsqrt.pop %v1325
  %v2116 = vmul.f32 %v2115, %v1325
  %v2117 = vmul.f32 %v2116, %v2115
  %v2118 = vmul.f32 0.5, %v2117
  %v2119 = vsub.f32 1.5, %v2118
  %v2120 = vmul.f32 %v2115, %v2119
  %vm2121 = vweird.f32 %v1325
  %vm2122 = vweird.f32 %v2115
  %vm2123 = vmor %vm2121, %vm2122
  %v2124 = vsel %vm2123, %v2115, %v2120
  %v2125 = vrsqrt.pop %v1326
  %v2126 = vmul.f32 %v2125, %v1326
  %v2127 = vmul.f32 %v2126, %v2125
  %v2128 = vmul.f32 0.5, %v2127
  %v2129 = vsub.f32 1.5, %v2128
  %v2130 = vmul.f32 %v2125, %v2129
  %vm2131 = vweird.f32 %v1326
  %vm2132 = vweird.f32 %v2125
  %vm2133 = vmor %vm2131, %vm2132
  %v2134 = vsel %vm2133, %v2125, %v2130
  %v2135 = vrsqrt.pop %v1327
  %v2136 = vmul.f32 %v2135, %v1327
  %v2137 = vmul.f32 %v2136, %v2135
  %v2138 = vmul.f32 0.5, %v2137
  %v2139 = vsub.f32 1.5, %v2138
  %v2140 = vmul.f32 %v2135, %v2139
  %vm2141 = vweird.f32 %v1327
  %vm2142 = vweird.f32 %v2135
  %vm2143 = vmor %vm2141, %vm2142
  %v2144 = vsel %vm2143, %v2135, %v2140
  %v2145 = vrsqrt.pop %v1328
  %v2146 = vmul.f32 %v2145, %v1328
  %v2147 = vmul.f32 %v2146, %v2145
  %v2148 = vmul.f32 0.5, %v2147
  %v2149 = vsub.f32 1.5, %v2148
  %v2150 = vmul.f32 %v2145, %v2149
  %vm2151 = vweird.f32 %v1328
  %vm2152 = vweird.f32 %v2145
  %vm2153 = vmor %vm2151, %vm2152
  %v2154 = vsel %vm2153, %v2145, %v2150
  %v2155 = vrsqrt.pop %v1329
  %v2156 = vmul.f32 %v2155, %v1329
  %v2157 = vmul.f32 %v2156, %v2155
  %v2158 = vmul.f32 0.5, %v2157
  %v2159 = vsub.f32 1.5, %v2158
  %v2160 = vmul.f32 %v2155, %v2159
  %vm2161 = vweird.f32 %v1329
  %vm2162 = vweird.f32 %v2155
  %vm2163 = vmor %vm2161, %vm2162
  %v2164 = vsel %vm2163, %v2155, %v2160
  %v2165 = vrsqrt.pop %v1330
  %v2166 = vmul.f32 %v2165, %v1330
  %v2167 = vmul.f32 %v2166, %v2165
  %v2168 = vmul.f32 0.5, %v2167
  %v2169 = vsub.f32 1.5, %v2168
  %v2170 = vmul.f32 %v2165, %v2169
  %vm2171 = vweird.f32 %v1330
  %vm2172 = vweird.f32 %v2165
  %vm2173 = vmor %vm2171, %vm2172
  %v2174 = vsel %vm2173, %v2165, %v2170
  %v2175 = vrsqrt.pop %v1331
  %v2176 = vmul.f32 %v2175, %v1331
  %v2177 = vmul.f32 %v2176, %v2175
  %v2178 = vmul.f32 0.5, %v2177
  %v2179 = vsub.f32 1.5, %v2178
  %v2180 = vmul.f32 %v2175, %v2179
  %vm2181 = vweird.f32 %v1331
  %vm2182 = vweird.f32 %v2175
  %vm2183 = vmor %vm2181, %vm2182
  %v2184 = vsel %vm2183, %v2175, %v2180
  %v2185 = vrsqrt.pop %v1332
  %v2186 = vmul.f32 %v2185, %v1332
  %v2187 = vmul.f32 %v2186, %v2185
  %v2188 = vmul.f32 0.5, %v2187
  %v2189 = vsub.f32 1.5, %v2188
  %v2190 = vmul.f32 %v2185, %v2189
  %vm2191 = vweird.f32 %v1332
  %vm2192 = vweird.f32 %v2185
  %vm2193 = vmor %vm2191, %vm2192
  %v2194 = vsel %vm2193, %v2185, %v2190
  %v2195 = vrsqrt.pop %v1333
  %v2196 = vmul.f32 %v2195, %v1333
  %v2197 = vmul.f32 %v2196, %v2195
  %v2198 = vmul.f32 0.5, %v2197
  %v2199 = vsub.f32 1.5, %v2198
  %v2200 = vmul.f32 %v2195, %v2199
  %vm2201 = vweird.f32 %v1333
  %vm2202 = vweird.f32 %v2195
  %vm2203 = vmor %vm2201, %vm2202
  %v2204 = vsel %vm2203, %v2195, %v2200
  %v2205 = vrsqrt.pop %v1334
  %v2206 = vmul.f32 %v2205, %v1334
  %v2207 = vmul.f32 %v2206, %v2205
  %v2208 = vmul.f32 0.5, %v2207
  %v2209 = vsub.f32 1.5, %v2208
  %v2210 = vmul.f32 %v2205, %v2209
  %vm2211 = vweird.f32 %v1334
  %vm2212 = vweird.f32 %v2205
  %vm2213 = vmor %vm2211, %vm2212
  %v2214 = vsel %vm2213, %v2205, %v2210
  %v2215 = vld [vmem:[%s1] sm:$0xff]
  %v2216 = vld [vmem:[%s1 + $0x8] sm:$0xff]
  %v2217 = vld [vmem:[%s1 + $0x10] sm:$0xff]
  %v2218 = vld [vmem:[%s1 + $0x18] sm:$0xff]
  %v2219 = vld [vmem:[%s1 + $0x20] sm:$0xff]
  %v2220 = vld [vmem:[%s1 + $0x28] sm:$0xff]
  %v2221 = vld [vmem:[%s1 + $0x30] sm:$0xff]
  %v2222 = vld [vmem:[%s1 + $0x38] sm:$0xff]
  %v2223 = vld [vmem:[%s1 + $0x40] sm:$0xff]
  %v2224 = vld [vmem:[%s1 + $0x48] sm:$0xff]
  %v2225 = vld [vmem:[%s1 + $0x50] sm:$0xff]
  %v2226 = vld [vmem:[%s1 + $0x58] sm:$0xff]
  %v2227 = vld [vmem:[%s1 + $0x60] sm:$0xff]
  %v2228 = vld [vmem:[%s1 + $0x68] sm:$0xff]
  %v2229 = vld [vmem:[%s1 + $0x70] sm:$0xff]
  %v2230 = vld [vmem:[%s1 + $0x78] sm:$0xff]
  %v2231 = vld [vmem:[%s1 + $0x80] sm:$0xff]
  %v2232 = vld [vmem:[%s1 + $0x88] sm:$0xff]
  %v2233 = vld [vmem:[%s1 + $0x90] sm:$0xff]
  %v2234 = vld [vmem:[%s1 + $0x98] sm:$0xff]
  %v2235 = vld [vmem:[%s1 + $0xa0] sm:$0xff]
  %v2236 = vld [vmem:[%s1 + $0xa8] sm:$0xff]
  %v2237 = vld [vmem:[%s1 + $0xb0] sm:$0xff]
  %v2238 = vld [vmem:[%s1 + $0xb8] sm:$0xff]
  %v2239 = vld [vmem:[%s1 + $0xc0] sm:$0xff]
  %v2240 = vld [vmem:[%s1 + $0xc8] sm:$0xff]
  %v2241 = vld [vmem:[%s1 + $0xd0] sm:$0xff]
  %v2242 = vld [vmem:[%s1 + $0xd8] sm:$0xff]
  %v2243 = vld [vmem:[%s1 + $0xe0] sm:$0xff]
  %v2244 = vld [vmem:[%s1 + $0xe8] sm:$0xff]
  %v2245 = vld [vmem:[%s1 + $0xf0] sm:$0xff]
  %v2246 = vld [vmem:[%s1 + $0xf8] sm:$0xff]
  %v2247 = vld [vmem:[%s1 + $0x100] sm:$0xff]
  %v2248 = vld [vmem:[%s1 + $0x108] sm:$0xff]
  %v2249 = vld [vmem:[%s1 + $0x110] sm:$0xff]
  %v2250 = vld [vmem:[%s1 + $0x118] sm:$0xff]
  %v2251 = vld [vmem:[%s1 + $0x120] sm:$0xff]
  %v2252 = vld [vmem:[%s1 + $0x128] sm:$0xff]
  %v2253 = vld [vmem:[%s1 + $0x130] sm:$0xff]
  %v2254 = vld [vmem:[%s1 + $0x138] sm:$0xff]
  %v2255 = vld [vmem:[%s1 + $0x140] sm:$0xff]
  %v2256 = vld [vmem:[%s1 + $0x148] sm:$0xff]
  %v2257 = vld [vmem:[%s1 + $0x150] sm:$0xff]
  %v2258 = vld [vmem:[%s1 + $0x158] sm:$0xff]
  %v2259 = vld [vmem:[%s1 + $0x160] sm:$0xff]
  %v2260 = vld [vmem:[%s1 + $0x168] sm:$0xff]
  %v2261 = vld [vmem:[%s1 + $0x170] sm:$0xff]
  %v2262 = vld [vmem:[%s1 + $0x178] sm:$0xff]
  %v2263 = vld [vmem:[%s1 + $0x180] sm:$0xff]
  %v2264 = vld [vmem:[%s1 + $0x188] sm:$0xff]
  %v2265 = vld [vmem:[%s1 + $0x190] sm:$0xff]
  %v2266 = vld [vmem:[%s1 + $0x198] sm:$0xff]
  %v2267 = vld [vmem:[%s1 + $0x1a0] sm:$0xff]
  %v2268 = vld [vmem:[%s1 + $0x1a8] sm:$0xff]
  %v2269 = vld [vmem:[%s1 + $0x1b0] sm:$0xff]
  %v2270 = vld [vmem:[%s1 + $0x1b8] sm:$0xff]
  %v2271 = vld [vmem:[%s1 + $0x1c0] sm:$0xff]
  %v2272 = vld [vmem:[%s1 + $0x1c8] sm:$0xff]
  %v2273 = vld [vmem:[%s1 + $0x1d0] sm:$0xff]
  %v2274 = vld [vmem:[%s1 + $0x1d8] sm:$0xff]
  %v2275 = vld [vmem:[%s1 + $0x1e0] sm:$0xff]
  %v2276 = vld [vmem:[%s1 + $0x1e8] sm:$0xff]
  %v2277 = vld [vmem:[%s1 + $0x1f0] sm:$0xff]
  %v2278 = vld [vmem:[%s1 + $0x1f8] sm:$0xff]
  %v2279 = vld [vmem:[%s1 + $0x200] sm:$0xff]
  %v2280 = vld [vmem:[%s1 + $0x208] sm:$0xff]
  %v2281 = vld [vmem:[%s1 + $0x210] sm:$0xff]
  %v2282 = vld [vmem:[%s1 + $0x218] sm:$0xff]
  %v2283 = vld [vmem:[%s1 + $0x220] sm:$0xff]
  %v2284 = vld [vmem:[%s1 + $0x228] sm:$0xff]
  %v2285 = vld [vmem:[%s1 + $0x230] sm:$0xff]
  %v2286 = vld [vmem:[%s1 + $0x238] sm:$0xff]
  %v2287 = vld [vmem:[%s1 + $0x240] sm:$0xff]
  %v2288 = vld [vmem:[%s1 + $0x248] sm:$0xff]
  %v2289 = vld [vmem:[%s1 + $0x250] sm:$0xff]
  %v2290 = vld [vmem:[%s1 + $0x258] sm:$0xff]
  %v2291 = vld [vmem:[%s1 + $0x260] sm:$0xff]
  %v2292 = vld [vmem:[%s1 + $0x268] sm:$0xff]
  %v2293 = vld [vmem:[%s1 + $0x270] sm:$0xff]
  %v2294 = vld [vmem:[%s1 + $0x278] sm:$0xff]
  %v2295 = vld [vmem:[%s1 + $0x280] sm:$0xff]
  %v2296 = vld [vmem:[%s1 + $0x288] sm:$0xff]
  %v2297 = vld [vmem:[%s1 + $0x290] sm:$0xff]
  %v2298 = vld [vmem:[%s1 + $0x298] sm:$0xff]
  %v2299 = vld [vmem:[%s1 + $0x2a0] sm:$0xff]
  %v2300 = vld [vmem:[%s1 + $0x2a8] sm:$0xff]
  %v2301 = vld [vmem:[%s1 + $0x2b0] sm:$0xff]
  %v2302 = vld [vmem:[%s1 + $0x2b8] sm:$0xff]
  %v2303 = vld [vmem:[%s2] sm:$0xff]
  %v2304 = vld [vmem:[%s2 + $0x8] sm:$0xff]
  %v2305 = vld [vmem:[%s2 + $0x10] sm:$0xff]
  %v2306 = vld [vmem:[%s2 + $0x18] sm:$0xff]
  %v2307 = vld [vmem:[%s2 + $0x20] sm:$0xff]
  %v2308 = vld [vmem:[%s2 + $0x28] sm:$0xff]
  %v2309 = vld [vmem:[%s2 + $0x30] sm:$0xff]
  %v2310 = vld [vmem:[%s2 + $0x38] sm:$0xff]
  %v2311 = vld [vmem:[%s2 + $0x40] sm:$0xff]
  %v2312 = vld [vmem:[%s2 + $0x48] sm:$0xff]
  %v2313 = vld [vmem:[%s2 + $0x50] sm:$0xff]
  %v2314 = vld [vmem:[%s2 + $0x58] sm:$0xff]
  %v2315 = vld [vmem:[%s2 + $0x60] sm:$0xff]
  %v2316 = vld [vmem:[%s2 + $0x68] sm:$0xff]
  %v2317 = vld [vmem:[%s2 + $0x70] sm:$0xff]
  %v2318 = vld [vmem:[%s2 + $0x78] sm:$0xff]
  %v2319 = vld [vmem:[%s2 + $0x80] sm:$0xff]
  %v2320 = vld [vmem:[%s2 + $0x88] sm:$0xff]
  %v2321 = vld [vmem:[%s2 + $0x90] sm:$0xff]
  %v2322 = vld [vmem:[%s2 + $0x98] sm:$0xff]
  %v2323 = vld [vmem:[%s2 + $0xa0] sm:$0xff]
  %v2324 = vld [vmem:[%s2 + $0xa8] sm:$0xff]
  %v2325 = vld [vmem:[%s2 + $0xb0] sm:$0xff]
  %v2326 = vld [vmem:[%s2 + $0xb8] sm:$0xff]
  %v2327 = vld [vmem:[%s2 + $0xc0] sm:$0xff]
  %v2328 = vld [vmem:[%s2 + $0xc8] sm:$0xff]
  %v2329 = vld [vmem:[%s2 + $0xd0] sm:$0xff]
  %v2330 = vld [vmem:[%s2 + $0xd8] sm:$0xff]
  %v2331 = vld [vmem:[%s2 + $0xe0] sm:$0xff]
  %v2332 = vld [vmem:[%s2 + $0xe8] sm:$0xff]
  %v2333 = vld [vmem:[%s2 + $0xf0] sm:$0xff]
  %v2334 = vld [vmem:[%s2 + $0xf8] sm:$0xff]
  %v2335 = vld [vmem:[%s2 + $0x100] sm:$0xff]
  %v2336 = vld [vmem:[%s2 + $0x108] sm:$0xff]
  %v2337 = vld [vmem:[%s2 + $0x110] sm:$0xff]
  %v2338 = vld [vmem:[%s2 + $0x118] sm:$0xff]
  %v2339 = vld [vmem:[%s2 + $0x120] sm:$0xff]
  %v2340 = vld [vmem:[%s2 + $0x128] sm:$0xff]
  %v2341 = vld [vmem:[%s2 + $0x130] sm:$0xff]
  %v2342 = vld [vmem:[%s2 + $0x138] sm:$0xff]
  %v2343 = vld [vmem:[%s2 + $0x140] sm:$0xff]
  %v2344 = vld [vmem:[%s2 + $0x148] sm:$0xff]
  %v2345 = vld [vmem:[%s2 + $0x150] sm:$0xff]
  %v2346 = vld [vmem:[%s2 + $0x158] sm:$0xff]
  %v2347 = vld [vmem:[%s2 + $0x160] sm:$0xff]
  %v2348 = vld [vmem:[%s2 + $0x168] sm:$0xff]
  %v2349 = vld [vmem:[%s2 + $0x170] sm:$0xff]
  %v2350 = vld [vmem:[%s2 + $0x178] sm:$0xff]
  %v2351 = vld [vmem:[%s2 + $0x180] sm:$0xff]
  %v2352 = vld [vmem:[%s2 + $0x188] sm:$0xff]
  %v2353 = vld [vmem:[%s2 + $0x190] sm:$0xff]
  %v2354 = vld [vmem:[%s2 + $0x198] sm:$0xff]
  %v2355 = vld [vmem:[%s2 + $0x1a0] sm:$0xff]
  %v2356 = vld [vmem:[%s2 + $0x1a8] sm:$0xff]
  %v2357 = vld [vmem:[%s2 + $0x1b0] sm:$0xff]
  %v2358 = vld [vmem:[%s2 + $0x1b8] sm:$0xff]
  %v2359 = vld [vmem:[%s2 + $0x1c0] sm:$0xff]
  %v2360 = vld [vmem:[%s2 + $0x1c8] sm:$0xff]
  %v2361 = vld [vmem:[%s2 + $0x1d0] sm:$0xff]
  %v2362 = vld [vmem:[%s2 + $0x1d8] sm:$0xff]
  %v2363 = vld [vmem:[%s2 + $0x1e0] sm:$0xff]
  %v2364 = vld [vmem:[%s2 + $0x1e8] sm:$0xff]
  %v2365 = vld [vmem:[%s2 + $0x1f0] sm:$0xff]
  %v2366 = vld [vmem:[%s2 + $0x1f8] sm:$0xff]
  %v2367 = vld [vmem:[%s2 + $0x200] sm:$0xff]
  %v2368 = vld [vmem:[%s2 + $0x208] sm:$0xff]
  %v2369 = vld [vmem:[%s2 + $0x210] sm:$0xff]
  %v2370 = vld [vmem:[%s2 + $0x218] sm:$0xff]
  %v2371 = vld [vmem:[%s2 + $0x220] sm:$0xff]
  %v2372 = vld [vmem:[%s2 + $0x228] sm:$0xff]
  %v2373 = vld [vmem:[%s2 + $0x230] sm:$0xff]
  %v2374 = vld [vmem:[%s2 + $0x238] sm:$0xff]
  %v2375 = vld [vmem:[%s2 + $0x240] sm:$0xff]
  %v2376 = vld [vmem:[%s2 + $0x248] sm:$0xff]
  %v2377 = vld [vmem:[%s2 + $0x250] sm:$0xff]
  %v2378 = vld [vmem:[%s2 + $0x258] sm:$0xff]
  %v2379 = vld [vmem:[%s2 + $0x260] sm:$0xff]
  %v2380 = vld [vmem:[%s2 + $0x268] sm:$0xff]
  %v2381 = vld [vmem:[%s2 + $0x270] sm:$0xff]
  %v2382 = vld [vmem:[%s2 + $0x278] sm:$0xff]
  %v2383 = vld [vmem:[%s2 + $0x280] sm:$0xff]
  %v2384 = vld [vmem:[%s2 + $0x288] sm:$0xff]
  %v2385 = vld [vmem:[%s2 + $0x290] sm:$0xff]
  %v2386 = vld [vmem:[%s2 + $0x298] sm:$0xff]
  %v2387 = vld [vmem:[%s2 + $0x2a0] sm:$0xff]
  %v2388 = vld [vmem:[%s2 + $0x2a8] sm:$0xff]
  %v2389 = vld [vmem:[%s2 + $0x2b0] sm:$0xff]
  %v2390 = vld [vmem:[%s2 + $0x2b8] sm:$0xff]
  %v2391 = vmul.f32 %v1344, %v2215
  %v2392 = vmul.f32 %v1354, %v2216
  %v2393 = vmul.f32 %v1364, %v2217
  %v2394 = vmul.f32 %v1374, %v2218
  %v2395 = vmul.f32 %v1384, %v2219
  %v2396 = vmul.f32 %v1394, %v2220
  %v2397 = vmul.f32 %v1404, %v2221
  %v2398 = vmul.f32 %v1414, %v2222
  %v2399 = vmul.f32 %v1424, %v2223
  %v2400 = vmul.f32 %v1434, %v2224
  %v2401 = vmul.f32 %v1444, %v2225
  %v2402 = vmul.f32 %v1454, %v2226
  %v2403 = vmul.f32 %v1464, %v2227
  %v2404 = vmul.f32 %v1474, %v2228
  %v2405 = vmul.f32 %v1484, %v2229
  %v2406 = vmul.f32 %v1494, %v2230
  %v2407 = vmul.f32 %v1504, %v2231
  %v2408 = vmul.f32 %v1514, %v2232
  %v2409 = vmul.f32 %v1524, %v2233
  %v2410 = vmul.f32 %v1534, %v2234
  %v2411 = vmul.f32 %v1544, %v2235
  %v2412 = vmul.f32 %v1554, %v2236
  %v2413 = vmul.f32 %v1564, %v2237
  %v2414 = vmul.f32 %v1574, %v2238
  %v2415 = vmul.f32 %v1584, %v2239
  %v2416 = vmul.f32 %v1594, %v2240
  %v2417 = vmul.f32 %v1604, %v2241
  %v2418 = vmul.f32 %v1614, %v2242
  %v2419 = vmul.f32 %v1624, %v2243
  %v2420 = vmul.f32 %v1634, %v2244
  %v2421 = vmul.f32 %v1644, %v2245
  %v2422 = vmul.f32 %v1654, %v2246
  %v2423 = vmul.f32 %v1664, %v2247
  %v2424 = vmul.f32 %v1674, %v2248
  %v2425 = vmul.f32 %v1684, %v2249
  %v2426 = vmul.f32 %v1694, %v2250
  %v2427 = vmul.f32 %v1704, %v2251
  %v2428 = vmul.f32 %v1714, %v2252
  %v2429 = vmul.f32 %v1724, %v2253
  %v2430 = vmul.f32 %v1734, %v2254
  %v2431 = vmul.f32 %v1744, %v2255
  %v2432 = vmul.f32 %v1754, %v2256
  %v2433 = vmul.f32 %v1764, %v2257
  %v2434 = vmul.f32 %v1774, %v2258
  %v2435 = vmul.f32 %v1784, %v2259
  %v2436 = vmul.f32 %v1794, %v2260
  %v2437 = vmul.f32 %v1804, %v2261
  %v2438 = vmul.f32 %v1814, %v2262
  %v2439 = vmul.f32 %v1824, %v2263
  %v2440 = vmul.f32 %v1834, %v2264
  %v2441 = vmul.f32 %v1844, %v2265
  %v2442 = vmul.f32 %v1854, %v2266
  %v2443 = vmul.f32 %v1864, %v2267
  %v2444 = vmul.f32 %v1874, %v2268
  %v2445 = vmul.f32 %v1884, %v2269
  %v2446 = vmul.f32 %v1894, %v2270
  %v2447 = vmul.f32 %v1904, %v2271
  %v2448 = vmul.f32 %v1914, %v2272
  %v2449 = vmul.f32 %v1924, %v2273
  %v2450 = vmul.f32 %v1934, %v2274
  %v2451 = vmul.f32 %v1944, %v2275
  %v2452 = vmul.f32 %v1954, %v2276
  %v2453 = vmul.f32 %v1964, %v2277
  %v2454 = vmul.f32 %v1974, %v2278
  %v2455 = vmul.f32 %v1984, %v2279
  %v2456 = vmul.f32 %v1994, %v2280
  %v2457 = vmul.f32 %v2004, %v2281
  %v2458 = vmul.f32 %v2014, %v2282
  %v2459 = vmul.f32 %v2024, %v2283
  %v2460 = vmul.f32 %v2034, %v2284
  %v2461 = vmul.f32 %v2044, %v2285
  %v2462 = vmul.f32 %v2054, %v2286
  %v2463 = vmul.f32 %v2064, %v2287
  %v2464 = vmul.f32 %v2074, %v2288
  %v2465 = vmul.f32 %v2084, %v2289
  %v2466 = vmul.f32 %v2094, %v2290
  %v2467 = vmul.f32 %v2104, %v2291
  %v2468 = vmul.f32 %v2114, %v2292
  %v2469 = vmul.f32 %v2124, %v2293
  %v2470 = vmul.f32 %v2134, %v2294
  %v2471 = vmul.f32 %v2144, %v2295
  %v2472 = vmul.f32 %v2154, %v2296
  %v2473 = vmul.f32 %v2164, %v2297
  %v2474 = vmul.f32 %v2174, %v2298
  %v2475 = vmul.f32 %v2184, %v2299
  %v2476 = vmul.f32 %v2194, %v2300
  %v2477 = vmul.f32 %v2204, %v2301
  %v2478 = vmul.f32 %v2214, %v2302
  %v2479 = vmul.f32 %v895, %v2391
  %v2480 = vmul.f32 %v896, %v2392
  %v2481 = vmul.f32 %v897, %v2393
  %v2482 = vmul.f32 %v898, %v2394
  %v2483 = vmul.f32 %v899, %v2395
  %v2484 = vmul.f32 %v900, %v2396
  %v2485 = vmul.f32 %v901, %v2397
  %v2486 = vmul.f32 %v902, %v2398
  %v2487 = vmul.f32 %v903, %v2399
  %v2488 = vmul.f32 %v904, %v2400
  %v2489 = vmul.f32 %v905, %v2401
  %v2490 = vmul.f32 %v906, %v2402
  %v2491 = vmul.f32 %v907, %v2403
  %v2492 = vmul.f32 %v908, %v2404
  %v2493 = vmul.f32 %v909, %v2405
  %v2494 = vmul.f32 %v910, %v2406
  %v2495 = vmul.f32 %v911, %v2407
  %v2496 = vmul.f32 %v912, %v2408
  %v2497 = vmul.f32 %v913, %v2409
  %v2498 = vmul.f32 %v914, %v2410
  %v2499 = vmul.f32 %v915, %v2411
  %v2500 = vmul.f32 %v916, %v2412
  %v2501 = vmul.f32 %v917, %v2413
  %v2502 = vmul.f32 %v918, %v2414
  %v2503 = vmul.f32 %v919, %v2415
  %v2504 = vmul.f32 %v920, %v2416
  %v2505 = vmul.f32 %v921, %v2417
  %v2506 = vmul.f32 %v922, %v2418
  %v2507 = vmul.f32 %v923, %v2419
  %v2508 = vmul.f32 %v924, %v2420
  %v2509 = vmul.f32 %v925, %v2421
  %v2510 = vmul.f32 %v926, %v2422
  %v2511 = vmul.f32 %v927, %v2423
  %v2512 = vmul.f32 %v928, %v2424
  %v2513 = vmul.f32 %v929, %v2425
  %v2514 = vmul.f32 %v930, %v2426
  %v2515 = vmul.f32 %v931, %v2427
  %v2516 = vmul.f32 %v932, %v2428
  %v2517 = vmul.f32 %v933, %v2429
  %v2518 = vmul.f32 %v934, %v2430
  %v2519 = vmul.f32 %v935, %v2431
  %v2520 = vmul.f32 %v936, %v2432
  %v2521 = vmul.f32 %v937, %v2433
  %v2522 = vmul.f32 %v938, %v2434
  %v2523 = vmul.f32 %v939, %v2435
  %v2524 = vmul.f32 %v940, %v2436
  %v2525 = vmul.f32 %v941, %v2437
  %v2526 = vmul.f32 %v942, %v2438
  %v2527 = vmul.f32 %v943, %v2439
  %v2528 = vmul.f32 %v944, %v2440
  %v2529 = vmul.f32 %v945, %v2441
  %v2530 = vmul.f32 %v946, %v2442
  %v2531 = vmul.f32 %v947, %v2443
  %v2532 = vmul.f32 %v948, %v2444
  %v2533 = vmul.f32 %v949, %v2445
  %v2534 = vmul.f32 %v950, %v2446
  %v2535 = vmul.f32 %v951, %v2447
  %v2536 = vmul.f32 %v952, %v2448
  %v2537 = vmul.f32 %v953, %v2449
  %v2538 = vmul.f32 %v954, %v2450
  %v2539 = vmul.f32 %v955, %v2451
  %v2540 = vmul.f32 %v956, %v2452
  %v2541 = vmul.f32 %v957, %v2453
  %v2542 = vmul.f32 %v958, %v2454
  %v2543 = vmul.f32 %v959, %v2455
  %v2544 = vmul.f32 %v960, %v2456
  %v2545 = vmul.f32 %v961, %v2457
  %v2546 = vmul.f32 %v962, %v2458
  %v2547 = vmul.f32 %v963, %v2459
  %v2548 = vmul.f32 %v964, %v2460
  %v2549 = vmul.f32 %v965, %v2461
  %v2550 = vmul.f32 %v966, %v2462
  %v2551 = vmul.f32 %v967, %v2463
  %v2552 = vmul.f32 %v968, %v2464
  %v2553 = vmul.f32 %v969, %v2465
  %v2554 = vmul.f32 %v970, %v2466
  %v2555 = vmul.f32 %v971, %v2467
  %v2556 = vmul.f32 %v972, %v2468
  %v2557 = vmul.f32 %v973, %v2469
  %v2558 = vmul.f32 %v974, %v2470
  %v2559 = vmul.f32 %v975, %v2471
  %v2560 = vmul.f32 %v976, %v2472
  %v2561 = vmul.f32 %v977, %v2473
  %v2562 = vmul.f32 %v978, %v2474
  %v2563 = vmul.f32 %v979, %v2475
  %v2564 = vmul.f32 %v980, %v2476
  %v2565 = vmul.f32 %v981, %v2477
  %v2566 = vmul.f32 %v982, %v2478
  %v2567 = vsub.f32 %v2303, %v2479
  %v2568 = vsub.f32 %v2304, %v2480
  %v2569 = vsub.f32 %v2305, %v2481
  %v2570 = vsub.f32 %v2306, %v2482
  %v2571 = vsub.f32 %v2307, %v2483
  %v2572 = vsub.f32 %v2308, %v2484
  %v2573 = vsub.f32 %v2309, %v2485
  %v2574 = vsub.f32 %v2310, %v2486
  %v2575 = vsub.f32 %v2311, %v2487
  %v2576 = vsub.f32 %v2312, %v2488
  %v2577 = vsub.f32 %v2313, %v2489
  %v2578 = vsub.f32 %v2314, %v2490
  %v2579 = vsub.f32 %v2315, %v2491
  %v2580 = vsub.f32 %v2316, %v2492
  %v2581 = vsub.f32 %v2317, %v2493
  %v2582 = vsub.f32 %v2318, %v2494
  %v2583 = vsub.f32 %v2319, %v2495
  %v2584 = vsub.f32 %v2320, %v2496
  %v2585 = vsub.f32 %v2321, %v2497
  %v2586 = vsub.f32 %v2322, %v2498
  %v2587 = vsub.f32 %v2323, %v2499
  %v2588 = vsub.f32 %v2324, %v2500
  %v2589 = vsub.f32 %v2325, %v2501
  %v2590 = vsub.f32 %v2326, %v2502
  %v2591 = vsub.f32 %v2327, %v2503
  %v2592 = vsub.f32 %v2328, %v2504
  %v2593 = vsub.f32 %v2329, %v2505
  %v2594 = vsub.f32 %v2330, %v2506
  %v2595 = vsub.f32 %v2331, %v2507
  %v2596 = vsub.f32 %v2332, %v2508
  %v2597 = vsub.f32 %v2333, %v2509
  %v2598 = vsub.f32 %v2334, %v2510
  %v2599 = vsub.f32 %v2335, %v2511
  %v2600 = vsub.f32 %v2336, %v2512
  %v2601 = vsub.f32 %v2337, %v2513
  %v2602 = vsub.f32 %v2338, %v2514
  %v2603 = vsub.f32 %v2339, %v2515
  %v2604 = vsub.f32 %v2340, %v2516
  %v2605 = vsub.f32 %v2341, %v2517
  %v2606 = vsub.f32 %v2342, %v2518
  %v2607 = vsub.f32 %v2343, %v2519
  %v2608 = vsub.f32 %v2344, %v2520
  %v2609 = vsub.f32 %v2345, %v2521
  %v2610 = vsub.f32 %v2346, %v2522
  %v2611 = vsub.f32 %v2347, %v2523
  %v2612 = vsub.f32 %v2348, %v2524
  %v2613 = vsub.f32 %v2349, %v2525
  %v2614 = vsub.f32 %v2350, %v2526
  %v2615 = vsub.f32 %v2351, %v2527
  %v2616 = vsub.f32 %v2352, %v2528
  %v2617 = vsub.f32 %v2353, %v2529
  %v2618 = vsub.f32 %v2354, %v2530
  %v2619 = vsub.f32 %v2355, %v2531
  %v2620 = vsub.f32 %v2356, %v2532
  %v2621 = vsub.f32 %v2357, %v2533
  %v2622 = vsub.f32 %v2358, %v2534
  %v2623 = vsub.f32 %v2359, %v2535
  %v2624 = vsub.f32 %v2360, %v2536
  %v2625 = vsub.f32 %v2361, %v2537
  %v2626 = vsub.f32 %v2362, %v2538
  %v2627 = vsub.f32 %v2363, %v2539
  %v2628 = vsub.f32 %v2364, %v2540
  %v2629 = vsub.f32 %v2365, %v2541
  %v2630 = vsub.f32 %v2366, %v2542
  %v2631 = vsub.f32 %v2367, %v2543
  %v2632 = vsub.f32 %v2368, %v2544
  %v2633 = vsub.f32 %v2369, %v2545
  %v2634 = vsub.f32 %v2370, %v2546
  %v2635 = vsub.f32 %v2371, %v2547
  %v2636 = vsub.f32 %v2372, %v2548
  %v2637 = vsub.f32 %v2373, %v2549
  %v2638 = vsub.f32 %v2374, %v2550
  %v2639 = vsub.f32 %v2375, %v2551
  %v2640 = vsub.f32 %v2376, %v2552
  %v2641 = vsub.f32 %v2377, %v2553
  %v2642 = vsub.f32 %v2378, %v2554
  %v2643 = vsub.f32 %v2379, %v2555
  %v2644 = vsub.f32 %v2380, %v2556
  %v2645 = vsub.f32 %v2381, %v2557
  %v2646 = vsub.f32 %v2382, %v2558
  %v2647 = vsub.f32 %v2383, %v2559
  %v2648 = vsub.f32 %v2384, %v2560
  %v2649 = vsub.f32 %v2385, %v2561
  %v2650 = vsub.f32 %v2386, %v2562
  %v2651 = vsub.f32 %v2387, %v2563
  %v2652 = vsub.f32 %v2388, %v2564
  %v2653 = vsub.f32 %v2389, %v2565
  %v2654 = vsub.f32 %v2390, %v2566
  %2656 = vset.pattern.permute.xlu0 0
  %2657 = vperm.xlu0 %2656, %v2391
  %v2658 = vpop.permute.xlu0 %2657
  %2661 = vset.pattern.permute.xlu0 0
  %2662 = vperm.xlu0 %2661, %v2392
  %v2663 = vpop.permute.xlu0 %2662
  %2666 = vset.pattern.permute.xlu0 0
  %2667 = vperm.xlu0 %2666, %v2393
  %v2668 = vpop.permute.xlu0 %2667
  %2671 = vset.pattern.permute.xlu0 0
  %2672 = vperm.xlu0 %2671, %v2394
  %v2673 = vpop.permute.xlu0 %2672
  %2676 = vset.pattern.permute.xlu0 0
  %2677 = vperm.xlu0 %2676, %v2395
  %v2678 = vpop.permute.xlu0 %2677
  %2681 = vset.pattern.permute.xlu0 0
  %2682 = vperm.xlu0 %2681, %v2396
  %v2683 = vpop.permute.xlu0 %2682
  %2686 = vset.pattern.permute.xlu0 0
  %2687 = vperm.xlu0 %2686, %v2397
  %v2688 = vpop.permute.xlu0 %2687
  %2691 = vset.pattern.permute.xlu0 0
  %2692 = vperm.xlu0 %2691, %v2398
  %v2693 = vpop.permute.xlu0 %2692
  %2696 = vset.pattern.permute.xlu0 0
  %2697 = vperm.xlu0 %2696, %v2399
  %v2698 = vpop.permute.xlu0 %2697
  %2701 = vset.pattern.permute.xlu0 0
  %2702 = vperm.xlu0 %2701, %v2400
  %v2703 = vpop.permute.xlu0 %2702
  %2706 = vset.pattern.permute.xlu0 0
  %2707 = vperm.xlu0 %2706, %v2401
  %v2708 = vpop.permute.xlu0 %2707
  %2711 = vset.pattern.permute.xlu0 0
  %2712 = vperm.xlu0 %2711, %v2402
  %v2713 = vpop.permute.xlu0 %2712
  %2716 = vset.pattern.permute.xlu0 0
  %2717 = vperm.xlu0 %2716, %v2403
  %v2718 = vpop.permute.xlu0 %2717
  %2721 = vset.pattern.permute.xlu0 0
  %2722 = vperm.xlu0 %2721, %v2404
  %v2723 = vpop.permute.xlu0 %2722
  %2726 = vset.pattern.permute.xlu0 0
  %2727 = vperm.xlu0 %2726, %v2405
  %v2728 = vpop.permute.xlu0 %2727
  %2731 = vset.pattern.permute.xlu0 0
  %2732 = vperm.xlu0 %2731, %v2406
  %v2733 = vpop.permute.xlu0 %2732
  %2736 = vset.pattern.permute.xlu0 0
  %2737 = vperm.xlu0 %2736, %v2407
  %v2738 = vpop.permute.xlu0 %2737
  %2741 = vset.pattern.permute.xlu0 0
  %2742 = vperm.xlu0 %2741, %v2408
  %v2743 = vpop.permute.xlu0 %2742
  %2746 = vset.pattern.permute.xlu0 0
  %2747 = vperm.xlu0 %2746, %v2409
  %v2748 = vpop.permute.xlu0 %2747
  %2751 = vset.pattern.permute.xlu0 0
  %2752 = vperm.xlu0 %2751, %v2410
  %v2753 = vpop.permute.xlu0 %2752
  %2756 = vset.pattern.permute.xlu0 0
  %2757 = vperm.xlu0 %2756, %v2411
  %v2758 = vpop.permute.xlu0 %2757
  %2761 = vset.pattern.permute.xlu0 0
  %2762 = vperm.xlu0 %2761, %v2412
  %v2763 = vpop.permute.xlu0 %2762
  %2766 = vset.pattern.permute.xlu0 0
  %2767 = vperm.xlu0 %2766, %v2413
  %v2768 = vpop.permute.xlu0 %2767
  %2771 = vset.pattern.permute.xlu0 0
  %2772 = vperm.xlu0 %2771, %v2414
  %v2773 = vpop.permute.xlu0 %2772
  %2776 = vset.pattern.permute.xlu0 0
  %2777 = vperm.xlu0 %2776, %v2415
  %v2778 = vpop.permute.xlu0 %2777
  %2781 = vset.pattern.permute.xlu0 0
  %2782 = vperm.xlu0 %2781, %v2416
  %v2783 = vpop.permute.xlu0 %2782
  %2786 = vset.pattern.permute.xlu0 0
  %2787 = vperm.xlu0 %2786, %v2417
  %v2788 = vpop.permute.xlu0 %2787
  %2791 = vset.pattern.permute.xlu0 0
  %2792 = vperm.xlu0 %2791, %v2418
  %v2793 = vpop.permute.xlu0 %2792
  %2796 = vset.pattern.permute.xlu0 0
  %2797 = vperm.xlu0 %2796, %v2419
  %v2798 = vpop.permute.xlu0 %2797
  %2801 = vset.pattern.permute.xlu0 0
  %2802 = vperm.xlu0 %2801, %v2420
  %v2803 = vpop.permute.xlu0 %2802
  %2806 = vset.pattern.permute.xlu0 0
  %2807 = vperm.xlu0 %2806, %v2421
  %v2808 = vpop.permute.xlu0 %2807
  %2811 = vset.pattern.permute.xlu0 0
  %2812 = vperm.xlu0 %2811, %v2422
  %v2813 = vpop.permute.xlu0 %2812
  %2816 = vset.pattern.permute.xlu0 0
  %2817 = vperm.xlu0 %2816, %v2423
  %v2818 = vpop.permute.xlu0 %2817
  %2821 = vset.pattern.permute.xlu0 0
  %2822 = vperm.xlu0 %2821, %v2424
  %v2823 = vpop.permute.xlu0 %2822
  %2826 = vset.pattern.permute.xlu0 0
  %2827 = vperm.xlu0 %2826, %v2425
  %v2828 = vpop.permute.xlu0 %2827
  %2831 = vset.pattern.permute.xlu0 0
  %2832 = vperm.xlu0 %2831, %v2426
  %v2833 = vpop.permute.xlu0 %2832
  %2836 = vset.pattern.permute.xlu0 0
  %2837 = vperm.xlu0 %2836, %v2427
  %v2838 = vpop.permute.xlu0 %2837
  %2841 = vset.pattern.permute.xlu0 0
  %2842 = vperm.xlu0 %2841, %v2428
  %v2843 = vpop.permute.xlu0 %2842
  %2846 = vset.pattern.permute.xlu0 0
  %2847 = vperm.xlu0 %2846, %v2429
  %v2848 = vpop.permute.xlu0 %2847
  %2851 = vset.pattern.permute.xlu0 0
  %2852 = vperm.xlu0 %2851, %v2430
  %v2853 = vpop.permute.xlu0 %2852
  %2856 = vset.pattern.permute.xlu0 0
  %2857 = vperm.xlu0 %2856, %v2431
  %v2858 = vpop.permute.xlu0 %2857
  %2861 = vset.pattern.permute.xlu0 0
  %2862 = vperm.xlu0 %2861, %v2432
  %v2863 = vpop.permute.xlu0 %2862
  %2866 = vset.pattern.permute.xlu0 0
  %2867 = vperm.xlu0 %2866, %v2433
  %v2868 = vpop.permute.xlu0 %2867
  %2871 = vset.pattern.permute.xlu0 0
  %2872 = vperm.xlu0 %2871, %v2434
  %v2873 = vpop.permute.xlu0 %2872
  %2876 = vset.pattern.permute.xlu0 0
  %2877 = vperm.xlu0 %2876, %v2435
  %v2878 = vpop.permute.xlu0 %2877
  %2881 = vset.pattern.permute.xlu0 0
  %2882 = vperm.xlu0 %2881, %v2436
  %v2883 = vpop.permute.xlu0 %2882
  %2886 = vset.pattern.permute.xlu0 0
  %2887 = vperm.xlu0 %2886, %v2437
  %v2888 = vpop.permute.xlu0 %2887
  %2891 = vset.pattern.permute.xlu0 0
  %2892 = vperm.xlu0 %2891, %v2438
  %v2893 = vpop.permute.xlu0 %2892
  %2896 = vset.pattern.permute.xlu0 0
  %2897 = vperm.xlu0 %2896, %v2439
  %v2898 = vpop.permute.xlu0 %2897
  %2901 = vset.pattern.permute.xlu0 0
  %2902 = vperm.xlu0 %2901, %v2440
  %v2903 = vpop.permute.xlu0 %2902
  %2906 = vset.pattern.permute.xlu0 0
  %2907 = vperm.xlu0 %2906, %v2441
  %v2908 = vpop.permute.xlu0 %2907
  %2911 = vset.pattern.permute.xlu0 0
  %2912 = vperm.xlu0 %2911, %v2442
  %v2913 = vpop.permute.xlu0 %2912
  %2916 = vset.pattern.permute.xlu0 0
  %2917 = vperm.xlu0 %2916, %v2443
  %v2918 = vpop.permute.xlu0 %2917
  %2921 = vset.pattern.permute.xlu0 0
  %2922 = vperm.xlu0 %2921, %v2444
  %v2923 = vpop.permute.xlu0 %2922
  %2926 = vset.pattern.permute.xlu0 0
  %2927 = vperm.xlu0 %2926, %v2445
  %v2928 = vpop.permute.xlu0 %2927
  %2931 = vset.pattern.permute.xlu0 0
  %2932 = vperm.xlu0 %2931, %v2446
  %v2933 = vpop.permute.xlu0 %2932
  %2936 = vset.pattern.permute.xlu0 0
  %2937 = vperm.xlu0 %2936, %v2447
  %v2938 = vpop.permute.xlu0 %2937
  %2941 = vset.pattern.permute.xlu0 0
  %2942 = vperm.xlu0 %2941, %v2448
  %v2943 = vpop.permute.xlu0 %2942
  %2946 = vset.pattern.permute.xlu0 0
  %2947 = vperm.xlu0 %2946, %v2449
  %v2948 = vpop.permute.xlu0 %2947
  %2951 = vset.pattern.permute.xlu0 0
  %2952 = vperm.xlu0 %2951, %v2450
  %v2953 = vpop.permute.xlu0 %2952
  %2956 = vset.pattern.permute.xlu0 0
  %2957 = vperm.xlu0 %2956, %v2451
  %v2958 = vpop.permute.xlu0 %2957
  %2961 = vset.pattern.permute.xlu0 0
  %2962 = vperm.xlu0 %2961, %v2452
  %v2963 = vpop.permute.xlu0 %2962
  %2966 = vset.pattern.permute.xlu0 0
  %2967 = vperm.xlu0 %2966, %v2453
  %v2968 = vpop.permute.xlu0 %2967
  %2971 = vset.pattern.permute.xlu0 0
  %2972 = vperm.xlu0 %2971, %v2454
  %v2973 = vpop.permute.xlu0 %2972
  %2976 = vset.pattern.permute.xlu0 0
  %2977 = vperm.xlu0 %2976, %v2455
  %v2978 = vpop.permute.xlu0 %2977
  %2981 = vset.pattern.permute.xlu0 0
  %2982 = vperm.xlu0 %2981, %v2456
  %v2983 = vpop.permute.xlu0 %2982
  %2986 = vset.pattern.permute.xlu0 0
  %2987 = vperm.xlu0 %2986, %v2457
  %v2988 = vpop.permute.xlu0 %2987
  %2991 = vset.pattern.permute.xlu0 0
  %2992 = vperm.xlu0 %2991, %v2458
  %v2993 = vpop.permute.xlu0 %2992
  %2996 = vset.pattern.permute.xlu0 0
  %2997 = vperm.xlu0 %2996, %v2459
  %v2998 = vpop.permute.xlu0 %2997
  %3001 = vset.pattern.permute.xlu0 0
  %3002 = vperm.xlu0 %3001, %v2460
  %v3003 = vpop.permute.xlu0 %3002
  %3006 = vset.pattern.permute.xlu0 0
  %3007 = vperm.xlu0 %3006, %v2461
  %v3008 = vpop.permute.xlu0 %3007
  %3011 = vset.pattern.permute.xlu0 0
  %3012 = vperm.xlu0 %3011, %v2462
  %v3013 = vpop.permute.xlu0 %3012
  %3016 = vset.pattern.permute.xlu0 0
  %3017 = vperm.xlu0 %3016, %v2463
  %v3018 = vpop.permute.xlu0 %3017
  %3021 = vset.pattern.permute.xlu0 0
  %3022 = vperm.xlu0 %3021, %v2464
  %v3023 = vpop.permute.xlu0 %3022
  %3026 = vset.pattern.permute.xlu0 0
  %3027 = vperm.xlu0 %3026, %v2465
  %v3028 = vpop.permute.xlu0 %3027
  %3031 = vset.pattern.permute.xlu0 0
  %3032 = vperm.xlu0 %3031, %v2466
  %v3033 = vpop.permute.xlu0 %3032
  %3036 = vset.pattern.permute.xlu0 0
  %3037 = vperm.xlu0 %3036, %v2467
  %v3038 = vpop.permute.xlu0 %3037
  %3041 = vset.pattern.permute.xlu0 0
  %3042 = vperm.xlu0 %3041, %v2468
  %v3043 = vpop.permute.xlu0 %3042
  %3046 = vset.pattern.permute.xlu0 0
  %3047 = vperm.xlu0 %3046, %v2469
  %v3048 = vpop.permute.xlu0 %3047
  %3051 = vset.pattern.permute.xlu0 0
  %3052 = vperm.xlu0 %3051, %v2470
  %v3053 = vpop.permute.xlu0 %3052
  %3056 = vset.pattern.permute.xlu0 0
  %3057 = vperm.xlu0 %3056, %v2471
  %v3058 = vpop.permute.xlu0 %3057
  %3061 = vset.pattern.permute.xlu0 0
  %3062 = vperm.xlu0 %3061, %v2472
  %v3063 = vpop.permute.xlu0 %3062
  %3066 = vset.pattern.permute.xlu0 0
  %3067 = vperm.xlu0 %3066, %v2473
  %v3068 = vpop.permute.xlu0 %3067
  %3071 = vset.pattern.permute.xlu0 0
  %3072 = vperm.xlu0 %3071, %v2474
  %v3073 = vpop.permute.xlu0 %3072
  %3076 = vset.pattern.permute.xlu0 0
  %3077 = vperm.xlu0 %3076, %v2475
  %v3078 = vpop.permute.xlu0 %3077
  %3081 = vset.pattern.permute.xlu0 0
  %3082 = vperm.xlu0 %3081, %v2476
  %v3083 = vpop.permute.xlu0 %3082
  %3086 = vset.pattern.permute.xlu0 0
  %3087 = vperm.xlu0 %3086, %v2477
  %v3088 = vpop.permute.xlu0 %3087
  %3091 = vset.pattern.permute.xlu0 0
  %3092 = vperm.xlu0 %3091, %v2478
  %v3093 = vpop.permute.xlu0 %3092
  %v3095 = vmul.f32 %v14, %v2658
  %v3096 = vmul.f32 %v15, %v2663
  %v3097 = vmul.f32 %v16, %v2668
  %v3098 = vmul.f32 %v17, %v2673
  %v3099 = vmul.f32 %v18, %v2678
  %v3100 = vmul.f32 %v19, %v2683
  %v3101 = vmul.f32 %v20, %v2688
  %v3102 = vmul.f32 %v21, %v2693
  %v3103 = vmul.f32 %v22, %v2698
  %v3104 = vmul.f32 %v23, %v2703
  %v3105 = vmul.f32 %v24, %v2708
  %v3106 = vmul.f32 %v25, %v2713
  %v3107 = vmul.f32 %v26, %v2718
  %v3108 = vmul.f32 %v27, %v2723
  %v3109 = vmul.f32 %v28, %v2728
  %v3110 = vmul.f32 %v29, %v2733
  %v3111 = vmul.f32 %v30, %v2738
  %v3112 = vmul.f32 %v31, %v2743
  %v3113 = vmul.f32 %v32, %v2748
  %v3114 = vmul.f32 %v33, %v2753
  %v3115 = vmul.f32 %v34, %v2758
  %v3116 = vmul.f32 %v35, %v2763
  %v3117 = vmul.f32 %v36, %v2768
  %v3118 = vmul.f32 %v37, %v2773
  %v3119 = vmul.f32 %v38, %v2778
  %v3120 = vmul.f32 %v39, %v2783
  %v3121 = vmul.f32 %v40, %v2788
  %v3122 = vmul.f32 %v41, %v2793
  %v3123 = vmul.f32 %v42, %v2798
  %v3124 = vmul.f32 %v43, %v2803
  %v3125 = vmul.f32 %v44, %v2808
  %v3126 = vmul.f32 %v45, %v2813
  %v3127 = vmul.f32 %v46, %v2818
  %v3128 = vmul.f32 %v47, %v2823
  %v3129 = vmul.f32 %v48, %v2828
  %v3130 = vmul.f32 %v49, %v2833
  %v3131 = vmul.f32 %v50, %v2838
  %v3132 = vmul.f32 %v51, %v2843
  %v3133 = vmul.f32 %v52, %v2848
  %v3134 = vmul.f32 %v53, %v2853
  %v3135 = vmul.f32 %v54, %v2858
  %v3136 = vmul.f32 %v55, %v2863
  %v3137 = vmul.f32 %v56, %v2868
  %v3138 = vmul.f32 %v57, %v2873
  %v3139 = vmul.f32 %v58, %v2878
  %v3140 = vmul.f32 %v59, %v2883
  %v3141 = vmul.f32 %v60, %v2888
  %v3142 = vmul.f32 %v61, %v2893
  %v3143 = vmul.f32 %v62, %v2898
  %v3144 = vmul.f32 %v63, %v2903
  %v3145 = vmul.f32 %v64, %v2908
  %v3146 = vmul.f32 %v65, %v2913
  %v3147 = vmul.f32 %v66, %v2918
  %v3148 = vmul.f32 %v67, %v2923
  %v3149 = vmul.f32 %v68, %v2928
  %v3150 = vmul.f32 %v69, %v2933
  %v3151 = vmul.f32 %v70, %v2938
  %v3152 = vmul.f32 %v71, %v2943
  %v3153 = vmul.f32 %v72, %v2948
  %v3154 = vmul.f32 %v73, %v2953
  %v3155 = vmul.f32 %v74, %v2958
  %v3156 = vmul.f32 %v75, %v2963
  %v3157 = vmul.f32 %v76, %v2968
  %v3158 = vmul.f32 %v77, %v2973
  %v3159 = vmul.f32 %v78, %v2978
  %v3160 = vmul.f32 %v79, %v2983
  %v3161 = vmul.f32 %v80, %v2988
  %v3162 = vmul.f32 %v81, %v2993
  %v3163 = vmul.f32 %v82, %v2998
  %v3164 = vmul.f32 %v83, %v3003
  %v3165 = vmul.f32 %v84, %v3008
  %v3166 = vmul.f32 %v85, %v3013
  %v3167 = vmul.f32 %v86, %v3018
  %v3168 = vmul.f32 %v87, %v3023
  %v3169 = vmul.f32 %v88, %v3028
  %v3170 = vmul.f32 %v89, %v3033
  %v3171 = vmul.f32 %v90, %v3038
  %v3172 = vmul.f32 %v91, %v3043
  %v3173 = vmul.f32 %v92, %v3048
  %v3174 = vmul.f32 %v93, %v3053
  %v3175 = vmul.f32 %v94, %v3058
  %v3176 = vmul.f32 %v95, %v3063
  %v3177 = vmul.f32 %v96, %v3068
  %v3178 = vmul.f32 %v97, %v3073
  %v3179 = vmul.f32 %v98, %v3078
  %v3180 = vmul.f32 %v99, %v3083
  %v3181 = vmul.f32 %v100, %v3088
  %v3182 = vmul.f32 %v101, %v3093
  %3184 = vset.pattern.permute.xlu0 0
  %3185 = vperm.xlu0 %3184, %v2567
  %v3186 = vpop.permute.xlu0 %3185
  %3189 = vset.pattern.permute.xlu0 0
  %3190 = vperm.xlu0 %3189, %v2568
  %v3191 = vpop.permute.xlu0 %3190
  %3194 = vset.pattern.permute.xlu0 0
  %3195 = vperm.xlu0 %3194, %v2569
  %v3196 = vpop.permute.xlu0 %3195
  %3199 = vset.pattern.permute.xlu0 0
  %3200 = vperm.xlu0 %3199, %v2570
  %v3201 = vpop.permute.xlu0 %3200
  %3204 = vset.pattern.permute.xlu0 0
  %3205 = vperm.xlu0 %3204, %v2571
  %v3206 = vpop.permute.xlu0 %3205
  %3209 = vset.pattern.permute.xlu0 0
  %3210 = vperm.xlu0 %3209, %v2572
  %v3211 = vpop.permute.xlu0 %3210
  %3214 = vset.pattern.permute.xlu0 0
  %3215 = vperm.xlu0 %3214, %v2573
  %v3216 = vpop.permute.xlu0 %3215
  %3219 = vset.pattern.permute.xlu0 0
  %3220 = vperm.xlu0 %3219, %v2574
  %v3221 = vpop.permute.xlu0 %3220
  %3224 = vset.pattern.permute.xlu0 0
  %3225 = vperm.xlu0 %3224, %v2575
  %v3226 = vpop.permute.xlu0 %3225
  %3229 = vset.pattern.permute.xlu0 0
  %3230 = vperm.xlu0 %3229, %v2576
  %v3231 = vpop.permute.xlu0 %3230
  %3234 = vset.pattern.permute.xlu0 0
  %3235 = vperm.xlu0 %3234, %v2577
  %v3236 = vpop.permute.xlu0 %3235
  %3239 = vset.pattern.permute.xlu0 0
  %3240 = vperm.xlu0 %3239, %v2578
  %v3241 = vpop.permute.xlu0 %3240
  %3244 = vset.pattern.permute.xlu0 0
  %3245 = vperm.xlu0 %3244, %v2579
  %v3246 = vpop.permute.xlu0 %3245
  %3249 = vset.pattern.permute.xlu0 0
  %3250 = vperm.xlu0 %3249, %v2580
  %v3251 = vpop.permute.xlu0 %3250
  %3254 = vset.pattern.permute.xlu0 0
  %3255 = vperm.xlu0 %3254, %v2581
  %v3256 = vpop.permute.xlu0 %3255
  %3259 = vset.pattern.permute.xlu0 0
  %3260 = vperm.xlu0 %3259, %v2582
  %v3261 = vpop.permute.xlu0 %3260
  %3264 = vset.pattern.permute.xlu0 0
  %3265 = vperm.xlu0 %3264, %v2583
  %v3266 = vpop.permute.xlu0 %3265
  %3269 = vset.pattern.permute.xlu0 0
  %3270 = vperm.xlu0 %3269, %v2584
  %v3271 = vpop.permute.xlu0 %3270
  %3274 = vset.pattern.permute.xlu0 0
  %3275 = vperm.xlu0 %3274, %v2585
  %v3276 = vpop.permute.xlu0 %3275
  %3279 = vset.pattern.permute.xlu0 0
  %3280 = vperm.xlu0 %3279, %v2586
  %v3281 = vpop.permute.xlu0 %3280
  %3284 = vset.pattern.permute.xlu0 0
  %3285 = vperm.xlu0 %3284, %v2587
  %v3286 = vpop.permute.xlu0 %3285
  %3289 = vset.pattern.permute.xlu0 0
  %3290 = vperm.xlu0 %3289, %v2588
  %v3291 = vpop.permute.xlu0 %3290
  %3294 = vset.pattern.permute.xlu0 0
  %3295 = vperm.xlu0 %3294, %v2589
  %v3296 = vpop.permute.xlu0 %3295
  %3299 = vset.pattern.permute.xlu0 0
  %3300 = vperm.xlu0 %3299, %v2590
  %v3301 = vpop.permute.xlu0 %3300
  %3304 = vset.pattern.permute.xlu0 0
  %3305 = vperm.xlu0 %3304, %v2591
  %v3306 = vpop.permute.xlu0 %3305
  %3309 = vset.pattern.permute.xlu0 0
  %3310 = vperm.xlu0 %3309, %v2592
  %v3311 = vpop.permute.xlu0 %3310
  %3314 = vset.pattern.permute.xlu0 0
  %3315 = vperm.xlu0 %3314, %v2593
  %v3316 = vpop.permute.xlu0 %3315
  %3319 = vset.pattern.permute.xlu0 0
  %3320 = vperm.xlu0 %3319, %v2594
  %v3321 = vpop.permute.xlu0 %3320
  %3324 = vset.pattern.permute.xlu0 0
  %3325 = vperm.xlu0 %3324, %v2595
  %v3326 = vpop.permute.xlu0 %3325
  %3329 = vset.pattern.permute.xlu0 0
  %3330 = vperm.xlu0 %3329, %v2596
  %v3331 = vpop.permute.xlu0 %3330
  %3334 = vset.pattern.permute.xlu0 0
  %3335 = vperm.xlu0 %3334, %v2597
  %v3336 = vpop.permute.xlu0 %3335
  %3339 = vset.pattern.permute.xlu0 0
  %3340 = vperm.xlu0 %3339, %v2598
  %v3341 = vpop.permute.xlu0 %3340
  %3344 = vset.pattern.permute.xlu0 0
  %3345 = vperm.xlu0 %3344, %v2599
  %v3346 = vpop.permute.xlu0 %3345
  %3349 = vset.pattern.permute.xlu0 0
  %3350 = vperm.xlu0 %3349, %v2600
  %v3351 = vpop.permute.xlu0 %3350
  %3354 = vset.pattern.permute.xlu0 0
  %3355 = vperm.xlu0 %3354, %v2601
  %v3356 = vpop.permute.xlu0 %3355
  %3359 = vset.pattern.permute.xlu0 0
  %3360 = vperm.xlu0 %3359, %v2602
  %v3361 = vpop.permute.xlu0 %3360
  %3364 = vset.pattern.permute.xlu0 0
  %3365 = vperm.xlu0 %3364, %v2603
  %v3366 = vpop.permute.xlu0 %3365
  %3369 = vset.pattern.permute.xlu0 0
  %3370 = vperm.xlu0 %3369, %v2604
  %v3371 = vpop.permute.xlu0 %3370
  %3374 = vset.pattern.permute.xlu0 0
  %3375 = vperm.xlu0 %3374, %v2605
  %v3376 = vpop.permute.xlu0 %3375
  %3379 = vset.pattern.permute.xlu0 0
  %3380 = vperm.xlu0 %3379, %v2606
  %v3381 = vpop.permute.xlu0 %3380
  %3384 = vset.pattern.permute.xlu0 0
  %3385 = vperm.xlu0 %3384, %v2607
  %v3386 = vpop.permute.xlu0 %3385
  %3389 = vset.pattern.permute.xlu0 0
  %3390 = vperm.xlu0 %3389, %v2608
  %v3391 = vpop.permute.xlu0 %3390
  %3394 = vset.pattern.permute.xlu0 0
  %3395 = vperm.xlu0 %3394, %v2609
  %v3396 = vpop.permute.xlu0 %3395
  %3399 = vset.pattern.permute.xlu0 0
  %3400 = vperm.xlu0 %3399, %v2610
  %v3401 = vpop.permute.xlu0 %3400
  %3404 = vset.pattern.permute.xlu0 0
  %3405 = vperm.xlu0 %3404, %v2611
  %v3406 = vpop.permute.xlu0 %3405
  %3409 = vset.pattern.permute.xlu0 0
  %3410 = vperm.xlu0 %3409, %v2612
  %v3411 = vpop.permute.xlu0 %3410
  %3414 = vset.pattern.permute.xlu0 0
  %3415 = vperm.xlu0 %3414, %v2613
  %v3416 = vpop.permute.xlu0 %3415
  %3419 = vset.pattern.permute.xlu0 0
  %3420 = vperm.xlu0 %3419, %v2614
  %v3421 = vpop.permute.xlu0 %3420
  %3424 = vset.pattern.permute.xlu0 0
  %3425 = vperm.xlu0 %3424, %v2615
  %v3426 = vpop.permute.xlu0 %3425
  %3429 = vset.pattern.permute.xlu0 0
  %3430 = vperm.xlu0 %3429, %v2616
  %v3431 = vpop.permute.xlu0 %3430
  %3434 = vset.pattern.permute.xlu0 0
  %3435 = vperm.xlu0 %3434, %v2617
  %v3436 = vpop.permute.xlu0 %3435
  %3439 = vset.pattern.permute.xlu0 0
  %3440 = vperm.xlu0 %3439, %v2618
  %v3441 = vpop.permute.xlu0 %3440
  %3444 = vset.pattern.permute.xlu0 0
  %3445 = vperm.xlu0 %3444, %v2619
  %v3446 = vpop.permute.xlu0 %3445
  %3449 = vset.pattern.permute.xlu0 0
  %3450 = vperm.xlu0 %3449, %v2620
  %v3451 = vpop.permute.xlu0 %3450
  %3454 = vset.pattern.permute.xlu0 0
  %3455 = vperm.xlu0 %3454, %v2621
  %v3456 = vpop.permute.xlu0 %3455
  %3459 = vset.pattern.permute.xlu0 0
  %3460 = vperm.xlu0 %3459, %v2622
  %v3461 = vpop.permute.xlu0 %3460
  %3464 = vset.pattern.permute.xlu0 0
  %3465 = vperm.xlu0 %3464, %v2623
  %v3466 = vpop.permute.xlu0 %3465
  %3469 = vset.pattern.permute.xlu0 0
  %3470 = vperm.xlu0 %3469, %v2624
  %v3471 = vpop.permute.xlu0 %3470
  %3474 = vset.pattern.permute.xlu0 0
  %3475 = vperm.xlu0 %3474, %v2625
  %v3476 = vpop.permute.xlu0 %3475
  %3479 = vset.pattern.permute.xlu0 0
  %3480 = vperm.xlu0 %3479, %v2626
  %v3481 = vpop.permute.xlu0 %3480
  %3484 = vset.pattern.permute.xlu0 0
  %3485 = vperm.xlu0 %3484, %v2627
  %v3486 = vpop.permute.xlu0 %3485
  %3489 = vset.pattern.permute.xlu0 0
  %3490 = vperm.xlu0 %3489, %v2628
  %v3491 = vpop.permute.xlu0 %3490
  %3494 = vset.pattern.permute.xlu0 0
  %3495 = vperm.xlu0 %3494, %v2629
  %v3496 = vpop.permute.xlu0 %3495
  %3499 = vset.pattern.permute.xlu0 0
  %3500 = vperm.xlu0 %3499, %v2630
  %v3501 = vpop.permute.xlu0 %3500
  %3504 = vset.pattern.permute.xlu0 0
  %3505 = vperm.xlu0 %3504, %v2631
  %v3506 = vpop.permute.xlu0 %3505
  %3509 = vset.pattern.permute.xlu0 0
  %3510 = vperm.xlu0 %3509, %v2632
  %v3511 = vpop.permute.xlu0 %3510
  %3514 = vset.pattern.permute.xlu0 0
  %3515 = vperm.xlu0 %3514, %v2633
  %v3516 = vpop.permute.xlu0 %3515
  %3519 = vset.pattern.permute.xlu0 0
  %3520 = vperm.xlu0 %3519, %v2634
  %v3521 = vpop.permute.xlu0 %3520
  %3524 = vset.pattern.permute.xlu0 0
  %3525 = vperm.xlu0 %3524, %v2635
  %v3526 = vpop.permute.xlu0 %3525
  %3529 = vset.pattern.permute.xlu0 0
  %3530 = vperm.xlu0 %3529, %v2636
  %v3531 = vpop.permute.xlu0 %3530
  %3534 = vset.pattern.permute.xlu0 0
  %3535 = vperm.xlu0 %3534, %v2637
  %v3536 = vpop.permute.xlu0 %3535
  %3539 = vset.pattern.permute.xlu0 0
  %3540 = vperm.xlu0 %3539, %v2638
  %v3541 = vpop.permute.xlu0 %3540
  %3544 = vset.pattern.permute.xlu0 0
  %3545 = vperm.xlu0 %3544, %v2639
  %v3546 = vpop.permute.xlu0 %3545
  %3549 = vset.pattern.permute.xlu0 0
  %3550 = vperm.xlu0 %3549, %v2640
  %v3551 = vpop.permute.xlu0 %3550
  %3554 = vset.pattern.permute.xlu0 0
  %3555 = vperm.xlu0 %3554, %v2641
  %v3556 = vpop.permute.xlu0 %3555
  %3559 = vset.pattern.permute.xlu0 0
  %3560 = vperm.xlu0 %3559, %v2642
  %v3561 = vpop.permute.xlu0 %3560
  %3564 = vset.pattern.permute.xlu0 0
  %3565 = vperm.xlu0 %3564, %v2643
  %v3566 = vpop.permute.xlu0 %3565
  %3569 = vset.pattern.permute.xlu0 0
  %3570 = vperm.xlu0 %3569, %v2644
  %v3571 = vpop.permute.xlu0 %3570
  %3574 = vset.pattern.permute.xlu0 0
  %3575 = vperm.xlu0 %3574, %v2645
  %v3576 = vpop.permute.xlu0 %3575
  %3579 = vset.pattern.permute.xlu0 0
  %3580 = vperm.xlu0 %3579, %v2646
  %v3581 = vpop.permute.xlu0 %3580
  %3584 = vset.pattern.permute.xlu0 0
  %3585 = vperm.xlu0 %3584, %v2647
  %v3586 = vpop.permute.xlu0 %3585
  %3589 = vset.pattern.permute.xlu0 0
  %3590 = vperm.xlu0 %3589, %v2648
  %v3591 = vpop.permute.xlu0 %3590
  %3594 = vset.pattern.permute.xlu0 0
  %3595 = vperm.xlu0 %3594, %v2649
  %v3596 = vpop.permute.xlu0 %3595
  %3599 = vset.pattern.permute.xlu0 0
  %3600 = vperm.xlu0 %3599, %v2650
  %v3601 = vpop.permute.xlu0 %3600
  %3604 = vset.pattern.permute.xlu0 0
  %3605 = vperm.xlu0 %3604, %v2651
  %v3606 = vpop.permute.xlu0 %3605
  %3609 = vset.pattern.permute.xlu0 0
  %3610 = vperm.xlu0 %3609, %v2652
  %v3611 = vpop.permute.xlu0 %3610
  %3614 = vset.pattern.permute.xlu0 0
  %3615 = vperm.xlu0 %3614, %v2653
  %v3616 = vpop.permute.xlu0 %3615
  %3619 = vset.pattern.permute.xlu0 0
  %3620 = vperm.xlu0 %3619, %v2654
  %v3621 = vpop.permute.xlu0 %3620
  %v3623 = vadd.f32 %v3095, %v3186
  %v3624 = vadd.f32 %v3096, %v3191
  %v3625 = vadd.f32 %v3097, %v3196
  %v3626 = vadd.f32 %v3098, %v3201
  %v3627 = vadd.f32 %v3099, %v3206
  %v3628 = vadd.f32 %v3100, %v3211
  %v3629 = vadd.f32 %v3101, %v3216
  %v3630 = vadd.f32 %v3102, %v3221
  %v3631 = vadd.f32 %v3103, %v3226
  %v3632 = vadd.f32 %v3104, %v3231
  %v3633 = vadd.f32 %v3105, %v3236
  %v3634 = vadd.f32 %v3106, %v3241
  %v3635 = vadd.f32 %v3107, %v3246
  %v3636 = vadd.f32 %v3108, %v3251
  %v3637 = vadd.f32 %v3109, %v3256
  %v3638 = vadd.f32 %v3110, %v3261
  %v3639 = vadd.f32 %v3111, %v3266
  %v3640 = vadd.f32 %v3112, %v3271
  %v3641 = vadd.f32 %v3113, %v3276
  %v3642 = vadd.f32 %v3114, %v3281
  %v3643 = vadd.f32 %v3115, %v3286
  %v3644 = vadd.f32 %v3116, %v3291
  %v3645 = vadd.f32 %v3117, %v3296
  %v3646 = vadd.f32 %v3118, %v3301
  %v3647 = vadd.f32 %v3119, %v3306
  %v3648 = vadd.f32 %v3120, %v3311
  %v3649 = vadd.f32 %v3121, %v3316
  %v3650 = vadd.f32 %v3122, %v3321
  %v3651 = vadd.f32 %v3123, %v3326
  %v3652 = vadd.f32 %v3124, %v3331
  %v3653 = vadd.f32 %v3125, %v3336
  %v3654 = vadd.f32 %v3126, %v3341
  %v3655 = vadd.f32 %v3127, %v3346
  %v3656 = vadd.f32 %v3128, %v3351
  %v3657 = vadd.f32 %v3129, %v3356
  %v3658 = vadd.f32 %v3130, %v3361
  %v3659 = vadd.f32 %v3131, %v3366
  %v3660 = vadd.f32 %v3132, %v3371
  %v3661 = vadd.f32 %v3133, %v3376
  %v3662 = vadd.f32 %v3134, %v3381
  %v3663 = vadd.f32 %v3135, %v3386
  %v3664 = vadd.f32 %v3136, %v3391
  %v3665 = vadd.f32 %v3137, %v3396
  %v3666 = vadd.f32 %v3138, %v3401
  %v3667 = vadd.f32 %v3139, %v3406
  %v3668 = vadd.f32 %v3140, %v3411
  %v3669 = vadd.f32 %v3141, %v3416
  %v3670 = vadd.f32 %v3142, %v3421
  %v3671 = vadd.f32 %v3143, %v3426
  %v3672 = vadd.f32 %v3144, %v3431
  %v3673 = vadd.f32 %v3145, %v3436
  %v3674 = vadd.f32 %v3146, %v3441
  %v3675 = vadd.f32 %v3147, %v3446
  %v3676 = vadd.f32 %v3148, %v3451
  %v3677 = vadd.f32 %v3149, %v3456
  %v3678 = vadd.f32 %v3150, %v3461
  %v3679 = vadd.f32 %v3151, %v3466
  %v3680 = vadd.f32 %v3152, %v3471
  %v3681 = vadd.f32 %v3153, %v3476
  %v3682 = vadd.f32 %v3154, %v3481
  %v3683 = vadd.f32 %v3155, %v3486
  %v3684 = vadd.f32 %v3156, %v3491
  %v3685 = vadd.f32 %v3157, %v3496
  %v3686 = vadd.f32 %v3158, %v3501
  %v3687 = vadd.f32 %v3159, %v3506
  %v3688 = vadd.f32 %v3160, %v3511
  %v3689 = vadd.f32 %v3161, %v3516
  %v3690 = vadd.f32 %v3162, %v3521
  %v3691 = vadd.f32 %v3163, %v3526
  %v3692 = vadd.f32 %v3164, %v3531
  %v3693 = vadd.f32 %v3165, %v3536
  %v3694 = vadd.f32 %v3166, %v3541
  %v3695 = vadd.f32 %v3167, %v3546
  %v3696 = vadd.f32 %v3168, %v3551
  %v3697 = vadd.f32 %v3169, %v3556
  %v3698 = vadd.f32 %v3170, %v3561
  %v3699 = vadd.f32 %v3171, %v3566
  %v3700 = vadd.f32 %v3172, %v3571
  %v3701 = vadd.f32 %v3173, %v3576
  %v3702 = vadd.f32 %v3174, %v3581
  %v3703 = vadd.f32 %v3175, %v3586
  %v3704 = vadd.f32 %v3176, %v3591
  %v3705 = vadd.f32 %v3177, %v3596
  %v3706 = vadd.f32 %v3178, %v3601
  %v3707 = vadd.f32 %v3179, %v3606
  %v3708 = vadd.f32 %v3180, %v3611
  %v3709 = vadd.f32 %v3181, %v3616
  %v3710 = vadd.f32 %v3182, %v3621
  %3711 = vst.msk [vmem:[%s3] sm:$0xff] %vm102, %v3623
  %3712 = vst.msk [vmem:[%s3 + $0x8] sm:$0xff] %vm102, %v3624
  %3713 = vst.msk [vmem:[%s3 + $0x10] sm:$0xff] %vm102, %v3625
  %3714 = vst.msk [vmem:[%s3 + $0x18] sm:$0xff] %vm102, %v3626
  %3715 = vst.msk [vmem:[%s3 + $0x20] sm:$0xff] %vm102, %v3627
  %3716 = vst.msk [vmem:[%s3 + $0x28] sm:$0xff] %vm102, %v3628
  %3717 = vst.msk [vmem:[%s3 + $0x30] sm:$0xff] %vm102, %v3629
  %3718 = vst.msk [vmem:[%s3 + $0x38] sm:$0xff] %vm102, %v3630
  %3719 = vst.msk [vmem:[%s3 + $0x40] sm:$0xff] %vm102, %v3631
  %3720 = vst.msk [vmem:[%s3 + $0x48] sm:$0xff] %vm102, %v3632
  %3721 = vst.msk [vmem:[%s3 + $0x50] sm:$0xff] %vm102, %v3633
  %3722 = vst.msk [vmem:[%s3 + $0x58] sm:$0xff] %vm102, %v3634
  %3723 = vst.msk [vmem:[%s3 + $0x60] sm:$0xff] %vm102, %v3635
  %3724 = vst.msk [vmem:[%s3 + $0x68] sm:$0xff] %vm102, %v3636
  %3725 = vst.msk [vmem:[%s3 + $0x70] sm:$0xff] %vm102, %v3637
  %3726 = vst.msk [vmem:[%s3 + $0x78] sm:$0xff] %vm102, %v3638
  %3727 = vst.msk [vmem:[%s3 + $0x80] sm:$0xff] %vm102, %v3639
  %3728 = vst.msk [vmem:[%s3 + $0x88] sm:$0xff] %vm102, %v3640
  %3729 = vst.msk [vmem:[%s3 + $0x90] sm:$0xff] %vm102, %v3641
  %3730 = vst.msk [vmem:[%s3 + $0x98] sm:$0xff] %vm102, %v3642
  %3731 = vst.msk [vmem:[%s3 + $0xa0] sm:$0xff] %vm102, %v3643
  %3732 = vst.msk [vmem:[%s3 + $0xa8] sm:$0xff] %vm102, %v3644
  %3733 = vst.msk [vmem:[%s3 + $0xb0] sm:$0xff] %vm102, %v3645
  %3734 = vst.msk [vmem:[%s3 + $0xb8] sm:$0xff] %vm102, %v3646
  %3735 = vst.msk [vmem:[%s3 + $0xc0] sm:$0xff] %vm102, %v3647
  %3736 = vst.msk [vmem:[%s3 + $0xc8] sm:$0xff] %vm102, %v3648
  %3737 = vst.msk [vmem:[%s3 + $0xd0] sm:$0xff] %vm102, %v3649
  %3738 = vst.msk [vmem:[%s3 + $0xd8] sm:$0xff] %vm102, %v3650
  %3739 = vst.msk [vmem:[%s3 + $0xe0] sm:$0xff] %vm102, %v3651
  %3740 = vst.msk [vmem:[%s3 + $0xe8] sm:$0xff] %vm102, %v3652
  %3741 = vst.msk [vmem:[%s3 + $0xf0] sm:$0xff] %vm102, %v3653
  %3742 = vst.msk [vmem:[%s3 + $0xf8] sm:$0xff] %vm102, %v3654
  %3743 = vst.msk [vmem:[%s3 + $0x100] sm:$0xff] %vm102, %v3655
  %3744 = vst.msk [vmem:[%s3 + $0x108] sm:$0xff] %vm102, %v3656
  %3745 = vst.msk [vmem:[%s3 + $0x110] sm:$0xff] %vm102, %v3657
  %3746 = vst.msk [vmem:[%s3 + $0x118] sm:$0xff] %vm102, %v3658
  %3747 = vst.msk [vmem:[%s3 + $0x120] sm:$0xff] %vm102, %v3659
  %3748 = vst.msk [vmem:[%s3 + $0x128] sm:$0xff] %vm102, %v3660
  %3749 = vst.msk [vmem:[%s3 + $0x130] sm:$0xff] %vm102, %v3661
  %3750 = vst.msk [vmem:[%s3 + $0x138] sm:$0xff] %vm102, %v3662
  %3751 = vst.msk [vmem:[%s3 + $0x140] sm:$0xff] %vm102, %v3663
  %3752 = vst.msk [vmem:[%s3 + $0x148] sm:$0xff] %vm102, %v3664
  %3753 = vst.msk [vmem:[%s3 + $0x150] sm:$0xff] %vm102, %v3665
  %3754 = vst.msk [vmem:[%s3 + $0x158] sm:$0xff] %vm102, %v3666
  %3755 = vst.msk [vmem:[%s3 + $0x160] sm:$0xff] %vm102, %v3667
  %3756 = vst.msk [vmem:[%s3 + $0x168] sm:$0xff] %vm102, %v3668
  %3757 = vst.msk [vmem:[%s3 + $0x170] sm:$0xff] %vm102, %v3669
  %3758 = vst.msk [vmem:[%s3 + $0x178] sm:$0xff] %vm102, %v3670
  %3759 = vst.msk [vmem:[%s3 + $0x180] sm:$0xff] %vm102, %v3671
  %3760 = vst.msk [vmem:[%s3 + $0x188] sm:$0xff] %vm102, %v3672
  %3761 = vst.msk [vmem:[%s3 + $0x190] sm:$0xff] %vm102, %v3673
  %3762 = vst.msk [vmem:[%s3 + $0x198] sm:$0xff] %vm102, %v3674
  %3763 = vst.msk [vmem:[%s3 + $0x1a0] sm:$0xff] %vm102, %v3675
  %3764 = vst.msk [vmem:[%s3 + $0x1a8] sm:$0xff] %vm102, %v3676
  %3765 = vst.msk [vmem:[%s3 + $0x1b0] sm:$0xff] %vm102, %v3677
  %3766 = vst.msk [vmem:[%s3 + $0x1b8] sm:$0xff] %vm102, %v3678
  %3767 = vst.msk [vmem:[%s3 + $0x1c0] sm:$0xff] %vm102, %v3679
  %3768 = vst.msk [vmem:[%s3 + $0x1c8] sm:$0xff] %vm102, %v3680
  %3769 = vst.msk [vmem:[%s3 + $0x1d0] sm:$0xff] %vm102, %v3681
  %3770 = vst.msk [vmem:[%s3 + $0x1d8] sm:$0xff] %vm102, %v3682
  %3771 = vst.msk [vmem:[%s3 + $0x1e0] sm:$0xff] %vm102, %v3683
  %3772 = vst.msk [vmem:[%s3 + $0x1e8] sm:$0xff] %vm102, %v3684
  %3773 = vst.msk [vmem:[%s3 + $0x1f0] sm:$0xff] %vm102, %v3685
  %3774 = vst.msk [vmem:[%s3 + $0x1f8] sm:$0xff] %vm102, %v3686
  %3775 = vst.msk [vmem:[%s3 + $0x200] sm:$0xff] %vm102, %v3687
  %3776 = vst.msk [vmem:[%s3 + $0x208] sm:$0xff] %vm102, %v3688
  %3777 = vst.msk [vmem:[%s3 + $0x210] sm:$0xff] %vm102, %v3689
  %3778 = vst.msk [vmem:[%s3 + $0x218] sm:$0xff] %vm102, %v3690
  %3779 = vst.msk [vmem:[%s3 + $0x220] sm:$0xff] %vm102, %v3691
  %3780 = vst.msk [vmem:[%s3 + $0x228] sm:$0xff] %vm102, %v3692
  %3781 = vst.msk [vmem:[%s3 + $0x230] sm:$0xff] %vm102, %v3693
  %3782 = vst.msk [vmem:[%s3 + $0x238] sm:$0xff] %vm102, %v3694
  %3783 = vst.msk [vmem:[%s3 + $0x240] sm:$0xff] %vm102, %v3695
  %3784 = vst.msk [vmem:[%s3 + $0x248] sm:$0xff] %vm102, %v3696
  %3785 = vst.msk [vmem:[%s3 + $0x250] sm:$0xff] %vm102, %v3697
  %3786 = vst.msk [vmem:[%s3 + $0x258] sm:$0xff] %vm102, %v3698
  %3787 = vst.msk [vmem:[%s3 + $0x260] sm:$0xff] %vm102, %v3699
  %3788 = vst.msk [vmem:[%s3 + $0x268] sm:$0xff] %vm102, %v3700
  %3789 = vst.msk [vmem:[%s3 + $0x270] sm:$0xff] %vm102, %v3701
  %3790 = vst.msk [vmem:[%s3 + $0x278] sm:$0xff] %vm102, %v3702
  %3791 = vst.msk [vmem:[%s3 + $0x280] sm:$0xff] %vm102, %v3703
  %3792 = vst.msk [vmem:[%s3 + $0x288] sm:$0xff] %vm102, %v3704
  %3793 = vst.msk [vmem:[%s3 + $0x290] sm:$0xff] %vm102, %v3705
  %3794 = vst.msk [vmem:[%s3 + $0x298] sm:$0xff] %vm102, %v3706
  %3795 = vst.msk [vmem:[%s3 + $0x2a0] sm:$0xff] %vm102, %v3707
  %3796 = vst.msk [vmem:[%s3 + $0x2a8] sm:$0xff] %vm102, %v3708
  %3797 = vst.msk [vmem:[%s3 + $0x2b0] sm:$0xff] %vm102, %v3709
  %3798 = vst.msk [vmem:[%s3 + $0x2b8] sm:$0xff] %vm102, %v3710
  // Predicated region
  $region14: #{tpu_custom_call.1} parent=0 // pred_check
    _
  $region15: #{tpu_custom_call.1} parent=0 // pred_check_branch
    %3800 = sbr.rel (0) target = $region17
  $region16: #{tpu_custom_call.1} parent=0 // pred_region
    _
  $region17: #{tpu_custom_call.1} parent=0 // pred_fallthru
    _
  // Predicated region
  $region18: #{tpu_custom_call.1} parent=0 // pred_check
    _
  $region19: #{tpu_custom_call.1} parent=0 // pred_check_branch
    %3802 = sbr.rel (0) target = $region21
  $region20: #{tpu_custom_call.1} parent=0 // pred_region
    _
  $region21: #{tpu_custom_call.1} parent=0 // pred_fallthru
    _

</llo_original>
